<compile_context>
chip_gen: v7x
topology: tpu7x:2x2x1
jax: 0.10.0
libtpu: 0.0.40
codegen_flags: <defaults>
</compile_context>

<pallas_src>
import functools

import jax
import jax.numpy as jnp
from jax import lax
from jax.experimental import pallas as pl
from jax.experimental.pallas import tpu as pltpu


# ----------------------------------------------------------------------------
# Fused kernel: block-diag linears + cosine similarity + grouped softmax +
# weighted memory readout, per B-tile.
# ----------------------------------------------------------------------------
def _hippocampus_kernel(*refs, use_eye_mask, has_rand_mask, inv_div):
    if has_rand_mask:
        (x_ref, w1_ref, b1_ref, w2_ref, b2_ref, chat_ref, mo_ref, oh_ref,
         mask_ref, attn_ref, ga_ref, w_ref, o_ref) = refs
    else:
        (x_ref, w1_ref, b1_ref, w2_ref, b2_ref, chat_ref, mo_ref, oh_ref,
         attn_ref, ga_ref, w_ref, o_ref) = refs
        mask_ref = None

    U, M, Du = chat_ref.shape
    Dm = mo_ref.shape[-1]
    G = oh_ref.shape[-1]
    TB = x_ref.shape[0]

    # ---- split-wise linears as two block-diagonal dense matmuls (MXU) -------
    # (kept in f32: they are tiny next to the (U,TB,M) work and keep the
    #  attentions/global_attention outputs bit-accurate-ish vs. the reference)
    h = jnp.dot(x_ref[...], w1_ref[...],
                preferred_element_type=jnp.float32) + b1_ref[...]
    ga_ref[...] = h                                             # (TB, Dg)
    a2 = jnp.dot(h, w2_ref[...],
                 preferred_element_type=jnp.float32) + b2_ref[...]
    attn_ref[...] = a2                                          # (TB, U*Du)

    # unit-major activations for the per-unit batched contractions
    a = jnp.transpose(a2.reshape(TB, U, Du), (1, 0, 2))         # (U, TB, Du)

    # ---- cosine similarity ----------------------------------------------------
    # Keys were pre-normalized (and temperature-scaled) in the wrapper, so only
    # 1/max(||a||, eps) is needed here (tiny (U, TB, 1) tensor, exact recip).
    dots = lax.dot_general(a.astype(jnp.bfloat16), chat_ref[...],
                           (((2,), (2,)), ((0,), (0,))),
                           preferred_element_type=jnp.float32)  # (U, TB, M)
    na = jnp.sqrt(jnp.sum(a * a, axis=-1, keepdims=True))       # (U, TB, 1)
    w = dots * (1.0 / jnp.maximum(na, 1e-8))

    # ---- masks: single fused select -------------------------------------------
    mask = None
    if use_eye_mask:
        row = (lax.broadcasted_iota(jnp.int32, (TB, M), 0)
               + pl.program_id(0) * TB)                         # global query idx
        col = lax.broadcasted_iota(jnp.int32, (TB, M), 1)
        mask = (row == col)[None, :, :]
    if has_rand_mask:
        rnd = mask_ref[...] > 0.5                               # (U, TB, M)
        mask = rnd if mask is None else jnp.logical_or(mask, rnd)
    if mask is not None:
        w = jnp.where(mask, -jnp.inf, w)

    # ---- grouped softmax over memories with the same residue m % G ------------
    # One exp pass (the per-(u,b) max over all memories is a valid shift for
    # every group).  NOTE: like the PyTorch reference, a fully masked group
    # yields NaN (0 * inf).
    mx = jnp.max(w, axis=-1, keepdims=True)                     # (U, TB, 1)
    e = jnp.exp(w - mx)                                         # -inf -> 0
    gsum = jnp.dot(e.reshape(U * TB, M), oh_ref[...],
                   preferred_element_type=jnp.float32).reshape(U, TB, G)
    ginv = inv_div / gsum                                       # fold the /8, exact
    # broadcast back with a modulo select chain (VPU) -- no second MXU pass
    colmod = lax.broadcasted_iota(jnp.int32, (TB, M), 1) % G    # (TB, M)
    gden = jnp.where(colmod[None] == 0, ginv[:, :, 0:1], 0.0)
    for g in range(1, G):
        gden = jnp.where(colmod[None] == g, ginv[:, :, g:g + 1], gden)
    wf = e * gden                                               # (U, TB, M)

    # ---- lane-dense public-layout stores ---------------------------------------
    # weights: (U,TB,M) -> (TB,M,U) -> (TB, M*U)   (two simple axis swaps)
    w_pub = jnp.swapaxes(jnp.swapaxes(wf, 0, 1), 1, 2)
    w_ref[...] = w_pub.reshape(TB, M * U)

    # readout on the MXU: (U,TB,M) x (U,M,Dm) -> (U,TB,Dm), stored as (TB, U*Dm)
    out = lax.dot_general(wf.astype(jnp.bfloat16), mo_ref[...],
                          (((2,), (1,)), ((0,), (0,))),
                          preferred_element_type=jnp.float32)
    o_ref[...] = jnp.swapaxes(out, 0, 1).reshape(TB, U * Dm)


# ----------------------------------------------------------------------------
# Device-dependent VMEM budget / tile alignment
# ----------------------------------------------------------------------------
def _device_vmem_params():
    kind = ""
    try:
        kind = jax.devices()[0].device_kind.lower()
    except Exception:
        pass
    if "v5" in kind:
        return 90 * 2**20, 112 * 2**20, 128   # 128 MiB VMEM, 128-wide MXU rows
    if "v6" in kind:
        return 90 * 2**20, 112 * 2**20, 256   # 128 MiB VMEM, 256x256 MXU
    # v7x (64 MiB / TC) and unknown / CPU-interpret backends: stay conservative
    return 32 * 2**20, 48 * 2**20, 256


def _pick_block_b(B, *, U, Du, Dm, M, G, Din, Dg, has_mask, budget, align):
    """Largest B-tile fitting the VMEM budget, preferring MXU-aligned tiles."""
    def fits(tb):
        # grid-invariant inputs are double-buffered by default (2x)
        resident = 2 * (4 * (Din * Dg + Dg + Dg * U * Du + U * Du + M * G)
                        + 2 * U * M * (Du + Dm))                 # bf16 memories
        io_tile = 4 * tb * (Din + U * Du + Dg + M * U + U * Dm)  # x + outputs
        if has_mask:
            io_tile += 4 * U * tb * M
        temps = 4 * (6 * U * tb * M + 2 * U * tb * (Du + Dm)
                     + tb * (Dg + U * Du))                       # live (U,TB,M) temps
        return resident + 2 * io_tile + temps <= budget

    cands = [tb for tb in range(B, 0, -1)
             if B % tb == 0 and (tb % 8 == 0 or tb == B)]
    ordered = ([tb for tb in cands if tb % align == 0]
               + [tb for tb in cands if tb % align and tb % 128 == 0]
               + [tb for tb in cands if tb % 128])
    for tb in ordered:
        if fits(tb):
            return tb
    return cands[-1]


# ----------------------------------------------------------------------------
# Parameter init (deterministic, xavier-normal-like for the unit-wise weights)
# ----------------------------------------------------------------------------
def init_hippocampus_params(key, *, num_units_regions, dim_inputs,
                            dim_attention_global, dim_attention_unit,
                            num_attention_splits):
    num_units = sum(num_units_regions)
    S = num_attention_splits
    din_s = dim_inputs // S
    dg_s = dim_attention_global // S
    k_out = num_units * dim_attention_unit // S
    k1, k2 = jax.random.split(key)
    std1 = (2.0 / (din_s + dg_s)) ** 0.5
    std2 = (2.0 / (dg_s + k_out)) ** 0.5
    return dict(
        w1=std1 * jax.random.normal(k1, (S, din_s, dg_s), jnp.float32),
        b1=jnp.zeros((S, 1, dg_s), jnp.float32),
        w2=std2 * jax.random.normal(k2, (S, dg_s, k_out), jnp.float32),
        b2=jnp.zeros((S, 1, k_out), jnp.float32),
        temperature=jnp.ones((num_units,), jnp.float32),
    )


# ----------------------------------------------------------------------------
# Forward pass (wrapper is layout plumbing only; all compute is in the kernel)
# ----------------------------------------------------------------------------
def hippocampus_forward(params, x, memories, *, num_units, dim_attention_unit,
                        dim_attention_global, num_attention_splits,
                        num_attention_groups, mask_p=0.0, eye_mask=True,
                        mask_seed=0, block_b=None, weights_divisor=8.0):
    B, dim_inputs = x.shape
    S = num_attention_splits
    U = num_units
    Du = dim_attention_unit
    Dg = dim_attention_global
    G = num_attention_groups
    assert U % S == 0 and Dg % S == 0 and dim_inputs % S == 0 and B % G == 0

    mem_attention, mem_outputs = memories
    M = mem_attention.shape[0]
    Dm = mem_outputs.shape[-1]
    assert M == B, "module semantics (eye mask + grouped view) require M == B"

    # block-diagonal dense weights for the split-wise linears
    w1bd = jax.scipy.linalg.block_diag(*[params["w1"][s] for s in range(S)])
    w2bd = jax.scipy.linalg.block_diag(*[params["w2"][s] for s in range(S)])
    b1 = params["b1"].reshape(1, Dg)
    b2 = params["b2"].reshape(1, U * Du)

    # pre-normalize + temperature-scale the memory keys (unit-major, bf16 MXU
    # operands); matches torch.cosine_similarity's per-factor eps clamp.
    c_um = jnp.transpose(mem_attention, (1, 0, 2)).astype(jnp.float32)  # (U,M,Du)
    nc = jnp.sqrt(jnp.sum(c_um * c_um, axis=-1, keepdims=True))
    chat = (params["temperature"].reshape(U, 1, 1) * c_um
            / jnp.maximum(nc, 1e-8)).astype(jnp.bfloat16)
    mo_um = jnp.transpose(mem_outputs, (1, 0, 2)).astype(jnp.bfloat16)  # (U,M,Dm)

    # one-hot group membership: group of memory index m is m % G
    oh = (jnp.arange(M)[:, None] % G == jnp.arange(G)[None, :]).astype(jnp.float32)

    has_mask = float(mask_p) > 0.0
    budget, vmem_limit, align = _device_vmem_params()
    TB = block_b if block_b is not None else _pick_block_b(
        B, U=U, Du=Du, Dm=Dm, M=M, G=G, Din=dim_inputs, Dg=Dg,
        has_mask=has_mask, budget=budget, align=align)
    assert B % TB == 0 and (TB % 8 == 0 or TB == B)
    grid = (B // TB,)

    kernel = functools.partial(
        _hippocampus_kernel, use_eye_mask=bool(eye_mask),
        has_rand_mask=has_mask, inv_div=float(1.0 / weights_divisor))

    in_specs = [
        pl.BlockSpec((TB, dim_inputs), lambda b: (b, 0)),       # x tile
        pl.BlockSpec((dim_inputs, Dg), lambda b: (0, 0)),       # block-diag W1
        pl.BlockSpec((1, Dg), lambda b: (0, 0)),                # b1
        pl.BlockSpec((Dg, U * Du), lambda b: (0, 0)),           # block-diag W2
        pl.BlockSpec((1, U * Du), lambda b: (0, 0)),            # b2
        pl.BlockSpec((U, M, Du), lambda b: (0, 0, 0)),          # normalized keys
        pl.BlockSpec((U, M, Dm), lambda b: (0, 0, 0)),          # memory values
        pl.BlockSpec((M, G), lambda b: (0, 0)),                 # group one-hot
    ]
    args = [x, w1bd, b1, w2bd, b2, chat, mo_um, oh]
    if has_mask:
        # TODO(synk): torch.rand_like RNG stream is not reproducible; an
        # equivalent Bernoulli(mask_p) mask is drawn wrapper-side with
        # jax.random (the on-chip PRNG primitives have no CPU/interpret
        # lowering, so the mask is DMA'd instead of generated in-kernel).
        rnd = jax.random.uniform(jax.random.PRNGKey(mask_seed), (U, B, M))
        args.append((rnd < mask_p).astype(jnp.float32))
        in_specs.append(pl.BlockSpec((U, TB, M), lambda b: (0, b, 0)))

    attn_f, ga, w_f, o_f = pl.pallas_call(
        kernel,
        grid=grid,
        in_specs=in_specs,
        out_specs=[
            pl.BlockSpec((TB, U * Du), lambda b: (b, 0)),       # attentions (flat)
            pl.BlockSpec((TB, Dg), lambda b: (b, 0)),           # global attention
            pl.BlockSpec((TB, M * U), lambda b: (b, 0)),        # weights (public, flat)
            pl.BlockSpec((TB, U * Dm), lambda b: (b, 0)),       # outputs (public, flat)
        ],
        out_shape=[
            jax.ShapeDtypeStruct((B, U * Du), jnp.float32),
            jax.ShapeDtypeStruct((B, Dg), jnp.float32),
            jax.ShapeDtypeStruct((B, M * U), jnp.float32),
            jax.ShapeDtypeStruct((B, U * Dm), jnp.float32),
        ],
        compiler_params=pltpu.CompilerParams(
            dimension_semantics=("parallel",),
            vmem_limit_bytes=vmem_limit),
    )(*args)

    # only free reshapes here -- no post-kernel transposes / HBM round-trips
    attentions = attn_f.reshape(B, U, Du)
    weights = w_f.reshape(B, M, U)
    outputs = o_f.reshape(B, U, Dm)
    return attentions, ga, weights, outputs


# ----------------------------------------------------------------------------
# Pure-JAX reference (mirrors the PyTorch forward) for validation
# ----------------------------------------------------------------------------
def hippocampus_reference(params, x, memories, *, num_units,
                          dim_attention_unit, dim_attention_global,
                          num_attention_splits, num_attention_groups,
                          eye_mask=True, rand_mask=None):
    B, dim_inputs = x.shape
    S = num_attention_splits
    U = num_units
    Du = dim_attention_unit
    Dg = dim_attention_global
    G = num_attention_groups

    x3 = x.reshape(B, S, dim_inputs // S)
    ga = jnp.einsum("bsi,sio->bso", x3, params["w1"]) + params["b1"][:, 0][None]
    at = jnp.einsum("bsi,sio->bso", ga, params["w2"]) + params["b2"][:, 0][None]
    attentions = at.reshape(B, U, Du)
    global_attention = ga.reshape(B, Dg)

    mem_attention, mem_outputs = memories
    dot = jnp.sum(attentions[:, None] * mem_attention[None], axis=-1)
    na = jnp.sqrt(jnp.sum(attentions ** 2, axis=-1))
    nc = jnp.sqrt(jnp.sum(mem_attention ** 2, axis=-1))
    # torch.cosine_similarity clamps each norm separately with eps=1e-8
    w = dot / (jnp.maximum(na, 1e-8)[:, None, :] * jnp.maximum(nc, 1e-8)[None])
    w = w * params["temperature"][None, None, :]
    if rand_mask is not None:
        w = jnp.where(rand_mask, -jnp.inf, w)
    if eye_mask:
        eye = jnp.eye(B, dtype=bool)[:, :, None]
        w = jnp.where(eye, -jnp.inf, w)
    w4 = jax.nn.softmax(w.reshape(B, B // G, G, U), axis=1)
    w = w4.reshape(B, B, U) / 8.0
    out = jnp.sum(mem_outputs[None] * w[:, :, :, None], axis=1)
    return attentions, global_attention, w, out


if __name__ == "__main__":
    # Small config consistent with the module's constructor constraints.
    num_units_regions = (4, 4)        # num_units = 8
    dim_inputs = 32
    dim_attention_global = 16
    dim_attention_unit = 8
    num_attention_groups = 2
    num_attention_splits = 4
    batch = 16                        # memories == batch (module semantics)
    dim_mem_out = 16
    num_units = sum(num_units_regions)

    key = jax.random.PRNGKey(0)
    kp, kx, ka, ko = jax.random.split(key, 4)
    params = init_hippocampus_params(
        kp, num_units_regions=num_units_regions, dim_inputs=dim_inputs,
        dim_attention_global=dim_attention_global,
        dim_attention_unit=dim_attention_unit,
        num_attention_splits=num_attention_splits)

    x = jax.random.normal(kx, (batch, dim_inputs), jnp.float32)
    mem_attention = jax.random.normal(
        ka, (batch, num_units, dim_attention_unit), jnp.float32)
    mem_outputs = jax.random.normal(
        ko, (batch, num_units, dim_mem_out), jnp.float32)
    memories = (mem_attention, mem_outputs)

    common = dict(num_units=num_units, dim_attention_unit=dim_attention_unit,
                  dim_attention_global=dim_attention_global,
                  num_attention_splits=num_attention_splits,
                  num_attention_groups=num_attention_groups)

    # (1) eye mask on, explicit B-tile of 8 -> exercises a 2-step grid
    attn, ga, w, out = hippocampus_forward(
        params, x, memories, mask_p=0.0, eye_mask=True, block_b=8, **common)
    jax.block_until_ready((attn, ga, w, out))
    ref = hippocampus_reference(params, x, memories, eye_mask=True, **common)
    for got, r, name in zip((attn, ga, w, out), ref,
                            ("attentions", "global_attention",
                             "weights", "outputs")):
        assert got.shape == r.shape, f"{name} shape"
        assert jnp.allclose(got, r, rtol=2e-2, atol=2e-2), f"{name} mismatch"

    # (2) eye mask off, auto tile (single grid step) -> no-mask specialization
    attn2, ga2, w2, out2 = hippocampus_forward(
        params, x, memories, mask_p=0.0, eye_mask=False, **common)
    jax.block_until_ready((attn2, ga2, w2, out2))
    ref2 = hippocampus_reference(params, x, memories, eye_mask=False, **common)
    for got, r, name in zip((attn2, ga2, w2, out2), ref2,
                            ("attentions", "global_attention",
                             "weights", "outputs")):
        assert jnp.allclose(got, r, rtol=2e-2, atol=2e-2), \
            f"{name} (no eye mask) mismatch"

    # (3) random-mask path: the mask is drawn wrapper-side, so the exact same
    #     mask can be fed to the reference for a full numerical check
    mask_seed = 7
    mask_p = 0.1
    attn3, ga3, w3, out3 = hippocampus_forward(
        params, x, memories, mask_p=mask_p, eye_mask=True,
        mask_seed=mask_seed, block_b=8, **common)
    jax.block_until_ready((attn3, ga3, w3, out3))
    rnd = jax.random.uniform(jax.random.PRNGKey(mask_seed),
                             (num_units, batch, batch))
    rmask = jnp.transpose(rnd < mask_p, (1, 2, 0))          # (B, M, U)
    ref3 = hippocampus_reference(params, x, memories, eye_mask=True,
                                 rand_mask=rmask, **common)
    for got, r, name in zip((attn3, ga3, w3, out3), ref3,
                            ("attentions", "global_attention",
                             "weights", "outputs")):
        assert jnp.allclose(got, r, rtol=2e-2, atol=2e-2), \
            f"{name} (random mask) mismatch"

    print("KERNEL_OK")
</pallas_src>

<mosaic_0001>
module attributes {stable_mosaic.version = 11 : i64} {
  func.func @_hippocampus_kernel(%arg0: i32, %arg1: memref<8x32xf32, #tpu.memory_space<vmem>>, %arg2: memref<32x16xf32, #tpu.memory_space<vmem>>, %arg3: memref<1x16xf32, #tpu.memory_space<vmem>>, %arg4: memref<16x64xf32, #tpu.memory_space<vmem>>, %arg5: memref<1x64xf32, #tpu.memory_space<vmem>>, %arg6: memref<8x16x8xbf16, #tpu.memory_space<vmem>>, %arg7: memref<8x16x16xbf16, #tpu.memory_space<vmem>>, %arg8: memref<16x2xf32, #tpu.memory_space<vmem>>, %arg9: memref<8x64xf32, #tpu.memory_space<vmem>>, %arg10: memref<8x16xf32, #tpu.memory_space<vmem>>, %arg11: memref<8x128xf32, #tpu.memory_space<vmem>>, %arg12: memref<8x128xf32, #tpu.memory_space<vmem>>) attributes {dimension_semantics = [#tpu.dimension_semantics<parallel>], iteration_bounds = array<i64: 2>, scalar_prefetch = 0 : i64, scratch_operands = 0 : i64, tpu.core_type = #tpu.core_type<tc>, window_params = [{transform_indices = @transform_0, window_bounds = array<i64: 8, 32>}, {pipeline_mode = #tpu.pipeline_mode<synchronous>, transform_indices = @transform_1, window_bounds = array<i64: 32, 16>}, {pipeline_mode = #tpu.pipeline_mode<synchronous>, transform_indices = @transform_2, window_bounds = array<i64: 1, 16>}, {pipeline_mode = #tpu.pipeline_mode<synchronous>, transform_indices = @transform_3, window_bounds = array<i64: 16, 64>}, {pipeline_mode = #tpu.pipeline_mode<synchronous>, transform_indices = @transform_4, window_bounds = array<i64: 1, 64>}, {pipeline_mode = #tpu.pipeline_mode<synchronous>, transform_indices = @transform_5, window_bounds = array<i64: 8, 16, 8>}, {pipeline_mode = #tpu.pipeline_mode<synchronous>, transform_indices = @transform_6, window_bounds = array<i64: 8, 16, 16>}, {pipeline_mode = #tpu.pipeline_mode<synchronous>, transform_indices = @transform_7, window_bounds = array<i64: 16, 2>}, {transform_indices = @transform_8, window_bounds = array<i64: 8, 64>}, {transform_indices = @transform_9, window_bounds = array<i64: 8, 16>}, {transform_indices = @transform_10, window_bounds = array<i64: 8, 128>}, {transform_indices = @transform_11, window_bounds = array<i64: 8, 128>}]} {
    %c0 = arith.constant 0 : index
    %c0_0 = arith.constant 0 : index
    %0 = vector.load %arg1[%c0, %c0_0] : memref<8x32xf32, #tpu.memory_space<vmem>>, vector<8x32xf32>
    %c0_1 = arith.constant 0 : index
    %c0_2 = arith.constant 0 : index
    %1 = vector.load %arg2[%c0_1, %c0_2] : memref<32x16xf32, #tpu.memory_space<vmem>>, vector<32x16xf32>
    %cst = arith.constant dense<0.000000e+00> : vector<8x16xf32>
    %2 = tpu.matmul %0, %1, %cst {dimension_numbers = #tpu.dot_dimension_numbers<[1], [0], [0], [1], [0, 0, 1, 1], [], []>} : vector<8x32xf32>, vector<32x16xf32>, vector<8x16xf32> -> vector<8x16xf32>
    %c0_3 = arith.constant 0 : index
    %c0_4 = arith.constant 0 : index
    %3 = vector.load %arg3[%c0_3, %c0_4] : memref<1x16xf32, #tpu.memory_space<vmem>>, vector<1x16xf32>
    %4 = vector.broadcast %3 : vector<1x16xf32> to vector<8x16xf32>
    %5 = arith.addf %2, %4 : vector<8x16xf32>
    %c0_5 = arith.constant 0 : index
    %c0_6 = arith.constant 0 : index
    %6 = vector.load %arg10[%c0_5, %c0_6] : memref<8x16xf32, #tpu.memory_space<vmem>>, vector<8x16xf32>
    tpu.vector_store %arg10[%c0_5, %c0_6], %5 {strides = array<i32>} : memref<8x16xf32, #tpu.memory_space<vmem>>, vector<8x16xf32>,
    %c0_7 = arith.constant 0 : index
    %c0_8 = arith.constant 0 : index
    %7 = vector.load %arg4[%c0_7, %c0_8] : memref<16x64xf32, #tpu.memory_space<vmem>>, vector<16x64xf32>
    %cst_9 = arith.constant dense<0.000000e+00> : vector<8x64xf32>
    %8 = tpu.matmul %5, %7, %cst_9 {dimension_numbers = #tpu.dot_dimension_numbers<[1], [0], [0], [1], [0, 0, 1, 1], [], []>} : vector<8x16xf32>, vector<16x64xf32>, vector<8x64xf32> -> vector<8x64xf32>
    %c0_10 = arith.constant 0 : index
    %c0_11 = arith.constant 0 : index
    %9 = vector.load %arg5[%c0_10, %c0_11] : memref<1x64xf32, #tpu.memory_space<vmem>>, vector<1x64xf32>
    %10 = vector.broadcast %9 : vector<1x64xf32> to vector<8x64xf32>
    %11 = arith.addf %8, %10 : vector<8x64xf32>
    %c0_12 = arith.constant 0 : index
    %c0_13 = arith.constant 0 : index
    %12 = vector.load %arg9[%c0_12, %c0_13] : memref<8x64xf32, #tpu.memory_space<vmem>>, vector<8x64xf32>
    tpu.vector_store %arg9[%c0_12, %c0_13], %11 {strides = array<i32>} : memref<8x64xf32, #tpu.memory_space<vmem>>, vector<8x64xf32>,
    %13 = vector.shape_cast %11 : vector<8x64xf32> to vector<8x8x8xf32>
    %14 = tpu.transpose %13, [1, 0, 2] : vector<8x8x8xf32> -> vector<8x8x8xf32>
    %15 = arith.truncf %14 : vector<8x8x8xf32> to vector<8x8x8xbf16>
    %c0_14 = arith.constant 0 : index
    %c0_15 = arith.constant 0 : index
    %c0_16 = arith.constant 0 : index
    %16 = vector.load %arg6[%c0_14, %c0_15, %c0_16] : memref<8x16x8xbf16, #tpu.memory_space<vmem>>, vector<8x16x8xbf16>
    %cst_17 = arith.constant dense<0.000000e+00> : vector<8x8x16xf32>
    %17 = tpu.matmul %15, %16, %cst_17 {dimension_numbers = #tpu.dot_dimension_numbers<[2], [2], [1], [1], [0, 0, 0, 1, 1, 1], [0], [0]>} : vector<8x8x8xbf16>, vector<8x16x8xbf16>, vector<8x8x16xf32> -> vector<8x8x16xf32>
    %18 = arith.mulf %14, %14 : vector<8x8x8xf32>
    %cst_18 = arith.constant dense<0.000000e+00> : vector<8x8xf32>
    %19 = vector.multi_reduction <add>, %18, %cst_18 [2] : vector<8x8x8xf32> to vector<8x8xf32>
    %20 = vector.shape_cast %19 : vector<8x8xf32> to vector<8x8x1xf32>
    %21 = math.sqrt %20 : vector<8x8x1xf32>
    %cst_19 = arith.constant 9.99999993E-9 : f32
    %22 = vector.broadcast %cst_19 : f32 to vector<8x8x1xf32>
    %23 = arith.maximumf %21, %22 : vector<8x8x1xf32>
    %cst_20 = arith.constant 1.000000e+00 : f32
    %24 = vector.broadcast %cst_20 : f32 to vector<8x8x1xf32>
    %25 = arith.divf %24, %23 : vector<8x8x1xf32>
    %26 = vector.broadcast %25 : vector<8x8x1xf32> to vector<8x8x16xf32>
    %27 = arith.mulf %17, %26 : vector<8x8x16xf32>
    %28 = tpu.iota {dimensions = array<i32: 0>} : vector<8x16xi32>
    %c8_i32 = arith.constant 8 : i32
    %29 = arith.muli %arg0, %c8_i32 : i32
    %30 = vector.broadcast %29 : i32 to vector<8x16xi32>
    %31 = arith.addi %28, %30 : vector<8x16xi32>
    %32 = tpu.iota {dimensions = array<i32: 1>} : vector<8x16xi32>
    %33 = arith.cmpi eq, %31, %32 : vector<8x16xi32>
    %34 = vector.shape_cast %33 : vector<8x16xi1> to vector<1x8x16xi1>
    %cst_21 = arith.constant 0xFF800000 : f32
    %35 = vector.shape_cast %34 : vector<1x8x16xi1> to vector<1x8x16xi1>
    %36 = vector.broadcast %35 : vector<1x8x16xi1> to vector<8x8x16xi1>
    %37 = vector.broadcast %cst_21 : f32 to vector<8x8x16xf32>
    %38 = arith.select %36, %37, %27 : vector<8x8x16xi1>, vector<8x8x16xf32>
    %cst_22 = arith.constant dense<0xFF800000> : vector<8x8xf32>
    %39 = vector.multi_reduction <maximumf>, %38, %cst_22 [2] : vector<8x8x16xf32> to vector<8x8xf32>
    %40 = vector.shape_cast %39 : vector<8x8xf32> to vector<8x8x1xf32>
    %41 = vector.broadcast %40 : vector<8x8x1xf32> to vector<8x8x16xf32>
    %42 = arith.subf %38, %41 : vector<8x8x16xf32>
    %43 = math.exp %42 : vector<8x8x16xf32>
    %44 = vector.shape_cast %43 : vector<8x8x16xf32> to vector<64x16xf32>
    %c0_23 = arith.constant 0 : index
    %c0_24 = arith.constant 0 : index
    %45 = vector.load %arg8[%c0_23, %c0_24] : memref<16x2xf32, #tpu.memory_space<vmem>>, vector<16x2xf32>
    %cst_25 = arith.constant dense<0.000000e+00> : vector<64x2xf32>
    %46 = tpu.matmul %44, %45, %cst_25 {dimension_numbers = #tpu.dot_dimension_numbers<[1], [0], [0], [1], [0, 0, 1, 1], [], []>} : vector<64x16xf32>, vector<16x2xf32>, vector<64x2xf32> -> vector<64x2xf32>
    %47 = vector.shape_cast %46 : vector<64x2xf32> to vector<8x8x2xf32>
    %cst_26 = arith.constant 1.250000e-01 : f32
    %48 = vector.broadcast %cst_26 : f32 to vector<8x8x2xf32>
    %49 = arith.divf %48, %47 : vector<8x8x2xf32>
    %50 = tpu.iota {dimensions = array<i32: 1>} : vector<8x16xi32>
    %c2_i32 = arith.constant 2 : i32
    %c0_i32 = arith.constant 0 : i32
    %51 = arith.cmpi eq, %c2_i32, %c0_i32 : i32
    %c1_i32 = arith.constant 1 : i32
    %52 = arith.select %51, %c1_i32, %c2_i32 : i32
    %53 = vector.broadcast %52 : i32 to vector<8x16xi32>
    %54 = arith.remsi %50, %53 : vector<8x16xi32>
    %c0_i32_27 = arith.constant 0 : i32
    %55 = vector.broadcast %c0_i32_27 : i32 to vector<8x16xi32>
    %56 = arith.cmpi ne, %54, %55 : vector<8x16xi32>
    %c0_i32_28 = arith.constant 0 : i32
    %57 = vector.broadcast %c0_i32_28 : i32 to vector<8x16xi32>
    %58 = arith.cmpi slt, %54, %57 : vector<8x16xi32>
    %c0_i32_29 = arith.constant 0 : i32
    %59 = arith.cmpi slt, %52, %c0_i32_29 : i32
    %60 = vector.broadcast %59 : i1 to vector<8x16xi1>
    %61 = vector.broadcast %60 : vector<8x16xi1> to vector<8x16xi1>
    %62 = arith.xori %58, %61 : vector<8x16xi1>
    %63 = arith.andi %62, %56 : vector<8x16xi1>
    %64 = vector.broadcast %52 : i32 to vector<8x16xi32>
    %65 = arith.addi %54, %64 : vector<8x16xi32>
    %66 = arith.select %63, %65, %54 : vector<8x16xi1>, vector<8x16xi32>
    %67 = vector.shape_cast %66 : vector<8x16xi32> to vector<1x8x16xi32>
    %c0_i32_30 = arith.constant 0 : i32
    %68 = vector.broadcast %c0_i32_30 : i32 to vector<1x8x16xi32>
    %69 = arith.cmpi eq, %67, %68 : vector<1x8x16xi32>
    %70 = vector.extract_strided_slice %49 {offsets = [0, 0, 0], sizes = [8, 8, 1], strides = [1, 1, 1]} : vector<8x8x2xf32> to vector<8x8x1xf32>
    %cst_31 = arith.constant 0.000000e+00 : f32
    %71 = vector.shape_cast %69 : vector<1x8x16xi1> to vector<1x8x16xi1>
    %72 = vector.broadcast %71 : vector<1x8x16xi1> to vector<8x8x16xi1>
    %73 = vector.shape_cast %70 : vector<8x8x1xf32> to vector<8x8x1xf32>
    %74 = vector.broadcast %73 : vector<8x8x1xf32> to vector<8x8x16xf32>
    %75 = vector.broadcast %cst_31 : f32 to vector<8x8x16xf32>
    %76 = arith.select %72, %74, %75 : vector<8x8x16xi1>, vector<8x8x16xf32>
    %77 = vector.shape_cast %66 : vector<8x16xi32> to vector<1x8x16xi32>
    %c1_i32_32 = arith.constant 1 : i32
    %78 = vector.broadcast %c1_i32_32 : i32 to vector<1x8x16xi32>
    %79 = arith.cmpi eq, %77, %78 : vector<1x8x16xi32>
    %80 = vector.extract_strided_slice %49 {offsets = [0, 0, 1], sizes = [8, 8, 1], strides = [1, 1, 1]} : vector<8x8x2xf32> to vector<8x8x1xf32>
    %81 = vector.shape_cast %79 : vector<1x8x16xi1> to vector<1x8x16xi1>
    %82 = vector.broadcast %81 : vector<1x8x16xi1> to vector<8x8x16xi1>
    %83 = vector.shape_cast %80 : vector<8x8x1xf32> to vector<8x8x1xf32>
    %84 = vector.broadcast %83 : vector<8x8x1xf32> to vector<8x8x16xf32>
    %85 = arith.select %82, %84, %76 : vector<8x8x16xi1>, vector<8x8x16xf32>
    %86 = arith.mulf %43, %85 : vector<8x8x16xf32>
    %87 = tpu.transpose %86, [1, 0, 2] : vector<8x8x16xf32> -> vector<8x8x16xf32>
    %88 = tpu.transpose %87, [0, 2, 1] : vector<8x8x16xf32> -> vector<8x16x8xf32>
    %89 = vector.shape_cast %88 : vector<8x16x8xf32> to vector<8x128xf32>
    %c0_33 = arith.constant 0 : index
    %c0_34 = arith.constant 0 : index
    %90 = vector.load %arg11[%c0_33, %c0_34] : memref<8x128xf32, #tpu.memory_space<vmem>>, vector<8x128xf32>
    tpu.vector_store %arg11[%c0_33, %c0_34], %89 {strides = array<i32>} : memref<8x128xf32, #tpu.memory_space<vmem>>, vector<8x128xf32>,
    %91 = arith.truncf %86 : vector<8x8x16xf32> to vector<8x8x16xbf16>
    %c0_35 = arith.constant 0 : index
    %c0_36 = arith.constant 0 : index
    %c0_37 = arith.constant 0 : index
    %92 = vector.load %arg7[%c0_35, %c0_36, %c0_37] : memref<8x16x16xbf16, #tpu.memory_space<vmem>>, vector<8x16x16xbf16>
    %cst_38 = arith.constant dense<0.000000e+00> : vector<8x8x16xf32>
    %93 = tpu.matmul %91, %92, %cst_38 {dimension_numbers = #tpu.dot_dimension_numbers<[2], [1], [1], [2], [0, 0, 0, 1, 1, 2], [0], [0]>} : vector<8x8x16xbf16>, vector<8x16x16xbf16>, vector<8x8x16xf32> -> vector<8x8x16xf32>
    %94 = tpu.transpose %93, [1, 0, 2] : vector<8x8x16xf32> -> vector<8x8x16xf32>
    %95 = vector.shape_cast %94 : vector<8x8x16xf32> to vector<8x128xf32>
    %c0_39 = arith.constant 0 : index
    %c0_40 = arith.constant 0 : index
    %96 = vector.load %arg12[%c0_39, %c0_40] : memref<8x128xf32, #tpu.memory_space<vmem>>, vector<8x128xf32>
    tpu.vector_store %arg12[%c0_39, %c0_40], %95 {strides = array<i32>} : memref<8x128xf32, #tpu.memory_space<vmem>>, vector<8x128xf32>,
    return
  }
  func.func @transform_0(%arg0: i32) -> (i32, i32) {
    %c0_i32 = arith.constant 0 : i32
    %c0_i32_0 = arith.constant 0 : i32
    return %arg0, %c0_i32 : i32, i32
  }
  func.func @transform_1(%arg0: i32) -> (i32, i32) {
    %c0_i32 = arith.constant 0 : i32
    %c0_i32_0 = arith.constant 0 : i32
    %c0_i32_1 = arith.constant 0 : i32
    return %c0_i32, %c0_i32_0 : i32, i32
  }
  func.func @transform_2(%arg0: i32) -> (i32, i32) {
    %c0_i32 = arith.constant 0 : i32
    %c0_i32_0 = arith.constant 0 : i32
    %c0_i32_1 = arith.constant 0 : i32
    return %c0_i32, %c0_i32_0 : i32, i32
  }
  func.func @transform_3(%arg0: i32) -> (i32, i32) {
    %c0_i32 = arith.constant 0 : i32
    %c0_i32_0 = arith.constant 0 : i32
    %c0_i32_1 = arith.constant 0 : i32
    return %c0_i32, %c0_i32_0 : i32, i32
  }
  func.func @transform_4(%arg0: i32) -> (i32, i32) {
    %c0_i32 = arith.constant 0 : i32
    %c0_i32_0 = arith.constant 0 : i32
    %c0_i32_1 = arith.constant 0 : i32
    return %c0_i32, %c0_i32_0 : i32, i32
  }
  func.func @transform_5(%arg0: i32) -> (i32, i32, i32) {
    %c0_i32 = arith.constant 0 : i32
    %c0_i32_0 = arith.constant 0 : i32
    %c0_i32_1 = arith.constant 0 : i32
    %c0_i32_2 = arith.constant 0 : i32
    return %c0_i32, %c0_i32_0, %c0_i32_1 : i32, i32, i32
  }
  func.func @transform_6(%arg0: i32) -> (i32, i32, i32) {
    %c0_i32 = arith.constant 0 : i32
    %c0_i32_0 = arith.constant 0 : i32
    %c0_i32_1 = arith.constant 0 : i32
    %c0_i32_2 = arith.constant 0 : i32
    return %c0_i32, %c0_i32_0, %c0_i32_1 : i32, i32, i32
  }
  func.func @transform_7(%arg0: i32) -> (i32, i32) {
    %c0_i32 = arith.constant 0 : i32
    %c0_i32_0 = arith.constant 0 : i32
    %c0_i32_1 = arith.constant 0 : i32
    return %c0_i32, %c0_i32_0 : i32, i32
  }
  func.func @transform_8(%arg0: i32) -> (i32, i32) {
    %c0_i32 = arith.constant 0 : i32
    %c0_i32_0 = arith.constant 0 : i32
    return %arg0, %c0_i32 : i32, i32
  }
  func.func @transform_9(%arg0: i32) -> (i32, i32) {
    %c0_i32 = arith.constant 0 : i32
    %c0_i32_0 = arith.constant 0 : i32
    return %arg0, %c0_i32 : i32, i32
  }
  func.func @transform_10(%arg0: i32) -> (i32, i32) {
    %c0_i32 = arith.constant 0 : i32
    %c0_i32_0 = arith.constant 0 : i32
    return %arg0, %c0_i32 : i32, i32
  }
  func.func @transform_11(%arg0: i32) -> (i32, i32) {
    %c0_i32 = arith.constant 0 : i32
    %c0_i32_0 = arith.constant 0 : i32
    return %arg0, %c0_i32 : i32, i32
  }
}

</mosaic_0001>

<llo_original>
// kernel: tpu_custom_call.1
$region0: #{tpu_custom_call.1}
  #allocation0 [shape = 'u32[]', space=smem, size = 0x4, offset = 0x4, fixed_abs, tag = 'smem constant byte address 0x4 - core index']
  #allocation1 [shape = 'u32[144,128]{1,0:T(1,128)}', space=vmem, size = 0x12000, scoped, tag = 'internal scratch']
  %s0 = inlined_call_operand.vmem [shape: f32[16,32], index: 0, kind: input, shape index: {}]
  %s1 = inlined_call_operand.vmem [shape: f32[32,16], index: 1, kind: input, shape index: {}]
  %s2 = inlined_call_operand.vmem [shape: f32[1,16], index: 2, kind: input, shape index: {}]
  %s3 = inlined_call_operand.vmem [shape: f32[16,64], index: 3, kind: input, shape index: {}]
  %s4 = inlined_call_operand.vmem [shape: f32[1,64], index: 4, kind: input, shape index: {}]
  %s5 = inlined_call_operand.vmem [shape: bf16[8,16,8], index: 5, kind: input, shape index: {}]
  %s6 = inlined_call_operand.vmem [shape: bf16[8,16,16], index: 6, kind: input, shape index: {}]
  %s7 = inlined_call_operand.vmem [shape: f32[16,2], index: 7, kind: input, shape index: {}]
  %s8 = inlined_call_operand.hbm [shape: f32[16,64], index: 8, kind: output, shape index: {0}]
  %s9 = inlined_call_operand.hbm [shape: f32[16,16], index: 9, kind: output, shape index: {1}]
  %s10 = inlined_call_operand.hbm [shape: f32[16,128], index: 10, kind: output, shape index: {2}]
  %s11 = inlined_call_operand.hbm [shape: f32[16,128], index: 11, kind: output, shape index: {3}]
  %12 = xla_tuple %s8, %s9, %s10, %s11
  %s13 = sld [smem:[#allocation0]]
  $region89: #{tpu_custom_call.1} parent=0
    _
  %s15 = ssub.s32 1, %s13
  %s16 = scalar_select 0, %s15, %s13
  $region1: #{tpu_custom_call.1} parent=0
    #allocation2 [shape = 'u8[8192]{0}', space=vmem, size = 0x2000, scoped, tag = 'output window, operand 0']
    #allocation3 [shape = 's32[2]{0}', space=sflag, size = 0x8, scoped, tag = 'scoped memory for tpu_custom_call.1']
    #allocation4 [shape = 'u8[8192]{0}', space=vmem, size = 0x2000, scoped, tag = 'output window, operand 1']
    #allocation5 [shape = 's32[2]{0}', space=sflag, size = 0x8, scoped, tag = 'scoped memory for tpu_custom_call.1']
    #allocation6 [shape = 'u8[8192]{0}', space=vmem, size = 0x2000, scoped, tag = 'output window, operand 2']
    #allocation7 [shape = 'u8[8192]{0}', space=vmem, size = 0x2000, scoped, tag = 'output window, operand 3']
    #allocation8 [shape = 's32[2]{0}', space=sflag, size = 0x8, scoped, tag = 'scoped memory for tpu_custom_call.1']
    %17 = vsyncpa [#allocation3], 0
    %s18 = scalar_lea.sflag [#allocation3], 1
    %19 = vsyncpa %s18, 0
    %20 = vsyncpa [#allocation5], 0
    %s21 = scalar_lea.sflag [#allocation5], 1
    %22 = vsyncpa %s21, 0
    %23 = vsyncpa [#allocation8], 0
    %s24 = scalar_lea.sflag [#allocation8], 1
    %25 = vsyncpa %s24, 0
    loop: start=0, step=1, limit=4
    $region2: #{tpu_custom_call.1} parent=1 // loop_pre_header
      _
    $region3: #{tpu_custom_call.1} parent=1 // loop_header
      %s27 = sphi 0, %s31
      %p28 = scmp.ge.s32.totalorder %s27, 4
      %s37 = sphi 0, %s39
      %s40 = sphi 0, %s37
      %s41 = sphi 0, %s40
      %s57 = sphi 0, %s41
      %s61 = sphi 0, %s61
      %s63 = sphi 0, %s61
      %s64 = sphi 0, %s63
      %s78 = sphi 0, %s64
      %s82 = sphi 0, %s82
      %s84 = sphi 0, %s82
      %s85 = sphi 0, %s84
      %s99 = sphi 0, %s85
      %s103 = sphi 0, %s103
      %s105 = sphi 0, %s103
      %s106 = sphi 0, %s105
      %s120 = sphi 0, %s106
      %s124 = sphi 0, %s124
      %s126 = sphi 0, %s124
      %s127 = sphi 0, %s126
      %s141 = sphi 0, %s127
      %s145 = sphi 0, %s145
      %s147 = sphi 0, %s145
      %s148 = sphi 0, %s147
      %s162 = sphi 0, %s148
      %s166 = sphi 0, %s166
      %s168 = sphi 0, %s166
      %s169 = sphi 0, %s168
      %s183 = sphi 0, %s169
      %s187 = sphi 0, %s187
      %s189 = sphi 0, %s187
      %s190 = sphi 0, %s189
      %s204 = sphi 0, %s190
      %s210 = sphi 0, %s212
      %s213 = sphi 0, %s210
      %s214 = sphi 0, %s213
      %s230 = sphi 0, %s214
      %s236 = sphi 0, %s238
      %s239 = sphi 0, %s236
      %s240 = sphi 0, %s239
      %s256 = sphi 0, %s240
      %s262 = sphi 0, %s264
      %s265 = sphi 0, %s262
      %s266 = sphi 0, %s265
      %s282 = sphi 0, %s266
      %s288 = sphi 0, %s290
      %s291 = sphi 0, %s288
      %s292 = sphi 0, %s291
      %s308 = sphi 0, %s292
    $region4: #{tpu_custom_call.1} parent=1 // loop_header_branch
      %30 = sbr.rel (%p28) target = $region8
    $region5: #{tpu_custom_call.1} parent=1 // loop_body
      %s32 = ssub.s32 %s27, 1
      %s33 = ssub.s32 %s27, 2
      %s34 = sadd.s32 %s27, 1
      %s35 = ssub.s32 %s27, %s34
      %p36 = scmp.eq.s32.totalorder %s35, 0
      %s38 = sadd.s32 %s37, 1
      %s39 = scalar_select %p36, %s37, %s38
      %p42 = pneg %p36
      %p43 = scmp.eq.s32.totalorder %s27, 1
      %p44 = por %p42, %p43
      %p45 = scmp.ne.s32.totalorder %s37, %s40
      %p46 = scmp.eq.s32.totalorder %s27, 0
      %p47 = por %p45, %p46
      %p48 = scmp.ne.s32.totalorder %s37, %s40
      %p49 = scmp.eq.s32.totalorder %s32, 1
      %p50 = por %p48, %p49
      %p51 = scmp.ne.s32.totalorder %s40, %s41
      %p52 = scmp.eq.s32.totalorder %s32, 0
      %p53 = por %p51, %p52
      %p54 = scmp.ne.s32.totalorder %s40, %s41
      %p55 = scmp.eq.s32.totalorder %s33, 1
      %p56 = por %p54, %p55
      %p58 = scmp.ne.s32.totalorder %s41, %s57
      %p59 = scmp.eq.s32.totalorder %s33, 0
      %p60 = por %p58, %p59
      %s62 = sadd.s32 %s61, 1
      %p65 = scmp.eq.s32.totalorder %s27, 1
      %p66 = scmp.ne.s32.totalorder %s61, %s63
      %p67 = scmp.eq.s32.totalorder %s27, 0
      %p68 = por %p66, %p67
      %p69 = scmp.ne.s32.totalorder %s61, %s63
      %p70 = scmp.eq.s32.totalorder %s32, 1
      %p71 = por %p69, %p70
      %p72 = scmp.ne.s32.totalorder %s63, %s64
      %p73 = scmp.eq.s32.totalorder %s32, 0
      %p74 = por %p72, %p73
      %p75 = scmp.ne.s32.totalorder %s63, %s64
      %p76 = scmp.eq.s32.totalorder %s33, 1
      %p77 = por %p75, %p76
      %p79 = scmp.ne.s32.totalorder %s64, %s78
      %p80 = scmp.eq.s32.totalorder %s33, 0
      %p81 = por %p79, %p80
      %s83 = sadd.s32 %s82, 1
      %p86 = scmp.eq.s32.totalorder %s27, 1
      %p87 = scmp.ne.s32.totalorder %s82, %s84
      %p88 = scmp.eq.s32.totalorder %s27, 0
      %p89 = por %p87, %p88
      %p90 = scmp.ne.s32.totalorder %s82, %s84
      %p91 = scmp.eq.s32.totalorder %s32, 1
      %p92 = por %p90, %p91
      %p93 = scmp.ne.s32.totalorder %s84, %s85
      %p94 = scmp.eq.s32.totalorder %s32, 0
      %p95 = por %p93, %p94
      %p96 = scmp.ne.s32.totalorder %s84, %s85
      %p97 = scmp.eq.s32.totalorder %s33, 1
      %p98 = por %p96, %p97
      %p100 = scmp.ne.s32.totalorder %s85, %s99
      %p101 = scmp.eq.s32.totalorder %s33, 0
      %p102 = por %p100, %p101
      %s104 = sadd.s32 %s103, 1
      %p107 = scmp.eq.s32.totalorder %s27, 1
      %p108 = scmp.ne.s32.totalorder %s103, %s105
      %p109 = scmp.eq.s32.totalorder %s27, 0
      %p110 = por %p108, %p109
      %p111 = scmp.ne.s32.totalorder %s103, %s105
      %p112 = scmp.eq.s32.totalorder %s32, 1
      %p113 = por %p111, %p112
      %p114 = scmp.ne.s32.totalorder %s105, %s106
      %p115 = scmp.eq.s32.totalorder %s32, 0
      %p116 = por %p114, %p115
      %p117 = scmp.ne.s32.totalorder %s105, %s106
      %p118 = scmp.eq.s32.totalorder %s33, 1
      %p119 = por %p117, %p118
      %p121 = scmp.ne.s32.totalorder %s106, %s120
      %p122 = scmp.eq.s32.totalorder %s33, 0
      %p123 = por %p121, %p122
      %s125 = sadd.s32 %s124, 1
      %p128 = scmp.eq.s32.totalorder %s27, 1
      %p129 = scmp.ne.s32.totalorder %s124, %s126
      %p130 = scmp.eq.s32.totalorder %s27, 0
      %p131 = por %p129, %p130
      %p132 = scmp.ne.s32.totalorder %s124, %s126
      %p133 = scmp.eq.s32.totalorder %s32, 1
      %p134 = por %p132, %p133
      %p135 = scmp.ne.s32.totalorder %s126, %s127
      %p136 = scmp.eq.s32.totalorder %s32, 0
      %p137 = por %p135, %p136
      %p138 = scmp.ne.s32.totalorder %s126, %s127
      %p139 = scmp.eq.s32.totalorder %s33, 1
      %p140 = por %p138, %p139
      %p142 = scmp.ne.s32.totalorder %s127, %s141
      %p143 = scmp.eq.s32.totalorder %s33, 0
      %p144 = por %p142, %p143
      %s146 = sadd.s32 %s145, 1
      %p149 = scmp.eq.s32.totalorder %s27, 1
      %p150 = scmp.ne.s32.totalorder %s145, %s147
      %p151 = scmp.eq.s32.totalorder %s27, 0
      %p152 = por %p150, %p151
      %p153 = scmp.ne.s32.totalorder %s145, %s147
      %p154 = scmp.eq.s32.totalorder %s32, 1
      %p155 = por %p153, %p154
      %p156 = scmp.ne.s32.totalorder %s147, %s148
      %p157 = scmp.eq.s32.totalorder %s32, 0
      %p158 = por %p156, %p157
      %p159 = scmp.ne.s32.totalorder %s147, %s148
      %p160 = scmp.eq.s32.totalorder %s33, 1
      %p161 = por %p159, %p160
      %p163 = scmp.ne.s32.totalorder %s148, %s162
      %p164 = scmp.eq.s32.totalorder %s33, 0
      %p165 = por %p163, %p164
      %s167 = sadd.s32 %s166, 1
      %p170 = scmp.eq.s32.totalorder %s27, 1
      %p171 = scmp.ne.s32.totalorder %s166, %s168
      %p172 = scmp.eq.s32.totalorder %s27, 0
      %p173 = por %p171, %p172
      %p174 = scmp.ne.s32.totalorder %s166, %s168
      %p175 = scmp.eq.s32.totalorder %s32, 1
      %p176 = por %p174, %p175
      %p177 = scmp.ne.s32.totalorder %s168, %s169
      %p178 = scmp.eq.s32.totalorder %s32, 0
      %p179 = por %p177, %p178
      %p180 = scmp.ne.s32.totalorder %s168, %s169
      %p181 = scmp.eq.s32.totalorder %s33, 1
      %p182 = por %p180, %p181
      %p184 = scmp.ne.s32.totalorder %s169, %s183
      %p185 = scmp.eq.s32.totalorder %s33, 0
      %p186 = por %p184, %p185
      %s188 = sadd.s32 %s187, 1
      %p191 = scmp.eq.s32.totalorder %s27, 1
      %p192 = scmp.ne.s32.totalorder %s187, %s189
      %p193 = scmp.eq.s32.totalorder %s27, 0
      %p194 = por %p192, %p193
      %p195 = scmp.ne.s32.totalorder %s187, %s189
      %p196 = scmp.eq.s32.totalorder %s32, 1
      %p197 = por %p195, %p196
      %p198 = scmp.ne.s32.totalorder %s189, %s190
      %p199 = scmp.eq.s32.totalorder %s32, 0
      %p200 = por %p198, %p199
      %p201 = scmp.ne.s32.totalorder %s189, %s190
      %p202 = scmp.eq.s32.totalorder %s33, 1
      %p203 = por %p201, %p202
      %p205 = scmp.ne.s32.totalorder %s190, %s204
      %p206 = scmp.eq.s32.totalorder %s33, 0
      %p207 = por %p205, %p206
      %s208 = ssub.s32 %s27, %s34
      %p209 = scmp.eq.s32.totalorder %s208, 0
      %s211 = sadd.s32 %s210, 1
      %s212 = scalar_select %p209, %s210, %s211
      %p215 = pneg %p209
      %p216 = scmp.eq.s32.totalorder %s27, 1
      %p217 = por %p215, %p216
      %p218 = scmp.ne.s32.totalorder %s210, %s213
      %p219 = scmp.eq.s32.totalorder %s27, 0
      %p220 = por %p218, %p219
      %p221 = scmp.ne.s32.totalorder %s210, %s213
      %p222 = scmp.eq.s32.totalorder %s32, 1
      %p223 = por %p221, %p222
      %p224 = scmp.ne.s32.totalorder %s213, %s214
      %p225 = scmp.eq.s32.totalorder %s32, 0
      %p226 = por %p224, %p225
      %p227 = scmp.ne.s32.totalorder %s213, %s214
      %p228 = scmp.eq.s32.totalorder %s33, 1
      %p229 = por %p227, %p228
      %p231 = scmp.ne.s32.totalorder %s214, %s230
      %p232 = scmp.eq.s32.totalorder %s33, 0
      %p233 = por %p231, %p232
      %s234 = ssub.s32 %s27, %s34
      %p235 = scmp.eq.s32.totalorder %s234, 0
      %s237 = sadd.s32 %s236, 1
      %s238 = scalar_select %p235, %s236, %s237
      %p241 = pneg %p235
      %p242 = scmp.eq.s32.totalorder %s27, 1
      %p243 = por %p241, %p242
      %p244 = scmp.ne.s32.totalorder %s236, %s239
      %p245 = scmp.eq.s32.totalorder %s27, 0
      %p246 = por %p244, %p245
      %p247 = scmp.ne.s32.totalorder %s236, %s239
      %p248 = scmp.eq.s32.totalorder %s32, 1
      %p249 = por %p247, %p248
      %p250 = scmp.ne.s32.totalorder %s239, %s240
      %p251 = scmp.eq.s32.totalorder %s32, 0
      %p252 = por %p250, %p251
      %p253 = scmp.ne.s32.totalorder %s239, %s240
      %p254 = scmp.eq.s32.totalorder %s33, 1
      %p255 = por %p253, %p254
      %p257 = scmp.ne.s32.totalorder %s240, %s256
      %p258 = scmp.eq.s32.totalorder %s33, 0
      %p259 = por %p257, %p258
      %s260 = ssub.s32 %s27, %s34
      %p261 = scmp.eq.s32.totalorder %s260, 0
      %s263 = sadd.s32 %s262, 1
      %s264 = scalar_select %p261, %s262, %s263
      %p267 = pneg %p261
      %p268 = scmp.eq.s32.totalorder %s27, 1
      %p269 = por %p267, %p268
      %p270 = scmp.ne.s32.totalorder %s262, %s265
      %p271 = scmp.eq.s32.totalorder %s27, 0
      %p272 = por %p270, %p271
      %p273 = scmp.ne.s32.totalorder %s262, %s265
      %p274 = scmp.eq.s32.totalorder %s32, 1
      %p275 = por %p273, %p274
      %p276 = scmp.ne.s32.totalorder %s265, %s266
      %p277 = scmp.eq.s32.totalorder %s32, 0
      %p278 = por %p276, %p277
      %p279 = scmp.ne.s32.totalorder %s265, %s266
      %p280 = scmp.eq.s32.totalorder %s33, 1
      %p281 = por %p279, %p280
      %p283 = scmp.ne.s32.totalorder %s266, %s282
      %p284 = scmp.eq.s32.totalorder %s33, 0
      %p285 = por %p283, %p284
      %s286 = ssub.s32 %s27, %s34
      %p287 = scmp.eq.s32.totalorder %s286, 0
      %s289 = sadd.s32 %s288, 1
      %s290 = scalar_select %p287, %s288, %s289
      %p293 = pneg %p287
      %p294 = scmp.eq.s32.totalorder %s27, 1
      %p295 = por %p293, %p294
      %p296 = scmp.ne.s32.totalorder %s288, %s291
      %p297 = scmp.eq.s32.totalorder %s27, 0
      %p298 = por %p296, %p297
      %p299 = scmp.ne.s32.totalorder %s288, %s291
      %p300 = scmp.eq.s32.totalorder %s32, 1
      %p301 = por %p299, %p300
      %p302 = scmp.ne.s32.totalorder %s291, %s292
      %p303 = scmp.eq.s32.totalorder %s32, 0
      %p304 = por %p302, %p303
      %p305 = scmp.ne.s32.totalorder %s291, %s292
      %p306 = scmp.eq.s32.totalorder %s33, 1
      %p307 = por %p305, %p306
      %p309 = scmp.ne.s32.totalorder %s292, %s308
      %p310 = scmp.eq.s32.totalorder %s33, 0
      %p311 = por %p309, %p310
      %p312 = scmp.le.s32.totalorder 1, %s27
      %p313 = scmp.lt.s32.totalorder %s27, 3
      %p314 = pnand %p312, %p313
      %p315 = pneg %p314
      // Predicated region
      $region9: #{tpu_custom_call.1} parent=5 // pred_check
        _
      $region10: #{tpu_custom_call.1} parent=5 // pred_check_branch
        %317 = sbr.rel (%p314) target = $region12
      $region11: #{tpu_custom_call.1} parent=5 // pred_region
        %s318 = ssub.s32 %s27, 1
        // Predicated region
        $region13: #{tpu_custom_call.1} parent=11 // pred_check
          %p319 = pneg %p74
        $region14: #{tpu_custom_call.1} parent=11 // pred_check_branch
          %321 = sbr.rel (%p319) target = $region16
        $region15: #{tpu_custom_call.1} parent=11 // pred_region
          _
        $region16: #{tpu_custom_call.1} parent=11 // pred_fallthru
          _
        // Predicated region
        $region17: #{tpu_custom_call.1} parent=11 // pred_check
          %p322 = pneg %p95
        $region18: #{tpu_custom_call.1} parent=11 // pred_check_branch
          %324 = sbr.rel (%p322) target = $region20
        $region19: #{tpu_custom_call.1} parent=11 // pred_region
          _
        $region20: #{tpu_custom_call.1} parent=11 // pred_fallthru
          _
        // Predicated region
        $region21: #{tpu_custom_call.1} parent=11 // pred_check
          %p325 = pneg %p116
        $region22: #{tpu_custom_call.1} parent=11 // pred_check_branch
          %327 = sbr.rel (%p325) target = $region24
        $region23: #{tpu_custom_call.1} parent=11 // pred_region
          _
        $region24: #{tpu_custom_call.1} parent=11 // pred_fallthru
          _
        // Predicated region
        $region25: #{tpu_custom_call.1} parent=11 // pred_check
          %p328 = pneg %p137
        $region26: #{tpu_custom_call.1} parent=11 // pred_check_branch
          %330 = sbr.rel (%p328) target = $region28
        $region27: #{tpu_custom_call.1} parent=11 // pred_region
          _
        $region28: #{tpu_custom_call.1} parent=11 // pred_fallthru
          _
        // Predicated region
        $region29: #{tpu_custom_call.1} parent=11 // pred_check
          %p331 = pneg %p158
        $region30: #{tpu_custom_call.1} parent=11 // pred_check_branch
          %333 = sbr.rel (%p331) target = $region32
        $region31: #{tpu_custom_call.1} parent=11 // pred_region
          _
        $region32: #{tpu_custom_call.1} parent=11 // pred_fallthru
          _
        // Predicated region
        $region33: #{tpu_custom_call.1} parent=11 // pred_check
          %p334 = pneg %p179
        $region34: #{tpu_custom_call.1} parent=11 // pred_check_branch
          %336 = sbr.rel (%p334) target = $region36
        $region35: #{tpu_custom_call.1} parent=11 // pred_region
          _
        $region36: #{tpu_custom_call.1} parent=11 // pred_fallthru
          _
        // Predicated region
        $region37: #{tpu_custom_call.1} parent=11 // pred_check
          %p337 = pneg %p200
        $region38: #{tpu_custom_call.1} parent=11 // pred_check_branch
          %339 = sbr.rel (%p337) target = $region40
        $region39: #{tpu_custom_call.1} parent=11 // pred_region
          _
        $region40: #{tpu_custom_call.1} parent=11 // pred_fallthru
          _
      $region12: #{tpu_custom_call.1} parent=5 // pred_fallthru
        _
      %p340 = scmp.lt.s32.totalorder %s27, 2
      // Predicated region
      $region41: #{tpu_custom_call.1} parent=5 // pred_check
        %p341 = pneg %p340
      $region42: #{tpu_custom_call.1} parent=5 // pred_check_branch
        %343 = sbr.rel (%p341) target = $region44
      $region43: #{tpu_custom_call.1} parent=5 // pred_region
        // Predicated region
        $region45: #{tpu_custom_call.1} parent=43 // pred_check
          %p344 = pneg %p47
        $region46: #{tpu_custom_call.1} parent=43 // pred_check_branch
          %346 = sbr.rel (%p344) target = $region48
        $region47: #{tpu_custom_call.1} parent=43 // pred_region
          %p347 = scmp.lt.s32.totalorder %s27, 1
          %s348 = scalar_select %p347, %s27, 1
          %s349 = smul.addr %s348, 8
          %s350 = scalar_lea.vmem %s0, %s349
        $region48: #{tpu_custom_call.1} parent=43 // pred_fallthru
          _
      $region44: #{tpu_custom_call.1} parent=5 // pred_fallthru
        _
      %p351 = scmp.le.s32.totalorder 1, %s27
      %p352 = scmp.lt.s32.totalorder %s27, 3
      %p353 = pnand %p351, %p352
      %p354 = pneg %p353
      // Predicated region
      $region49: #{tpu_custom_call.1} parent=5 // pred_check
        _
      $region50: #{tpu_custom_call.1} parent=5 // pred_check_branch
        %356 = sbr.rel (%p353) target = $region52
      $region51: #{tpu_custom_call.1} parent=5 // pred_region
        %s357 = ssub.s32 %s27, 1
        %p358 = scmp.lt.s32.totalorder %s32, 1
        %s359 = scalar_select %p358, %s32, 1
        %s360 = smul.addr %s359, 8
        %s361 = scalar_lea.vmem %s0, %s360
        %p362 = pneg %p53
        %p363 = pneg %p50
        %p364 = pneg %p74
        %p365 = pneg %p71
        %p366 = pneg %p95
        %p367 = pneg %p92
        %p368 = pneg %p116
        %p369 = pneg %p113
        %p370 = pneg %p137
        %p371 = pneg %p134
        %p372 = pneg %p158
        %p373 = pneg %p155
        %p374 = pneg %p179
        %p375 = pneg %p176
        %p376 = pneg %p200
        %p377 = pneg %p197
        %p378 = pneg %p226
        %p379 = pneg %p223
        %s380 = sand.u32 %s213, 1
        %s381 = scalar_lea.sflag [#allocation3], %s380
        %s382 = sand.u32 %s213, 1
        %s383 = smul.addr %s382, 8
        %s384 = scalar_lea.vmem [#allocation2], %s383
        %p385 = pneg %p252
        %p386 = pneg %p249
        %s387 = sand.u32 %s32, 1
        %s388 = scalar_lea.sflag [#allocation5], %s387
        %s389 = sand.u32 %s239, 1
        %s390 = smul.addr %s389, 8
        %s391 = scalar_lea.vmem [#allocation4], %s390
        %p392 = pneg %p278
        %p393 = pneg %p275
        %s394 = sand.u32 %s32, 1
        %s395 = scalar_lea.sflag [#allocation5], %s394
        %s396 = sand.u32 %s265, 1
        %s397 = smul.addr %s396, 8
        %s398 = scalar_lea.vmem [#allocation6], %s397
        %p399 = pneg %p304
        %p400 = pneg %p301
        %s401 = sand.u32 %s291, 1
        %s402 = scalar_lea.sflag [#allocation8], %s401
        %s403 = sand.u32 %s291, 1
        %s404 = smul.addr %s403, 8
        %s405 = scalar_lea.vmem [#allocation7], %s404
        %p406 = scmp.lt.s32.totalorder %s32, 1
        %s407 = scalar_select %p406, %s32, 1
        %s408 = smul.addr %s407, 8
        %s409 = scalar_lea.vmem %s0, %s408
        %v411 = vld [vmem:[%s409] sm:$0xff]
        %v412 = vld [vmem:[%s1] sm:$0xff]
        %v413 = vld [vmem:[%s1 + $0x8] sm:$0xff]
        %v414 = vld [vmem:[%s1 + $0x10] sm:$0xff]
        %v415 = vld [vmem:[%s1 + $0x18] sm:$0xff]
        %v416 = vld [vmem:[%s2] sm:$0x1]
        %v418 = vlaneseq
        %v419 = vshrl.u32 %v418, 7
        %v420 = vsub.s32 0, %v419
        %v421 = vrot.slane %v416, %v420
        %vm423 = vcmask 261120
        %v425 = vsel %vm423, %v411, 0
        %427 = vmatprep.subr.mxu0 0.0
        %428 = vmatpush1.msra.mxu0 %v412
        %429 = vmatprep.subr.mxu0 0.0
        %430 = vmatpush1.msra.mxu0 %v413
        %431 = vmatprep.subr.mxu0 0.0
        %432 = vmatpush1.msra.mxu0 %v414
        %433 = vmatprep.subr.mxu0 0.0
        %434 = vmatpush1.msra.mxu0 %v415
        %435 = vmatprep.subr.mxu0 0.0
        %436 = vmatpush1.msra.mxu0 0.0
        %437 = vmatprep.subr.mxu0 0.0
        %438 = vmatpush1.msra.mxu0 0.0
        %439 = vmatprep.subr.mxu0 0.0
        %440 = vmatpush1.msra.mxu0 0.0
        %441 = vmatprep.subr.mxu0 0.0
        %442 = vmatpush1.msra.mxu0 0.0
        %443 = vmatprep.subr.mxu0 0.0
        %444 = vmatpush1.msra.mxu0 0.0
        %445 = vmatprep.subr.mxu0 0.0
        %446 = vmatpush1.msra.mxu0 0.0
        %447 = vmatprep.subr.mxu0 0.0
        %448 = vmatpush1.msra.mxu0 0.0
        %449 = vmatprep.subr.mxu0 0.0
        %450 = vmatpush1.msra.mxu0 0.0
        %451 = vmatprep.subr.mxu0 0.0
        %452 = vmatpush1.msra.mxu0 0.0
        %453 = vmatprep.subr.mxu0 0.0
        %454 = vmatpush1.msra.mxu0 0.0
        %455 = vmatprep.subr.mxu0 0.0
        %456 = vmatpush1.msra.mxu0 0.0
        %457 = vmatprep.subr.mxu0 0.0
        %458 = vmatpush1.msra.mxu0 0.0
        %459 = vmatprep.subr.mxu0 0.0
        %460 = vmatpush1.msra.mxu0 0.0
        %461 = vmatprep.subr.mxu0 0.0
        %462 = vmatpush1.msra.mxu0 0.0
        %463 = vmatprep.subr.mxu0 0.0
        %464 = vmatpush1.msra.mxu0 0.0
        %465 = vmatprep.subr.mxu0 0.0
        %466 = vmatpush1.msra.mxu0 0.0
        %467 = vmatprep.subr.mxu0 0.0
        %468 = vmatpush1.msra.mxu0 0.0
        %469 = vmatprep.subr.mxu0 0.0
        %470 = vmatpush1.msra.mxu0 0.0
        %471 = vmatprep.subr.mxu0 0.0
        %472 = vmatpush1.msra.mxu0 0.0
        %473 = vmatprep.subr.mxu0 0.0
        %474 = vmatpush1.msra.mxu0 0.0
        %475 = vmatprep.subr.mxu0 0.0
        %476 = vmatpush1.msra.mxu0 0.0
        %477 = vmatprep.subr.mxu0 0.0
        %478 = vmatpush1.msra.mxu0 0.0
        %479 = vmatprep.subr.mxu0 0.0
        %480 = vmatpush1.msra.mxu0 0.0
        %481 = vmatprep.subr.mxu0 0.0
        %482 = vmatpush1.msra.mxu0 0.0
        %483 = vmatprep.subr.mxu0 0.0
        %484 = vmatpush1.msra.mxu0 0.0
        %485 = vmatprep.subr.mxu0 0.0
        %486 = vmatpush1.msra.mxu0 0.0
        %487 = vmatprep.subr.mxu0 0.0
        %488 = vmatpush1.msra.mxu0 0.0
        %489 = vmatprep.subr.mxu0 0.0
        %490 = vmatpush1.msra.mxu0 0.0
        %491 = vmatprep.mubr.f32.mxu0 0.0
        %492 = vmatmul.mubr.f32.gmra.mrb[0].mxu0 %v425
        %v493 = vpop.f32.mrb[0].mxu0
        %v494 = vadd.f32 %v421, %v493
        %v495 = vpop.f32.mrb[0].mxu0
        %496 = vdwg.mxu0
        %vm497 = vcmask 130048
        %498 = vst.msk [vmem:[%s391] sm:$0xff] %vm497, %v494
        %v499 = vld [vmem:[%s3] sm:$0xff]
        %v500 = vld [vmem:[%s3 + $0x8] sm:$0xff]
        %v501 = vld [vmem:[%s4] sm:$0x1]
        %v503 = vlaneseq
        %v504 = vshrl.u32 %v503, 7
        %v505 = vsub.s32 0, %v504
        %v506 = vrot.slane %v501, %v505
        %v509 = vsel %vm497, %v494, 0
        %511 = vmatprep.subr.mxu0 0.0
        %512 = vmatpush1.msra.mxu0 %v499
        %513 = vmatprep.subr.mxu0 0.0
        %514 = vmatpush1.msra.mxu0 %v500
        %515 = vmatprep.subr.mxu0 0.0
        %516 = vmatpush1.msra.mxu0 0.0
        %517 = vmatprep.subr.mxu0 0.0
        %518 = vmatpush1.msra.mxu0 0.0
        %519 = vmatprep.subr.mxu0 0.0
        %520 = vmatpush1.msra.mxu0 0.0
        %521 = vmatprep.subr.mxu0 0.0
        %522 = vmatpush1.msra.mxu0 0.0
        %523 = vmatprep.subr.mxu0 0.0
        %524 = vmatpush1.msra.mxu0 0.0
        %525 = vmatprep.subr.mxu0 0.0
        %526 = vmatpush1.msra.mxu0 0.0
        %527 = vmatprep.subr.mxu0 0.0
        %528 = vmatpush1.msra.mxu0 0.0
        %529 = vmatprep.subr.mxu0 0.0
        %530 = vmatpush1.msra.mxu0 0.0
        %531 = vmatprep.subr.mxu0 0.0
        %532 = vmatpush1.msra.mxu0 0.0
        %533 = vmatprep.subr.mxu0 0.0
        %534 = vmatpush1.msra.mxu0 0.0
        %535 = vmatprep.subr.mxu0 0.0
        %536 = vmatpush1.msra.mxu0 0.0
        %537 = vmatprep.subr.mxu0 0.0
        %538 = vmatpush1.msra.mxu0 0.0
        %539 = vmatprep.subr.mxu0 0.0
        %540 = vmatpush1.msra.mxu0 0.0
        %541 = vmatprep.subr.mxu0 0.0
        %542 = vmatpush1.msra.mxu0 0.0
        %543 = vmatprep.subr.mxu0 0.0
        %544 = vmatpush1.msra.mxu0 0.0
        %545 = vmatprep.subr.mxu0 0.0
        %546 = vmatpush1.msra.mxu0 0.0
        %547 = vmatprep.subr.mxu0 0.0
        %548 = vmatpush1.msra.mxu0 0.0
        %549 = vmatprep.subr.mxu0 0.0
        %550 = vmatpush1.msra.mxu0 0.0
        %551 = vmatprep.subr.mxu0 0.0
        %552 = vmatpush1.msra.mxu0 0.0
        %553 = vmatprep.subr.mxu0 0.0
        %554 = vmatpush1.msra.mxu0 0.0
        %555 = vmatprep.subr.mxu0 0.0
        %556 = vmatpush1.msra.mxu0 0.0
        %557 = vmatprep.subr.mxu0 0.0
        %558 = vmatpush1.msra.mxu0 0.0
        %559 = vmatprep.subr.mxu0 0.0
        %560 = vmatpush1.msra.mxu0 0.0
        %561 = vmatprep.subr.mxu0 0.0
        %562 = vmatpush1.msra.mxu0 0.0
        %563 = vmatprep.subr.mxu0 0.0
        %564 = vmatpush1.msra.mxu0 0.0
        %565 = vmatprep.subr.mxu0 0.0
        %566 = vmatpush1.msra.mxu0 0.0
        %567 = vmatprep.subr.mxu0 0.0
        %568 = vmatpush1.msra.mxu0 0.0
        %569 = vmatprep.subr.mxu0 0.0
        %570 = vmatpush1.msra.mxu0 0.0
        %571 = vmatprep.subr.mxu0 0.0
        %572 = vmatpush1.msra.mxu0 0.0
        %573 = vmatprep.subr.mxu0 0.0
        %574 = vmatpush1.msra.mxu0 0.0
        %575 = vmatprep.mubr.f32.mxu0 0.0
        %576 = vmatmul.mubr.f32.gmra.mrb[0].mxu0 %v509
        %v577 = vpop.f32.mrb[0].mxu0
        %v578 = vadd.f32 %v506, %v577
        %v579 = vpop.f32.mrb[0].mxu0
        %580 = vdwg.mxu0
        %vm581 = vcmask 523264
        %582 = vst.msk [vmem:[%s384] sm:$0xff] %vm581, %v578
        %584 = vrot.lane.b32.xlu0 %v578, 120
        %v585 = vpop.permute.xlu0 %584
        %587 = vrot.lane.b32.xlu0 %v578, 112
        %v588 = vpop.permute.xlu0 %587
        %590 = vrot.lane.b32.xlu0 %v578, 104
        %v591 = vpop.permute.xlu0 %590
        %593 = vrot.lane.b32.xlu0 %v578, 96
        %v594 = vpop.permute.xlu0 %593
        %596 = vrot.lane.b32.xlu0 %v578, 88
        %v597 = vpop.permute.xlu0 %596
        %599 = vrot.lane.b32.xlu0 %v578, 80
        %v600 = vpop.permute.xlu0 %599
        %602 = vrot.lane.b32.xlu0 %v578, 72
        %v603 = vpop.permute.xlu0 %602
        %v605 = vcombine.low %v578, %v588
        %v606 = vcombine.high %v578, %v588
        %v608 = vunpack.c.l.s4 1983009808
        %v609 = vunpack.c.0.s8 %v608
        %v610 = vlaneseq
        %v611 = vshrl.u32 %v610, 7
        %v612 = vsub.s32 %v609, %v611
        %v613 = vrot.slane %v605, %v612
        %v615 = vunpack.c.l.s4 1983009808
        %v616 = vunpack.c.0.s8 %v615
        %v617 = vlaneseq
        %v618 = vshrl.u32 %v617, 7
        %v619 = vsub.s32 %v616, %v618
        %v620 = vrot.slane %v606, %v619
        %v621 = vcombine.low %v585, %v591
        %v622 = vcombine.high %v585, %v591
        %v624 = vunpack.c.l.s4 1983009808
        %v625 = vunpack.c.0.s8 %v624
        %v626 = vlaneseq
        %v627 = vshrl.u32 %v626, 7
        %v628 = vsub.s32 %v625, %v627
        %v629 = vrot.slane %v621, %v628
        %v631 = vunpack.c.l.s4 1983009808
        %v632 = vunpack.c.0.s8 %v631
        %v633 = vlaneseq
        %v634 = vshrl.u32 %v633, 7
        %v635 = vsub.s32 %v632, %v634
        %v636 = vrot.slane %v622, %v635
        %v637 = vcombine.low %v594, %v600
        %v638 = vcombine.high %v594, %v600
        %v640 = vunpack.c.l.s4 1983009808
        %v641 = vunpack.c.0.s8 %v640
        %v642 = vlaneseq
        %v643 = vshrl.u32 %v642, 7
        %v644 = vsub.s32 %v641, %v643
        %v645 = vrot.slane %v637, %v644
        %v647 = vunpack.c.l.s4 1983009808
        %v648 = vunpack.c.0.s8 %v647
        %v649 = vlaneseq
        %v650 = vshrl.u32 %v649, 7
        %v651 = vsub.s32 %v648, %v650
        %v652 = vrot.slane %v638, %v651
        %v653 = vcombine.low %v597, %v603
        %v654 = vcombine.high %v597, %v603
        %v656 = vunpack.c.l.s4 1983009808
        %v657 = vunpack.c.0.s8 %v656
        %v658 = vlaneseq
        %v659 = vshrl.u32 %v658, 7
        %v660 = vsub.s32 %v657, %v659
        %v661 = vrot.slane %v653, %v660
        %v663 = vunpack.c.l.s4 1983009808
        %v664 = vunpack.c.0.s8 %v663
        %v665 = vlaneseq
        %v666 = vshrl.u32 %v665, 7
        %v667 = vsub.s32 %v664, %v666
        %v668 = vrot.slane %v654, %v667
        %v669 = vcombine.low %v613, %v629
        %v670 = vcombine.high %v613, %v629
        %v672 = vunpack.c.l.s4 1934713408
        %v673 = vunpack.c.0.s8 %v672
        %v674 = vlaneseq
        %v675 = vshrl.u32 %v674, 7
        %v676 = vsub.s32 %v673, %v675
        %v677 = vrot.slane %v669, %v676
        %v679 = vunpack.c.l.s4 1934713408
        %v680 = vunpack.c.0.s8 %v679
        %v681 = vlaneseq
        %v682 = vshrl.u32 %v681, 7
        %v683 = vsub.s32 %v680, %v682
        %v684 = vrot.slane %v670, %v683
        %v685 = vcombine.low %v620, %v636
        %v686 = vcombine.high %v620, %v636
        %v688 = vunpack.c.l.s4 1934713408
        %v689 = vunpack.c.0.s8 %v688
        %v690 = vlaneseq
        %v691 = vshrl.u32 %v690, 7
        %v692 = vsub.s32 %v689, %v691
        %v693 = vrot.slane %v685, %v692
        %v695 = vunpack.c.l.s4 1934713408
        %v696 = vunpack.c.0.s8 %v695
        %v697 = vlaneseq
        %v698 = vshrl.u32 %v697, 7
        %v699 = vsub.s32 %v696, %v698
        %v700 = vrot.slane %v686, %v699
        %v701 = vcombine.low %v645, %v661
        %v702 = vcombine.high %v645, %v661
        %v704 = vunpack.c.l.s4 1934713408
        %v705 = vunpack.c.0.s8 %v704
        %v706 = vlaneseq
        %v707 = vshrl.u32 %v706, 7
        %v708 = vsub.s32 %v705, %v707
        %v709 = vrot.slane %v701, %v708
        %v711 = vunpack.c.l.s4 1934713408
        %v712 = vunpack.c.0.s8 %v711
        %v713 = vlaneseq
        %v714 = vshrl.u32 %v713, 7
        %v715 = vsub.s32 %v712, %v714
        %v716 = vrot.slane %v702, %v715
        %v717 = vcombine.low %v652, %v668
        %v718 = vcombine.high %v652, %v668
        %v720 = vunpack.c.l.s4 1934713408
        %v721 = vunpack.c.0.s8 %v720
        %v722 = vlaneseq
        %v723 = vshrl.u32 %v722, 7
        %v724 = vsub.s32 %v721, %v723
        %v725 = vrot.slane %v717, %v724
        %v727 = vunpack.c.l.s4 1934713408
        %v728 = vunpack.c.0.s8 %v727
        %v729 = vlaneseq
        %v730 = vshrl.u32 %v729, 7
        %v731 = vsub.s32 %v728, %v730
        %v732 = vrot.slane %v718, %v731
        %v733 = vcombine.low %v677, %v709
        %v734 = vcombine.high %v677, %v709
        %v735 = vcombine.low %v684, %v716
        %v736 = vcombine.high %v684, %v716
        %v737 = vcombine.low %v693, %v725
        %v738 = vcombine.high %v693, %v725
        %v739 = vcombine.low %v700, %v732
        %v740 = vcombine.high %v700, %v732
        %v741 = vcombine.low %v733, %v735
        %v742 = vcombine.high %v733, %v735
        %v744 = vunpack.c.l.s4 1983009808
        %v745 = vunpack.c.0.s8 %v744
        %v746 = vlaneseq
        %v747 = vshrl.u32 %v746, 7
        %v748 = vsub.s32 %v745, %v747
        %v749 = vrot.slane %v741, %v748
        %v751 = vunpack.c.l.s4 1983009808
        %v752 = vunpack.c.0.s8 %v751
        %v753 = vlaneseq
        %v754 = vshrl.u32 %v753, 7
        %v755 = vsub.s32 %v752, %v754
        %v756 = vrot.slane %v742, %v755
        %v757 = vcombine.low %v734, %v736
        %v758 = vcombine.high %v734, %v736
        %v760 = vunpack.c.l.s4 1983009808
        %v761 = vunpack.c.0.s8 %v760
        %v762 = vlaneseq
        %v763 = vshrl.u32 %v762, 7
        %v764 = vsub.s32 %v761, %v763
        %v765 = vrot.slane %v757, %v764
        %v767 = vunpack.c.l.s4 1983009808
        %v768 = vunpack.c.0.s8 %v767
        %v769 = vlaneseq
        %v770 = vshrl.u32 %v769, 7
        %v771 = vsub.s32 %v768, %v770
        %v772 = vrot.slane %v758, %v771
        %v773 = vcombine.low %v737, %v739
        %v774 = vcombine.high %v737, %v739
        %v776 = vunpack.c.l.s4 1983009808
        %v777 = vunpack.c.0.s8 %v776
        %v778 = vlaneseq
        %v779 = vshrl.u32 %v778, 7
        %v780 = vsub.s32 %v777, %v779
        %v781 = vrot.slane %v773, %v780
        %v783 = vunpack.c.l.s4 1983009808
        %v784 = vunpack.c.0.s8 %v783
        %v785 = vlaneseq
        %v786 = vshrl.u32 %v785, 7
        %v787 = vsub.s32 %v784, %v786
        %v788 = vrot.slane %v774, %v787
        %v789 = vcombine.low %v738, %v740
        %v790 = vcombine.high %v738, %v740
        %v792 = vunpack.c.l.s4 1983009808
        %v793 = vunpack.c.0.s8 %v792
        %v794 = vlaneseq
        %v795 = vshrl.u32 %v794, 7
        %v796 = vsub.s32 %v793, %v795
        %v797 = vrot.slane %v789, %v796
        %v799 = vunpack.c.l.s4 1983009808
        %v800 = vunpack.c.0.s8 %v799
        %v801 = vlaneseq
        %v802 = vshrl.u32 %v801, 7
        %v803 = vsub.s32 %v800, %v802
        %v804 = vrot.slane %v790, %v803
        %v805 = vcombine.low %v749, %v765
        %v806 = vcombine.high %v749, %v765
        %v808 = vunpack.c.l.s4 1934713408
        %v809 = vunpack.c.0.s8 %v808
        %v810 = vlaneseq
        %v811 = vshrl.u32 %v810, 7
        %v812 = vsub.s32 %v809, %v811
        %v813 = vrot.slane %v805, %v812
        %v815 = vunpack.c.l.s4 1934713408
        %v816 = vunpack.c.0.s8 %v815
        %v817 = vlaneseq
        %v818 = vshrl.u32 %v817, 7
        %v819 = vsub.s32 %v816, %v818
        %v820 = vrot.slane %v806, %v819
        %v821 = vcombine.low %v756, %v772
        %v822 = vcombine.high %v756, %v772
        %v824 = vunpack.c.l.s4 1934713408
        %v825 = vunpack.c.0.s8 %v824
        %v826 = vlaneseq
        %v827 = vshrl.u32 %v826, 7
        %v828 = vsub.s32 %v825, %v827
        %v829 = vrot.slane %v821, %v828
        %v831 = vunpack.c.l.s4 1934713408
        %v832 = vunpack.c.0.s8 %v831
        %v833 = vlaneseq
        %v834 = vshrl.u32 %v833, 7
        %v835 = vsub.s32 %v832, %v834
        %v836 = vrot.slane %v822, %v835
        %v837 = vcombine.low %v781, %v797
        %v838 = vcombine.high %v781, %v797
        %v840 = vunpack.c.l.s4 1934713408
        %v841 = vunpack.c.0.s8 %v840
        %v842 = vlaneseq
        %v843 = vshrl.u32 %v842, 7
        %v844 = vsub.s32 %v841, %v843
        %v845 = vrot.slane %v837, %v844
        %v847 = vunpack.c.l.s4 1934713408
        %v848 = vunpack.c.0.s8 %v847
        %v849 = vlaneseq
        %v850 = vshrl.u32 %v849, 7
        %v851 = vsub.s32 %v848, %v850
        %v852 = vrot.slane %v838, %v851
        %v853 = vcombine.low %v788, %v804
        %v854 = vcombine.high %v788, %v804
        %v856 = vunpack.c.l.s4 1934713408
        %v857 = vunpack.c.0.s8 %v856
        %v858 = vlaneseq
        %v859 = vshrl.u32 %v858, 7
        %v860 = vsub.s32 %v857, %v859
        %v861 = vrot.slane %v853, %v860
        %v863 = vunpack.c.l.s4 1934713408
        %v864 = vunpack.c.0.s8 %v863
        %v865 = vlaneseq
        %v866 = vshrl.u32 %v865, 7
        %v867 = vsub.s32 %v864, %v866
        %v868 = vrot.slane %v854, %v867
        %v869 = vcombine.low %v813, %v845
        %v870 = vcombine.high %v813, %v845
        %v871 = vcombine.low %v820, %v852
        %v872 = vcombine.high %v820, %v852
        %v873 = vcombine.low %v829, %v861
        %v874 = vcombine.high %v829, %v861
        %v875 = vcombine.low %v836, %v868
        %v876 = vcombine.high %v836, %v868
        %v877 = vpack.c.bf16 %v869, %v869
        %v878 = vpack.c.bf16 %v870, %v870
        %v879 = vpack.c.bf16 %v871, %v871
        %v880 = vpack.c.bf16 %v872, %v872
        %v881 = vpack.c.bf16 %v873, %v873
        %v882 = vpack.c.bf16 %v874, %v874
        %v883 = vpack.c.bf16 %v875, %v875
        %v884 = vpack.c.bf16 %v876, %v876
        %v885 = vld [vmem:[%s5] sm:$0xf]
        %v886 = vld [vmem:[%s5 + $0x4] sm:$0xf]
        %v887 = vld [vmem:[%s5 + $0x8] sm:$0xf]
        %v888 = vld [vmem:[%s5 + $0xc] sm:$0xf]
        %v889 = vld [vmem:[%s5 + $0x10] sm:$0xf]
        %v890 = vld [vmem:[%s5 + $0x14] sm:$0xf]
        %v891 = vld [vmem:[%s5 + $0x18] sm:$0xf]
        %v892 = vld [vmem:[%s5 + $0x1c] sm:$0xf]
        %v893 = vld [vmem:[%s5 + $0x20] sm:$0xf]
        %v894 = vld [vmem:[%s5 + $0x24] sm:$0xf]
        %v895 = vld [vmem:[%s5 + $0x28] sm:$0xf]
        %v896 = vld [vmem:[%s5 + $0x2c] sm:$0xf]
        %v897 = vld [vmem:[%s5 + $0x30] sm:$0xf]
        %v898 = vld [vmem:[%s5 + $0x34] sm:$0xf]
        %v899 = vld [vmem:[%s5 + $0x38] sm:$0xf]
        %v900 = vld [vmem:[%s5 + $0x3c] sm:$0xf]
        %v903 = vunpack.c.l.b16 %v885
        %v904 = vunpack.c.l.b16 %v886
        %v905 = vpack.c.b16 %v904, %v903
        %vm906 = vcmask 64512
        %v908 = vsel %vm906, %v877, 0
        %v911 = vsel %vm906, %v905, 0
        %913 = vmatprep.subr.bf16.mxu0 0
        %914 = vmatpush1.bf16.xpose.msra.mxu0 %v911
        %915 = vmatprep.subr.bf16.mxu0 0
        %916 = vmatpush1.bf16.xpose.msra.mxu0 0
        %917 = vmatprep.subr.bf16.mxu0 0
        %918 = vmatpush1.bf16.xpose.msra.mxu0 0
        %919 = vmatprep.subr.bf16.mxu0 0
        %920 = vmatpush1.bf16.xpose.msra.mxu0 0
        %921 = vmatprep.subr.bf16.mxu0 0
        %922 = vmatpush1.bf16.xpose.msra.mxu0 0
        %923 = vmatprep.subr.bf16.mxu0 0
        %924 = vmatpush1.bf16.xpose.msra.mxu0 0
        %925 = vmatprep.subr.bf16.mxu0 0
        %926 = vmatpush1.bf16.xpose.msra.mxu0 0
        %927 = vmatprep.subr.bf16.mxu0 0
        %928 = vmatpush1.bf16.xpose.msra.mxu0 0
        %929 = vmatprep.subr.bf16.mxu0 0
        %930 = vmatpush1.bf16.xpose.msra.mxu0 0
        %931 = vmatprep.subr.bf16.mxu0 0
        %932 = vmatpush1.bf16.xpose.msra.mxu0 0
        %933 = vmatprep.subr.bf16.mxu0 0
        %934 = vmatpush1.bf16.xpose.msra.mxu0 0
        %935 = vmatprep.subr.bf16.mxu0 0
        %936 = vmatpush1.bf16.xpose.msra.mxu0 0
        %937 = vmatprep.subr.bf16.mxu0 0
        %938 = vmatpush1.bf16.xpose.msra.mxu0 0
        %939 = vmatprep.subr.bf16.mxu0 0
        %940 = vmatpush1.bf16.xpose.msra.mxu0 0
        %941 = vmatprep.subr.bf16.mxu0 0
        %942 = vmatpush1.bf16.xpose.msra.mxu0 0
        %943 = vmatprep.subr.bf16.mxu0 0
        %944 = vmatpush1.bf16.xpose.msra.mxu0 0
        %945 = vmatprep.mubr.bf16.mxu0 0
        %946 = vmatmul.mubr.bf16.gmra.mrb[0].mxu0 %v908
        %v947 = vpop.f32.mrb[0].mxu0
        %v948 = vadd.f32 0.0, %v947
        %v949 = vpop.f32.mrb[0].mxu0
        %v950 = vpop.f32.mrb[0].mxu0
        %v951 = vpop.f32.mrb[0].mxu0
        %952 = vdwg.mxu0
        %v955 = vunpack.c.l.b16 %v887
        %v956 = vunpack.c.l.b16 %v888
        %v957 = vpack.c.b16 %v956, %v955
        %v959 = vsel %vm906, %v878, 0
        %v962 = vsel %vm906, %v957, 0
        %964 = vmatprep.subr.bf16.mxu0 0
        %965 = vmatpush1.bf16.xpose.msra.mxu0 %v962
        %966 = vmatprep.subr.bf16.mxu0 0
        %967 = vmatpush1.bf16.xpose.msra.mxu0 0
        %968 = vmatprep.subr.bf16.mxu0 0
        %969 = vmatpush1.bf16.xpose.msra.mxu0 0
        %970 = vmatprep.subr.bf16.mxu0 0
        %971 = vmatpush1.bf16.xpose.msra.mxu0 0
        %972 = vmatprep.subr.bf16.mxu0 0
        %973 = vmatpush1.bf16.xpose.msra.mxu0 0
        %974 = vmatprep.subr.bf16.mxu0 0
        %975 = vmatpush1.bf16.xpose.msra.mxu0 0
        %976 = vmatprep.subr.bf16.mxu0 0
        %977 = vmatpush1.bf16.xpose.msra.mxu0 0
        %978 = vmatprep.subr.bf16.mxu0 0
        %979 = vmatpush1.bf16.xpose.msra.mxu0 0
        %980 = vmatprep.subr.bf16.mxu0 0
        %981 = vmatpush1.bf16.xpose.msra.mxu0 0
        %982 = vmatprep.subr.bf16.mxu0 0
        %983 = vmatpush1.bf16.xpose.msra.mxu0 0
        %984 = vmatprep.subr.bf16.mxu0 0
        %985 = vmatpush1.bf16.xpose.msra.mxu0 0
        %986 = vmatprep.subr.bf16.mxu0 0
        %987 = vmatpush1.bf16.xpose.msra.mxu0 0
        %988 = vmatprep.subr.bf16.mxu0 0
        %989 = vmatpush1.bf16.xpose.msra.mxu0 0
        %990 = vmatprep.subr.bf16.mxu0 0
        %991 = vmatpush1.bf16.xpose.msra.mxu0 0
        %992 = vmatprep.subr.bf16.mxu0 0
        %993 = vmatpush1.bf16.xpose.msra.mxu0 0
        %994 = vmatprep.subr.bf16.mxu0 0
        %995 = vmatpush1.bf16.xpose.msra.mxu0 0
        %996 = vmatprep.mubr.bf16.mxu0 0
        %997 = vmatmul.mubr.bf16.gmra.mrb[0].mxu0 %v959
        %v998 = vpop.f32.mrb[0].mxu0
        %v999 = vadd.f32 0.0, %v998
        %v1000 = vpop.f32.mrb[0].mxu0
        %v1001 = vpop.f32.mrb[0].mxu0
        %v1002 = vpop.f32.mrb[0].mxu0
        %1003 = vdwg.mxu0
        %v1006 = vunpack.c.l.b16 %v889
        %v1007 = vunpack.c.l.b16 %v890
        %v1008 = vpack.c.b16 %v1007, %v1006
        %v1010 = vsel %vm906, %v879, 0
        %v1013 = vsel %vm906, %v1008, 0
        %1015 = vmatprep.subr.bf16.mxu0 0
        %1016 = vmatpush1.bf16.xpose.msra.mxu0 %v1013
        %1017 = vmatprep.subr.bf16.mxu0 0
        %1018 = vmatpush1.bf16.xpose.msra.mxu0 0
        %1019 = vmatprep.subr.bf16.mxu0 0
        %1020 = vmatpush1.bf16.xpose.msra.mxu0 0
        %1021 = vmatprep.subr.bf16.mxu0 0
        %1022 = vmatpush1.bf16.xpose.msra.mxu0 0
        %1023 = vmatprep.subr.bf16.mxu0 0
        %1024 = vmatpush1.bf16.xpose.msra.mxu0 0
        %1025 = vmatprep.subr.bf16.mxu0 0
        %1026 = vmatpush1.bf16.xpose.msra.mxu0 0
        %1027 = vmatprep.subr.bf16.mxu0 0
        %1028 = vmatpush1.bf16.xpose.msra.mxu0 0
        %1029 = vmatprep.subr.bf16.mxu0 0
        %1030 = vmatpush1.bf16.xpose.msra.mxu0 0
        %1031 = vmatprep.subr.bf16.mxu0 0
        %1032 = vmatpush1.bf16.xpose.msra.mxu0 0
        %1033 = vmatprep.subr.bf16.mxu0 0
        %1034 = vmatpush1.bf16.xpose.msra.mxu0 0
        %1035 = vmatprep.subr.bf16.mxu0 0
        %1036 = vmatpush1.bf16.xpose.msra.mxu0 0
        %1037 = vmatprep.subr.bf16.mxu0 0
        %1038 = vmatpush1.bf16.xpose.msra.mxu0 0
        %1039 = vmatprep.subr.bf16.mxu0 0
        %1040 = vmatpush1.bf16.xpose.msra.mxu0 0
        %1041 = vmatprep.subr.bf16.mxu0 0
        %1042 = vmatpush1.bf16.xpose.msra.mxu0 0
        %1043 = vmatprep.subr.bf16.mxu0 0
        %1044 = vmatpush1.bf16.xpose.msra.mxu0 0
        %1045 = vmatprep.subr.bf16.mxu0 0
        %1046 = vmatpush1.bf16.xpose.msra.mxu0 0
        %1047 = vmatprep.mubr.bf16.mxu0 0
        %1048 = vmatmul.mubr.bf16.gmra.mrb[0].mxu0 %v1010
        %v1049 = vpop.f32.mrb[0].mxu0
        %v1050 = vadd.f32 0.0, %v1049
        %v1051 = vpop.f32.mrb[0].mxu0
        %v1052 = vpop.f32.mrb[0].mxu0
        %v1053 = vpop.f32.mrb[0].mxu0
        %1054 = vdwg.mxu0
        %v1057 = vunpack.c.l.b16 %v891
        %v1058 = vunpack.c.l.b16 %v892
        %v1059 = vpack.c.b16 %v1058, %v1057
        %v1061 = vsel %vm906, %v880, 0
        %v1064 = vsel %vm906, %v1059, 0
        %1066 = vmatprep.subr.bf16.mxu0 0
        %1067 = vmatpush1.bf16.xpose.msra.mxu0 %v1064
        %1068 = vmatprep.subr.bf16.mxu0 0
        %1069 = vmatpush1.bf16.xpose.msra.mxu0 0
        %1070 = vmatprep.subr.bf16.mxu0 0
        %1071 = vmatpush1.bf16.xpose.msra.mxu0 0
        %1072 = vmatprep.subr.bf16.mxu0 0
        %1073 = vmatpush1.bf16.xpose.msra.mxu0 0
        %1074 = vmatprep.subr.bf16.mxu0 0
        %1075 = vmatpush1.bf16.xpose.msra.mxu0 0
        %1076 = vmatprep.subr.bf16.mxu0 0
        %1077 = vmatpush1.bf16.xpose.msra.mxu0 0
        %1078 = vmatprep.subr.bf16.mxu0 0
        %1079 = vmatpush1.bf16.xpose.msra.mxu0 0
        %1080 = vmatprep.subr.bf16.mxu0 0
        %1081 = vmatpush1.bf16.xpose.msra.mxu0 0
        %1082 = vmatprep.subr.bf16.mxu0 0
        %1083 = vmatpush1.bf16.xpose.msra.mxu0 0
        %1084 = vmatprep.subr.bf16.mxu0 0
        %1085 = vmatpush1.bf16.xpose.msra.mxu0 0
        %1086 = vmatprep.subr.bf16.mxu0 0
        %1087 = vmatpush1.bf16.xpose.msra.mxu0 0
        %1088 = vmatprep.subr.bf16.mxu0 0
        %1089 = vmatpush1.bf16.xpose.msra.mxu0 0
        %1090 = vmatprep.subr.bf16.mxu0 0
        %1091 = vmatpush1.bf16.xpose.msra.mxu0 0
        %1092 = vmatprep.subr.bf16.mxu0 0
        %1093 = vmatpush1.bf16.xpose.msra.mxu0 0
        %1094 = vmatprep.subr.bf16.mxu0 0
        %1095 = vmatpush1.bf16.xpose.msra.mxu0 0
        %1096 = vmatprep.subr.bf16.mxu0 0
        %1097 = vmatpush1.bf16.xpose.msra.mxu0 0
        %1098 = vmatprep.mubr.bf16.mxu0 0
        %1099 = vmatmul.mubr.bf16.gmra.mrb[0].mxu0 %v1061
        %v1100 = vpop.f32.mrb[0].mxu0
        %v1101 = vadd.f32 0.0, %v1100
        %v1102 = vpop.f32.mrb[0].mxu0
        %v1103 = vpop.f32.mrb[0].mxu0
        %v1104 = vpop.f32.mrb[0].mxu0
        %1105 = vdwg.mxu0
        %v1108 = vunpack.c.l.b16 %v893
        %v1109 = vunpack.c.l.b16 %v894
        %v1110 = vpack.c.b16 %v1109, %v1108
        %v1112 = vsel %vm906, %v881, 0
        %v1115 = vsel %vm906, %v1110, 0
        %1117 = vmatprep.subr.bf16.mxu0 0
        %1118 = vmatpush1.bf16.xpose.msra.mxu0 %v1115
        %1119 = vmatprep.subr.bf16.mxu0 0
        %1120 = vmatpush1.bf16.xpose.msra.mxu0 0
        %1121 = vmatprep.subr.bf16.mxu0 0
        %1122 = vmatpush1.bf16.xpose.msra.mxu0 0
        %1123 = vmatprep.subr.bf16.mxu0 0
        %1124 = vmatpush1.bf16.xpose.msra.mxu0 0
        %1125 = vmatprep.subr.bf16.mxu0 0
        %1126 = vmatpush1.bf16.xpose.msra.mxu0 0
        %1127 = vmatprep.subr.bf16.mxu0 0
        %1128 = vmatpush1.bf16.xpose.msra.mxu0 0
        %1129 = vmatprep.subr.bf16.mxu0 0
        %1130 = vmatpush1.bf16.xpose.msra.mxu0 0
        %1131 = vmatprep.subr.bf16.mxu0 0
        %1132 = vmatpush1.bf16.xpose.msra.mxu0 0
        %1133 = vmatprep.subr.bf16.mxu0 0
        %1134 = vmatpush1.bf16.xpose.msra.mxu0 0
        %1135 = vmatprep.subr.bf16.mxu0 0
        %1136 = vmatpush1.bf16.xpose.msra.mxu0 0
        %1137 = vmatprep.subr.bf16.mxu0 0
        %1138 = vmatpush1.bf16.xpose.msra.mxu0 0
        %1139 = vmatprep.subr.bf16.mxu0 0
        %1140 = vmatpush1.bf16.xpose.msra.mxu0 0
        %1141 = vmatprep.subr.bf16.mxu0 0
        %1142 = vmatpush1.bf16.xpose.msra.mxu0 0
        %1143 = vmatprep.subr.bf16.mxu0 0
        %1144 = vmatpush1.bf16.xpose.msra.mxu0 0
        %1145 = vmatprep.subr.bf16.mxu0 0
        %1146 = vmatpush1.bf16.xpose.msra.mxu0 0
        %1147 = vmatprep.subr.bf16.mxu0 0
        %1148 = vmatpush1.bf16.xpose.msra.mxu0 0
        %1149 = vmatprep.mubr.bf16.mxu0 0
        %1150 = vmatmul.mubr.bf16.gmra.mrb[0].mxu0 %v1112
        %v1151 = vpop.f32.mrb[0].mxu0
        %v1152 = vadd.f32 0.0, %v1151
        %v1153 = vpop.f32.mrb[0].mxu0
        %v1154 = vpop.f32.mrb[0].mxu0
        %v1155 = vpop.f32.mrb[0].mxu0
        %1156 = vdwg.mxu0
        %v1159 = vunpack.c.l.b16 %v895
        %v1160 = vunpack.c.l.b16 %v896
        %v1161 = vpack.c.b16 %v1160, %v1159
        %v1163 = vsel %vm906, %v882, 0
        %v1166 = vsel %vm906, %v1161, 0
        %1168 = vmatprep.subr.bf16.mxu0 0
        %1169 = vmatpush1.bf16.xpose.msra.mxu0 %v1166
        %1170 = vmatprep.subr.bf16.mxu0 0
        %1171 = vmatpush1.bf16.xpose.msra.mxu0 0
        %1172 = vmatprep.subr.bf16.mxu0 0
        %1173 = vmatpush1.bf16.xpose.msra.mxu0 0
        %1174 = vmatprep.subr.bf16.mxu0 0
        %1175 = vmatpush1.bf16.xpose.msra.mxu0 0
        %1176 = vmatprep.subr.bf16.mxu0 0
        %1177 = vmatpush1.bf16.xpose.msra.mxu0 0
        %1178 = vmatprep.subr.bf16.mxu0 0
        %1179 = vmatpush1.bf16.xpose.msra.mxu0 0
        %1180 = vmatprep.subr.bf16.mxu0 0
        %1181 = vmatpush1.bf16.xpose.msra.mxu0 0
        %1182 = vmatprep.subr.bf16.mxu0 0
        %1183 = vmatpush1.bf16.xpose.msra.mxu0 0
        %1184 = vmatprep.subr.bf16.mxu0 0
        %1185 = vmatpush1.bf16.xpose.msra.mxu0 0
        %1186 = vmatprep.subr.bf16.mxu0 0
        %1187 = vmatpush1.bf16.xpose.msra.mxu0 0
        %1188 = vmatprep.subr.bf16.mxu0 0
        %1189 = vmatpush1.bf16.xpose.msra.mxu0 0
        %1190 = vmatprep.subr.bf16.mxu0 0
        %1191 = vmatpush1.bf16.xpose.msra.mxu0 0
        %1192 = vmatprep.subr.bf16.mxu0 0
        %1193 = vmatpush1.bf16.xpose.msra.mxu0 0
        %1194 = vmatprep.subr.bf16.mxu0 0
        %1195 = vmatpush1.bf16.xpose.msra.mxu0 0
        %1196 = vmatprep.subr.bf16.mxu0 0
        %1197 = vmatpush1.bf16.xpose.msra.mxu0 0
        %1198 = vmatprep.subr.bf16.mxu0 0
        %1199 = vmatpush1.bf16.xpose.msra.mxu0 0
        %1200 = vmatprep.mubr.bf16.mxu0 0
        %1201 = vmatmul.mubr.bf16.gmra.mrb[0].mxu0 %v1163
        %v1202 = vpop.f32.mrb[0].mxu0
        %v1203 = vadd.f32 0.0, %v1202
        %v1204 = vpop.f32.mrb[0].mxu0
        %v1205 = vpop.f32.mrb[0].mxu0
        %v1206 = vpop.f32.mrb[0].mxu0
        %1207 = vdwg.mxu0
        %v1210 = vunpack.c.l.b16 %v897
        %v1211 = vunpack.c.l.b16 %v898
        %v1212 = vpack.c.b16 %v1211, %v1210
        %v1214 = vsel %vm906, %v883, 0
        %v1217 = vsel %vm906, %v1212, 0
        %1219 = vmatprep.subr.bf16.mxu0 0
        %1220 = vmatpush1.bf16.xpose.msra.mxu0 %v1217
        %1221 = vmatprep.subr.bf16.mxu0 0
        %1222 = vmatpush1.bf16.xpose.msra.mxu0 0
        %1223 = vmatprep.subr.bf16.mxu0 0
        %1224 = vmatpush1.bf16.xpose.msra.mxu0 0
        %1225 = vmatprep.subr.bf16.mxu0 0
        %1226 = vmatpush1.bf16.xpose.msra.mxu0 0
        %1227 = vmatprep.subr.bf16.mxu0 0
        %1228 = vmatpush1.bf16.xpose.msra.mxu0 0
        %1229 = vmatprep.subr.bf16.mxu0 0
        %1230 = vmatpush1.bf16.xpose.msra.mxu0 0
        %1231 = vmatprep.subr.bf16.mxu0 0
        %1232 = vmatpush1.bf16.xpose.msra.mxu0 0
        %1233 = vmatprep.subr.bf16.mxu0 0
        %1234 = vmatpush1.bf16.xpose.msra.mxu0 0
        %1235 = vmatprep.subr.bf16.mxu0 0
        %1236 = vmatpush1.bf16.xpose.msra.mxu0 0
        %1237 = vmatprep.subr.bf16.mxu0 0
        %1238 = vmatpush1.bf16.xpose.msra.mxu0 0
        %1239 = vmatprep.subr.bf16.mxu0 0
        %1240 = vmatpush1.bf16.xpose.msra.mxu0 0
        %1241 = vmatprep.subr.bf16.mxu0 0
        %1242 = vmatpush1.bf16.xpose.msra.mxu0 0
        %1243 = vmatprep.subr.bf16.mxu0 0
        %1244 = vmatpush1.bf16.xpose.msra.mxu0 0
        %1245 = vmatprep.subr.bf16.mxu0 0
        %1246 = vmatpush1.bf16.xpose.msra.mxu0 0
        %1247 = vmatprep.subr.bf16.mxu0 0
        %1248 = vmatpush1.bf16.xpose.msra.mxu0 0
        %1249 = vmatprep.subr.bf16.mxu0 0
        %1250 = vmatpush1.bf16.xpose.msra.mxu0 0
        %1251 = vmatprep.mubr.bf16.mxu0 0
        %1252 = vmatmul.mubr.bf16.gmra.mrb[0].mxu0 %v1214
        %v1253 = vpop.f32.mrb[0].mxu0
        %v1254 = vadd.f32 0.0, %v1253
        %v1255 = vpop.f32.mrb[0].mxu0
        %v1256 = vpop.f32.mrb[0].mxu0
        %v1257 = vpop.f32.mrb[0].mxu0
        %1258 = vdwg.mxu0
        %v1261 = vunpack.c.l.b16 %v899
        %v1262 = vunpack.c.l.b16 %v900
        %v1263 = vpack.c.b16 %v1262, %v1261
        %v1265 = vsel %vm906, %v884, 0
        %v1268 = vsel %vm906, %v1263, 0
        %1270 = vmatprep.subr.bf16.mxu0 0
        %1271 = vmatpush1.bf16.xpose.msra.mxu0 %v1268
        %1272 = vmatprep.subr.bf16.mxu0 0
        %1273 = vmatpush1.bf16.xpose.msra.mxu0 0
        %1274 = vmatprep.subr.bf16.mxu0 0
        %1275 = vmatpush1.bf16.xpose.msra.mxu0 0
        %1276 = vmatprep.subr.bf16.mxu0 0
        %1277 = vmatpush1.bf16.xpose.msra.mxu0 0
        %1278 = vmatprep.subr.bf16.mxu0 0
        %1279 = vmatpush1.bf16.xpose.msra.mxu0 0
        %1280 = vmatprep.subr.bf16.mxu0 0
        %1281 = vmatpush1.bf16.xpose.msra.mxu0 0
        %1282 = vmatprep.subr.bf16.mxu0 0
        %1283 = vmatpush1.bf16.xpose.msra.mxu0 0
        %1284 = vmatprep.subr.bf16.mxu0 0
        %1285 = vmatpush1.bf16.xpose.msra.mxu0 0
        %1286 = vmatprep.subr.bf16.mxu0 0
        %1287 = vmatpush1.bf16.xpose.msra.mxu0 0
        %1288 = vmatprep.subr.bf16.mxu0 0
        %1289 = vmatpush1.bf16.xpose.msra.mxu0 0
        %1290 = vmatprep.subr.bf16.mxu0 0
        %1291 = vmatpush1.bf16.xpose.msra.mxu0 0
        %1292 = vmatprep.subr.bf16.mxu0 0
        %1293 = vmatpush1.bf16.xpose.msra.mxu0 0
        %1294 = vmatprep.subr.bf16.mxu0 0
        %1295 = vmatpush1.bf16.xpose.msra.mxu0 0
        %1296 = vmatprep.subr.bf16.mxu0 0
        %1297 = vmatpush1.bf16.xpose.msra.mxu0 0
        %1298 = vmatprep.subr.bf16.mxu0 0
        %1299 = vmatpush1.bf16.xpose.msra.mxu0 0
        %1300 = vmatprep.subr.bf16.mxu0 0
        %1301 = vmatpush1.bf16.xpose.msra.mxu0 0
        %1302 = vmatprep.mubr.bf16.mxu0 0
        %1303 = vmatmul.mubr.bf16.gmra.mrb[0].mxu0 %v1265
        %v1304 = vpop.f32.mrb[0].mxu0
        %v1305 = vadd.f32 0.0, %v1304
        %v1306 = vpop.f32.mrb[0].mxu0
        %v1307 = vpop.f32.mrb[0].mxu0
        %v1308 = vpop.f32.mrb[0].mxu0
        %1309 = vdwg.mxu0
        %v1310 = vmul.f32 %v869, %v869
        %v1311 = vmul.f32 %v870, %v870
        %v1312 = vmul.f32 %v871, %v871
        %v1313 = vmul.f32 %v872, %v872
        %v1314 = vmul.f32 %v873, %v873
        %v1315 = vmul.f32 %v874, %v874
        %v1316 = vmul.f32 %v875, %v875
        %v1317 = vmul.f32 %v876, %v876
        %v1318 = vsel %vm906, %v1310, 0.0
        %1319 = vadd.xlane.f32.xlu0 %v1318
        %v1320 = vpop.xlane.xlu0 %1319
        %v1321 = vsel %vm906, %v1311, 0.0
        %1322 = vadd.xlane.f32.xlu0 %v1321
        %v1323 = vpop.xlane.xlu0 %1322
        %v1324 = vsel %vm906, %v1312, 0.0
        %1325 = vadd.xlane.f32.xlu0 %v1324
        %v1326 = vpop.xlane.xlu0 %1325
        %v1327 = vsel %vm906, %v1313, 0.0
        %1328 = vadd.xlane.f32.xlu0 %v1327
        %v1329 = vpop.xlane.xlu0 %1328
        %v1330 = vsel %vm906, %v1314, 0.0
        %1331 = vadd.xlane.f32.xlu0 %v1330
        %v1332 = vpop.xlane.xlu0 %1331
        %v1333 = vsel %vm906, %v1315, 0.0
        %1334 = vadd.xlane.f32.xlu0 %v1333
        %v1335 = vpop.xlane.xlu0 %1334
        %v1336 = vsel %vm906, %v1316, 0.0
        %1337 = vadd.xlane.f32.xlu0 %v1336
        %v1338 = vpop.xlane.xlu0 %1337
        %v1339 = vsel %vm906, %v1317, 0.0
        %1340 = vadd.xlane.f32.xlu0 %v1339
        %v1341 = vpop.xlane.xlu0 %1340
        %v1342 = vrsqrt.pop %v1320
        %v1343 = vmul.f32 %v1320, %v1342
        %vm1344 = vcmp.eq.f32.partialorder %v1320, inf
        %v1345 = vsel %vm1344, %v1320, %v1343
        %vm1346 = vcmp.eq.f32.partialorder %v1320, 0.0
        %v1347 = vand.u32 %v1320, 2147483648
        %v1348 = vsel %vm1346, %v1347, %v1345
        %v1349 = vrsqrt.pop %v1323
        %v1350 = vmul.f32 %v1323, %v1349
        %vm1351 = vcmp.eq.f32.partialorder %v1323, inf
        %v1352 = vsel %vm1351, %v1323, %v1350
        %vm1353 = vcmp.eq.f32.partialorder %v1323, 0.0
        %v1354 = vand.u32 %v1323, 2147483648
        %v1355 = vsel %vm1353, %v1354, %v1352
        %v1356 = vrsqrt.pop %v1326
        %v1357 = vmul.f32 %v1326, %v1356
        %vm1358 = vcmp.eq.f32.partialorder %v1326, inf
        %v1359 = vsel %vm1358, %v1326, %v1357
        %vm1360 = vcmp.eq.f32.partialorder %v1326, 0.0
        %v1361 = vand.u32 %v1326, 2147483648
        %v1362 = vsel %vm1360, %v1361, %v1359
        %v1363 = vrsqrt.pop %v1329
        %v1364 = vmul.f32 %v1329, %v1363
        %vm1365 = vcmp.eq.f32.partialorder %v1329, inf
        %v1366 = vsel %vm1365, %v1329, %v1364
        %vm1367 = vcmp.eq.f32.partialorder %v1329, 0.0
        %v1368 = vand.u32 %v1329, 2147483648
        %v1369 = vsel %vm1367, %v1368, %v1366
        %v1370 = vrsqrt.pop %v1332
        %v1371 = vmul.f32 %v1332, %v1370
        %vm1372 = vcmp.eq.f32.partialorder %v1332, inf
        %v1373 = vsel %vm1372, %v1332, %v1371
        %vm1374 = vcmp.eq.f32.partialorder %v1332, 0.0
        %v1375 = vand.u32 %v1332, 2147483648
        %v1376 = vsel %vm1374, %v1375, %v1373
        %v1377 = vrsqrt.pop %v1335
        %v1378 = vmul.f32 %v1335, %v1377
        %vm1379 = vcmp.eq.f32.partialorder %v1335, inf
        %v1380 = vsel %vm1379, %v1335, %v1378
        %vm1381 = vcmp.eq.f32.partialorder %v1335, 0.0
        %v1382 = vand.u32 %v1335, 2147483648
        %v1383 = vsel %vm1381, %v1382, %v1380
        %v1384 = vrsqrt.pop %v1338
        %v1385 = vmul.f32 %v1338, %v1384
        %vm1386 = vcmp.eq.f32.partialorder %v1338, inf
        %v1387 = vsel %vm1386, %v1338, %v1385
        %vm1388 = vcmp.eq.f32.partialorder %v1338, 0.0
        %v1389 = vand.u32 %v1338, 2147483648
        %v1390 = vsel %vm1388, %v1389, %v1387
        %v1391 = vrsqrt.pop %v1341
        %v1392 = vmul.f32 %v1341, %v1391
        %vm1393 = vcmp.eq.f32.partialorder %v1341, inf
        %v1394 = vsel %vm1393, %v1341, %v1392
        %vm1395 = vcmp.eq.f32.partialorder %v1341, 0.0
        %v1396 = vand.u32 %v1341, 2147483648
        %v1397 = vsel %vm1395, %v1396, %v1394
        %v1398 = vmax.f32 %v1348, 1e-08
        %v1399 = vmax.f32 %v1355, 1e-08
        %v1400 = vmax.f32 %v1362, 1e-08
        %v1401 = vmax.f32 %v1369, 1e-08
        %v1402 = vmax.f32 %v1376, 1e-08
        %v1403 = vmax.f32 %v1383, 1e-08
        %v1404 = vmax.f32 %v1390, 1e-08
        %v1405 = vmax.f32 %v1397, 1e-08
        %v1406 = vrcp.pop %v1398
        %v1407 = vmul.f32 1.0, %v1406
        %v1408 = vrcp.pop %v1399
        %v1409 = vmul.f32 1.0, %v1408
        %v1410 = vrcp.pop %v1400
        %v1411 = vmul.f32 1.0, %v1410
        %v1412 = vrcp.pop %v1401
        %v1413 = vmul.f32 1.0, %v1412
        %v1414 = vrcp.pop %v1402
        %v1415 = vmul.f32 1.0, %v1414
        %v1416 = vrcp.pop %v1403
        %v1417 = vmul.f32 1.0, %v1416
        %v1418 = vrcp.pop %v1404
        %v1419 = vmul.f32 1.0, %v1418
        %v1420 = vrcp.pop %v1405
        %v1421 = vmul.f32 1.0, %v1420
        %v1422 = vmul.f32 %v948, %v1407
        %v1423 = vmul.f32 %v999, %v1409
        %v1424 = vmul.f32 %v1050, %v1411
        %v1425 = vmul.f32 %v1101, %v1413
        %v1426 = vmul.f32 %v1152, %v1415
        %v1427 = vmul.f32 %v1203, %v1417
        %v1428 = vmul.f32 %v1254, %v1419
        %v1429 = vmul.f32 %v1305, %v1421
        %v1430 = vlaneseq
        %v1431 = vshrl.u32 %v1430, 7
        %s1432 = smul.u32 %s32, 8
        %v1433 = vstv %s1432
        %v1434 = vadd.s32 %v1431, %v1433
        %v1435 = vlaneseq
        %v1436 = vand.u32 %v1435, 127
        %vm1437 = vcmp.eq.s32.totalorder %v1434, %v1436
        %v1438 = vsel %vm1437, 1, 0
        %vm1439 = vcmp.eq.s32.totalorder %v1438, 1
        %v1440 = vsel %vm1439, -inf, %v1422
        %v1441 = vsel %vm1439, -inf, %v1423
        %v1442 = vsel %vm1439, -inf, %v1424
        %v1443 = vsel %vm1439, -inf, %v1425
        %v1444 = vsel %vm1439, -inf, %v1426
        %v1445 = vsel %vm1439, -inf, %v1427
        %v1446 = vsel %vm1439, -inf, %v1428
        %v1447 = vsel %vm1439, -inf, %v1429
        %v1448 = vsel %vm497, %v1440, -inf
        %1449 = vmax.xlane.f32.xlu0 %v1448
        %v1450 = vpop.xlane.xlu0 %1449
        %v1451 = vsel %vm497, %v1441, -inf
        %1452 = vmax.xlane.f32.xlu0 %v1451
        %v1453 = vpop.xlane.xlu0 %1452
        %v1454 = vsel %vm497, %v1442, -inf
        %1455 = vmax.xlane.f32.xlu0 %v1454
        %v1456 = vpop.xlane.xlu0 %1455
        %v1457 = vsel %vm497, %v1443, -inf
        %1458 = vmax.xlane.f32.xlu0 %v1457
        %v1459 = vpop.xlane.xlu0 %1458
        %v1460 = vsel %vm497, %v1444, -inf
        %1461 = vmax.xlane.f32.xlu0 %v1460
        %v1462 = vpop.xlane.xlu0 %1461
        %v1463 = vsel %vm497, %v1445, -inf
        %1464 = vmax.xlane.f32.xlu0 %v1463
        %v1465 = vpop.xlane.xlu0 %1464
        %v1466 = vsel %vm497, %v1446, -inf
        %1467 = vmax.xlane.f32.xlu0 %v1466
        %v1468 = vpop.xlane.xlu0 %1467
        %v1469 = vsel %vm497, %v1447, -inf
        %1470 = vmax.xlane.f32.xlu0 %v1469
        %v1471 = vpop.xlane.xlu0 %1470
        %v1472 = vsub.f32 %v1440, %v1450
        %v1473 = vsub.f32 %v1441, %v1453
        %v1474 = vsub.f32 %v1442, %v1456
        %v1475 = vsub.f32 %v1443, %v1459
        %v1476 = vsub.f32 %v1444, %v1462
        %v1477 = vsub.f32 %v1445, %v1465
        %v1478 = vsub.f32 %v1446, %v1468
        %v1479 = vsub.f32 %v1447, %v1471
        %v1480 = vmul.f32 %v1472, 1.442695
        %v1481 = vpow.pop %v1480
        %v1482 = vmul.f32 %v1473, 1.442695
        %v1483 = vpow.pop %v1482
        %v1484 = vmul.f32 %v1474, 1.442695
        %v1485 = vpow.pop %v1484
        %v1486 = vmul.f32 %v1475, 1.442695
        %v1487 = vpow.pop %v1486
        %v1488 = vmul.f32 %v1476, 1.442695
        %v1489 = vpow.pop %v1488
        %v1490 = vmul.f32 %v1477, 1.442695
        %v1491 = vpow.pop %v1490
        %v1492 = vmul.f32 %v1478, 1.442695
        %v1493 = vpow.pop %v1492
        %v1494 = vmul.f32 %v1479, 1.442695
        %v1495 = vpow.pop %v1494
        %v1496 = vld [vmem:[%s7] sm:$0xff]
        %v1497 = vld [vmem:[%s7 + $0x8] sm:$0xff]
        %v1499 = vsel %vm497, %v1481, 0
        %v1502 = vsel %vm497, %v1483, 0
        %v1505 = vsel %vm497, %v1485, 0
        %v1508 = vsel %vm497, %v1487, 0
        %v1511 = vsel %vm497, %v1489, 0
        %v1514 = vsel %vm497, %v1491, 0
        %v1517 = vsel %vm497, %v1493, 0
        %v1520 = vsel %vm497, %v1495, 0
        %1522 = vmatprep.subr.mxu0 0.0
        %1523 = vmatpush1.msra.mxu0 %v1496
        %1524 = vmatprep.subr.mxu0 0.0
        %1525 = vmatpush1.msra.mxu0 %v1497
        %1526 = vmatprep.subr.mxu0 0.0
        %1527 = vmatpush1.msra.mxu0 0.0
        %1528 = vmatprep.subr.mxu0 0.0
        %1529 = vmatpush1.msra.mxu0 0.0
        %1530 = vmatprep.subr.mxu0 0.0
        %1531 = vmatpush1.msra.mxu0 0.0
        %1532 = vmatprep.subr.mxu0 0.0
        %1533 = vmatpush1.msra.mxu0 0.0
        %1534 = vmatprep.subr.mxu0 0.0
        %1535 = vmatpush1.msra.mxu0 0.0
        %1536 = vmatprep.subr.mxu0 0.0
        %1537 = vmatpush1.msra.mxu0 0.0
        %1538 = vmatprep.subr.mxu0 0.0
        %1539 = vmatpush1.msra.mxu0 0.0
        %1540 = vmatprep.subr.mxu0 0.0
        %1541 = vmatpush1.msra.mxu0 0.0
        %1542 = vmatprep.subr.mxu0 0.0
        %1543 = vmatpush1.msra.mxu0 0.0
        %1544 = vmatprep.subr.mxu0 0.0
        %1545 = vmatpush1.msra.mxu0 0.0
        %1546 = vmatprep.subr.mxu0 0.0
        %1547 = vmatpush1.msra.mxu0 0.0
        %1548 = vmatprep.subr.mxu0 0.0
        %1549 = vmatpush1.msra.mxu0 0.0
        %1550 = vmatprep.subr.mxu0 0.0
        %1551 = vmatpush1.msra.mxu0 0.0
        %1552 = vmatprep.subr.mxu0 0.0
        %1553 = vmatpush1.msra.mxu0 0.0
        %1554 = vmatprep.subr.mxu0 0.0
        %1555 = vmatpush1.msra.mxu0 0.0
        %1556 = vmatprep.subr.mxu0 0.0
        %1557 = vmatpush1.msra.mxu0 0.0
        %1558 = vmatprep.subr.mxu0 0.0
        %1559 = vmatpush1.msra.mxu0 0.0
        %1560 = vmatprep.subr.mxu0 0.0
        %1561 = vmatpush1.msra.mxu0 0.0
        %1562 = vmatprep.subr.mxu0 0.0
        %1563 = vmatpush1.msra.mxu0 0.0
        %1564 = vmatprep.subr.mxu0 0.0
        %1565 = vmatpush1.msra.mxu0 0.0
        %1566 = vmatprep.subr.mxu0 0.0
        %1567 = vmatpush1.msra.mxu0 0.0
        %1568 = vmatprep.subr.mxu0 0.0
        %1569 = vmatpush1.msra.mxu0 0.0
        %1570 = vmatprep.subr.mxu0 0.0
        %1571 = vmatpush1.msra.mxu0 0.0
        %1572 = vmatprep.subr.mxu0 0.0
        %1573 = vmatpush1.msra.mxu0 0.0
        %1574 = vmatprep.subr.mxu0 0.0
        %1575 = vmatpush1.msra.mxu0 0.0
        %1576 = vmatprep.subr.mxu0 0.0
        %1577 = vmatpush1.msra.mxu0 0.0
        %1578 = vmatprep.subr.mxu0 0.0
        %1579 = vmatpush1.msra.mxu0 0.0
        %1580 = vmatprep.subr.mxu0 0.0
        %1581 = vmatpush1.msra.mxu0 0.0
        %1582 = vmatprep.subr.mxu0 0.0
        %1583 = vmatpush1.msra.mxu0 0.0
        %1584 = vmatprep.subr.mxu0 0.0
        %1585 = vmatpush1.msra.mxu0 0.0
        %1586 = vmatprep.mubr.f32.mxu0 0.0
        %1587 = vmatmul.mubr.f32.gmra.mrb[0].mxu0 %v1499
        %v1588 = vpop.f32.mrb[0].mxu0
        %v1589 = vadd.f32 0.0, %v1588
        %v1590 = vpop.f32.mrb[0].mxu0
        %1591 = vmatprep.mubr.f32.mxu0 0.0
        %1592 = vmatmul.mubr.f32.gmra.mrb[0].mxu0 %v1502
        %v1593 = vpop.f32.mrb[0].mxu0
        %v1594 = vadd.f32 0.0, %v1593
        %v1595 = vpop.f32.mrb[0].mxu0
        %1596 = vmatprep.mubr.f32.mxu0 0.0
        %1597 = vmatmul.mubr.f32.gmra.mrb[0].mxu0 %v1505
        %v1598 = vpop.f32.mrb[0].mxu0
        %v1599 = vadd.f32 0.0, %v1598
        %v1600 = vpop.f32.mrb[0].mxu0
        %1601 = vmatprep.mubr.f32.mxu0 0.0
        %1602 = vmatmul.mubr.f32.gmra.mrb[0].mxu0 %v1508
        %v1603 = vpop.f32.mrb[0].mxu0
        %v1604 = vadd.f32 0.0, %v1603
        %v1605 = vpop.f32.mrb[0].mxu0
        %1606 = vmatprep.mubr.f32.mxu0 0.0
        %1607 = vmatmul.mubr.f32.gmra.mrb[0].mxu0 %v1511
        %v1608 = vpop.f32.mrb[0].mxu0
        %v1609 = vadd.f32 0.0, %v1608
        %v1610 = vpop.f32.mrb[0].mxu0
        %1611 = vmatprep.mubr.f32.mxu0 0.0
        %1612 = vmatmul.mubr.f32.gmra.mrb[0].mxu0 %v1514
        %v1613 = vpop.f32.mrb[0].mxu0
        %v1614 = vadd.f32 0.0, %v1613
        %v1615 = vpop.f32.mrb[0].mxu0
        %1616 = vmatprep.mubr.f32.mxu0 0.0
        %1617 = vmatmul.mubr.f32.gmra.mrb[0].mxu0 %v1517
        %v1618 = vpop.f32.mrb[0].mxu0
        %v1619 = vadd.f32 0.0, %v1618
        %v1620 = vpop.f32.mrb[0].mxu0
        %1621 = vmatprep.mubr.f32.mxu0 0.0
        %1622 = vmatmul.mubr.f32.gmra.mrb[0].mxu0 %v1520
        %v1623 = vpop.f32.mrb[0].mxu0
        %v1624 = vadd.f32 0.0, %v1623
        %v1625 = vpop.f32.mrb[0].mxu0
        %1626 = vdwg.mxu0
        %v1627 = vrcp.pop %v1589
        %v1628 = vmul.f32 0.125, %v1627
        %v1629 = vrcp.pop %v1594
        %v1630 = vmul.f32 0.125, %v1629
        %v1631 = vrcp.pop %v1599
        %v1632 = vmul.f32 0.125, %v1631
        %v1633 = vrcp.pop %v1604
        %v1634 = vmul.f32 0.125, %v1633
        %v1635 = vrcp.pop %v1609
        %v1636 = vmul.f32 0.125, %v1635
        %v1637 = vrcp.pop %v1614
        %v1638 = vmul.f32 0.125, %v1637
        %v1639 = vrcp.pop %v1619
        %v1640 = vmul.f32 0.125, %v1639
        %v1641 = vrcp.pop %v1624
        %v1642 = vmul.f32 0.125, %v1641
        %vm1643 = vcmp.lt.s32.totalorder %v1436, 0
        %v1644 = vsub.s32 0, %v1436
        %v1645 = vsel %vm1643, %v1644, %v1436
        %v1646 = vshrl.u32 %v1645, 1
        %v1647 = vand.u32 %v1645, 1
        %v1648 = vsub.s32 0, %v1647
        %v1649 = vsel %vm1643, %v1648, %v1647
        %vm1650 = vcmp.ne.s32.totalorder %v1649, 0
        %vm1651 = vcmp.lt.s32.totalorder %v1649, 0
        %vm1652 = vmand %vm1651, %vm1650
        %v1653 = vadd.s32 %v1649, 2
        %v1654 = vsel %vm1652, %v1653, %v1649
        %vm1655 = vcmp.eq.s32.totalorder %v1654, 0
        %v1656 = vsel %vm1655, 1, 0
        %vm1657 = vcmp.eq.s32.totalorder %v1656, 1
        %1659 = vset.pattern.permute.xlu0 0
        %1660 = vperm.xlu0 %1659, %v1628
        %v1661 = vpop.permute.xlu0 %1660
        %1664 = vset.pattern.permute.xlu0 0
        %1665 = vperm.xlu0 %1664, %v1630
        %v1666 = vpop.permute.xlu0 %1665
        %1669 = vset.pattern.permute.xlu0 0
        %1670 = vperm.xlu0 %1669, %v1632
        %v1671 = vpop.permute.xlu0 %1670
        %1674 = vset.pattern.permute.xlu0 0
        %1675 = vperm.xlu0 %1674, %v1634
        %v1676 = vpop.permute.xlu0 %1675
        %1679 = vset.pattern.permute.xlu0 0
        %1680 = vperm.xlu0 %1679, %v1636
        %v1681 = vpop.permute.xlu0 %1680
        %1684 = vset.pattern.permute.xlu0 0
        %1685 = vperm.xlu0 %1684, %v1638
        %v1686 = vpop.permute.xlu0 %1685
        %1689 = vset.pattern.permute.xlu0 0
        %1690 = vperm.xlu0 %1689, %v1640
        %v1691 = vpop.permute.xlu0 %1690
        %1694 = vset.pattern.permute.xlu0 0
        %1695 = vperm.xlu0 %1694, %v1642
        %v1696 = vpop.permute.xlu0 %1695
        %v1698 = vsel %vm1657, %v1661, 0.0
        %v1699 = vsel %vm1657, %v1666, 0.0
        %v1700 = vsel %vm1657, %v1671, 0.0
        %v1701 = vsel %vm1657, %v1676, 0.0
        %v1702 = vsel %vm1657, %v1681, 0.0
        %v1703 = vsel %vm1657, %v1686, 0.0
        %v1704 = vsel %vm1657, %v1691, 0.0
        %v1705 = vsel %vm1657, %v1696, 0.0
        %vm1706 = vcmp.eq.s32.totalorder %v1654, 1
        %v1707 = vsel %vm1706, 1, 0
        %vm1708 = vcmp.eq.s32.totalorder %v1707, 1
        %1709 = vset.pattern.permute.xlu0 1
        %1710 = vperm.xlu0 %1709, %v1628
        %v1711 = vpop.permute.xlu0 %1710
        %1713 = vset.pattern.permute.xlu0 1
        %1714 = vperm.xlu0 %1713, %v1630
        %v1715 = vpop.permute.xlu0 %1714
        %1717 = vset.pattern.permute.xlu0 1
        %1718 = vperm.xlu0 %1717, %v1632
        %v1719 = vpop.permute.xlu0 %1718
        %1721 = vset.pattern.permute.xlu0 1
        %1722 = vperm.xlu0 %1721, %v1634
        %v1723 = vpop.permute.xlu0 %1722
        %1725 = vset.pattern.permute.xlu0 1
        %1726 = vperm.xlu0 %1725, %v1636
        %v1727 = vpop.permute.xlu0 %1726
        %1729 = vset.pattern.permute.xlu0 1
        %1730 = vperm.xlu0 %1729, %v1638
        %v1731 = vpop.permute.xlu0 %1730
        %1733 = vset.pattern.permute.xlu0 1
        %1734 = vperm.xlu0 %1733, %v1640
        %v1735 = vpop.permute.xlu0 %1734
        %1737 = vset.pattern.permute.xlu0 1
        %1738 = vperm.xlu0 %1737, %v1642
        %v1739 = vpop.permute.xlu0 %1738
        %v1741 = vsel %vm1708, %v1711, %v1698
        %v1742 = vsel %vm1708, %v1715, %v1699
        %v1743 = vsel %vm1708, %v1719, %v1700
        %v1744 = vsel %vm1708, %v1723, %v1701
        %v1745 = vsel %vm1708, %v1727, %v1702
        %v1746 = vsel %vm1708, %v1731, %v1703
        %v1747 = vsel %vm1708, %v1735, %v1704
        %v1748 = vsel %vm1708, %v1739, %v1705
        %v1749 = vmul.f32 %v1481, %v1741
        %v1750 = vmul.f32 %v1483, %v1742
        %v1751 = vmul.f32 %v1485, %v1743
        %v1752 = vmul.f32 %v1487, %v1744
        %v1753 = vmul.f32 %v1489, %v1745
        %v1754 = vmul.f32 %v1491, %v1746
        %v1755 = vmul.f32 %v1493, %v1747
        %v1756 = vmul.f32 %v1495, %v1748
        %v1757 = vcombine.low %v1749, %v1751
        %v1758 = vcombine.high %v1749, %v1751
        %v1760 = vunpack.c.l.s4 1983009808
        %v1761 = vunpack.c.0.s8 %v1760
        %v1762 = vlaneseq
        %v1763 = vshrl.u32 %v1762, 7
        %v1764 = vsub.s32 %v1761, %v1763
        %v1765 = vrot.slane %v1757, %v1764
        %v1767 = vunpack.c.l.s4 1983009808
        %v1768 = vunpack.c.0.s8 %v1767
        %v1769 = vlaneseq
        %v1770 = vshrl.u32 %v1769, 7
        %v1771 = vsub.s32 %v1768, %v1770
        %v1772 = vrot.slane %v1758, %v1771
        %v1773 = vcombine.low %v1750, %v1752
        %v1774 = vcombine.high %v1750, %v1752
        %v1776 = vunpack.c.l.s4 1983009808
        %v1777 = vunpack.c.0.s8 %v1776
        %v1778 = vlaneseq
        %v1779 = vshrl.u32 %v1778, 7
        %v1780 = vsub.s32 %v1777, %v1779
        %v1781 = vrot.slane %v1773, %v1780
        %v1783 = vunpack.c.l.s4 1983009808
        %v1784 = vunpack.c.0.s8 %v1783
        %v1785 = vlaneseq
        %v1786 = vshrl.u32 %v1785, 7
        %v1787 = vsub.s32 %v1784, %v1786
        %v1788 = vrot.slane %v1774, %v1787
        %v1789 = vcombine.low %v1753, %v1755
        %v1790 = vcombine.high %v1753, %v1755
        %v1792 = vunpack.c.l.s4 1983009808
        %v1793 = vunpack.c.0.s8 %v1792
        %v1794 = vlaneseq
        %v1795 = vshrl.u32 %v1794, 7
        %v1796 = vsub.s32 %v1793, %v1795
        %v1797 = vrot.slane %v1789, %v1796
        %v1799 = vunpack.c.l.s4 1983009808
        %v1800 = vunpack.c.0.s8 %v1799
        %v1801 = vlaneseq
        %v1802 = vshrl.u32 %v1801, 7
        %v1803 = vsub.s32 %v1800, %v1802
        %v1804 = vrot.slane %v1790, %v1803
        %v1805 = vcombine.low %v1754, %v1756
        %v1806 = vcombine.high %v1754, %v1756
        %v1808 = vunpack.c.l.s4 1983009808
        %v1809 = vunpack.c.0.s8 %v1808
        %v1810 = vlaneseq
        %v1811 = vshrl.u32 %v1810, 7
        %v1812 = vsub.s32 %v1809, %v1811
        %v1813 = vrot.slane %v1805, %v1812
        %v1815 = vunpack.c.l.s4 1983009808
        %v1816 = vunpack.c.0.s8 %v1815
        %v1817 = vlaneseq
        %v1818 = vshrl.u32 %v1817, 7
        %v1819 = vsub.s32 %v1816, %v1818
        %v1820 = vrot.slane %v1806, %v1819
        %v1821 = vcombine.low %v1765, %v1781
        %v1822 = vcombine.high %v1765, %v1781
        %v1824 = vunpack.c.l.s4 1934713408
        %v1825 = vunpack.c.0.s8 %v1824
        %v1826 = vlaneseq
        %v1827 = vshrl.u32 %v1826, 7
        %v1828 = vsub.s32 %v1825, %v1827
        %v1829 = vrot.slane %v1821, %v1828
        %v1831 = vunpack.c.l.s4 1934713408
        %v1832 = vunpack.c.0.s8 %v1831
        %v1833 = vlaneseq
        %v1834 = vshrl.u32 %v1833, 7
        %v1835 = vsub.s32 %v1832, %v1834
        %v1836 = vrot.slane %v1822, %v1835
        %v1837 = vcombine.low %v1772, %v1788
        %v1838 = vcombine.high %v1772, %v1788
        %v1840 = vunpack.c.l.s4 1934713408
        %v1841 = vunpack.c.0.s8 %v1840
        %v1842 = vlaneseq
        %v1843 = vshrl.u32 %v1842, 7
        %v1844 = vsub.s32 %v1841, %v1843
        %v1845 = vrot.slane %v1837, %v1844
        %v1847 = vunpack.c.l.s4 1934713408
        %v1848 = vunpack.c.0.s8 %v1847
        %v1849 = vlaneseq
        %v1850 = vshrl.u32 %v1849, 7
        %v1851 = vsub.s32 %v1848, %v1850
        %v1852 = vrot.slane %v1838, %v1851
        %v1853 = vcombine.low %v1797, %v1813
        %v1854 = vcombine.high %v1797, %v1813
        %v1856 = vunpack.c.l.s4 1934713408
        %v1857 = vunpack.c.0.s8 %v1856
        %v1858 = vlaneseq
        %v1859 = vshrl.u32 %v1858, 7
        %v1860 = vsub.s32 %v1857, %v1859
        %v1861 = vrot.slane %v1853, %v1860
        %v1863 = vunpack.c.l.s4 1934713408
        %v1864 = vunpack.c.0.s8 %v1863
        %v1865 = vlaneseq
        %v1866 = vshrl.u32 %v1865, 7
        %v1867 = vsub.s32 %v1864, %v1866
        %v1868 = vrot.slane %v1854, %v1867
        %v1869 = vcombine.low %v1804, %v1820
        %v1870 = vcombine.high %v1804, %v1820
        %v1872 = vunpack.c.l.s4 1934713408
        %v1873 = vunpack.c.0.s8 %v1872
        %v1874 = vlaneseq
        %v1875 = vshrl.u32 %v1874, 7
        %v1876 = vsub.s32 %v1873, %v1875
        %v1877 = vrot.slane %v1869, %v1876
        %v1879 = vunpack.c.l.s4 1934713408
        %v1880 = vunpack.c.0.s8 %v1879
        %v1881 = vlaneseq
        %v1882 = vshrl.u32 %v1881, 7
        %v1883 = vsub.s32 %v1880, %v1882
        %v1884 = vrot.slane %v1870, %v1883
        %v1885 = vcombine.low %v1829, %v1861
        %v1886 = vcombine.high %v1829, %v1861
        %v1887 = vcombine.low %v1836, %v1868
        %v1888 = vcombine.high %v1836, %v1868
        %v1889 = vcombine.low %v1845, %v1877
        %v1890 = vcombine.high %v1845, %v1877
        %v1891 = vcombine.low %v1852, %v1884
        %v1892 = vcombine.high %v1852, %v1884
        %1893 = vxpose.xlu0.b32.start [1/16] %v1885, 128
        %1894 = vxpose.xlu0.b32.cont [2/16] 0.0, 128
        %1895 = vxpose.xlu0.b32.cont [3/16] 0.0, 128
        %1896 = vxpose.xlu0.b32.cont [4/16] 0.0, 128
        %1897 = vxpose.xlu0.b32.cont [5/16] 0.0, 128
        %1898 = vxpose.xlu0.b32.cont [6/16] 0.0, 128
        %1899 = vxpose.xlu0.b32.cont [7/16] 0.0, 128
        %1900 = vxpose.xlu0.b32.cont [8/16] 0.0, 128
        %1901 = vxpose.xlu0.b32.cont [9/16] 0.0, 128
        %1902 = vxpose.xlu0.b32.cont [10/16] 0.0, 128
        %1903 = vxpose.xlu0.b32.cont [11/16] 0.0, 128
        %1904 = vxpose.xlu0.b32.cont [12/16] 0.0, 128
        %1905 = vxpose.xlu0.b32.cont [13/16] 0.0, 128
        %1906 = vxpose.xlu0.b32.cont [14/16] 0.0, 128
        %1907 = vxpose.xlu0.b32.cont [15/16] 0.0, 128
        %1908 = vxpose.xlu0.b32.end [16/16] 0.0, 128
        %v1909 = vpop.trf.xlu0
        %v1910 = vpop.trf.xlu0
        %v1911 = vpop.trf.xlu0
        %v1912 = vpop.trf.xlu0
        %v1913 = vpop.trf.xlu0
        %v1914 = vpop.trf.xlu0
        %v1915 = vpop.trf.xlu0
        %v1916 = vpop.trf.xlu0
        %v1917 = vpop.trf.xlu0
        %v1918 = vpop.trf.xlu0
        %v1919 = vpop.trf.xlu0
        %v1920 = vpop.trf.xlu0
        %v1921 = vpop.trf.xlu0
        %v1922 = vpop.trf.xlu0
        %v1923 = vpop.trf.xlu0
        %v1924 = vpop.trf.xlu0
        %1925 = vxpose.xlu0.b32.start [1/16] %v1886, 128
        %1926 = vxpose.xlu0.b32.cont [2/16] 0.0, 128
        %1927 = vxpose.xlu0.b32.cont [3/16] 0.0, 128
        %1928 = vxpose.xlu0.b32.cont [4/16] 0.0, 128
        %1929 = vxpose.xlu0.b32.cont [5/16] 0.0, 128
        %1930 = vxpose.xlu0.b32.cont [6/16] 0.0, 128
        %1931 = vxpose.xlu0.b32.cont [7/16] 0.0, 128
        %1932 = vxpose.xlu0.b32.cont [8/16] 0.0, 128
        %1933 = vxpose.xlu0.b32.cont [9/16] 0.0, 128
        %1934 = vxpose.xlu0.b32.cont [10/16] 0.0, 128
        %1935 = vxpose.xlu0.b32.cont [11/16] 0.0, 128
        %1936 = vxpose.xlu0.b32.cont [12/16] 0.0, 128
        %1937 = vxpose.xlu0.b32.cont [13/16] 0.0, 128
        %1938 = vxpose.xlu0.b32.cont [14/16] 0.0, 128
        %1939 = vxpose.xlu0.b32.cont [15/16] 0.0, 128
        %1940 = vxpose.xlu0.b32.end [16/16] 0.0, 128
        %v1941 = vpop.trf.xlu0
        %v1942 = vpop.trf.xlu0
        %v1943 = vpop.trf.xlu0
        %v1944 = vpop.trf.xlu0
        %v1945 = vpop.trf.xlu0
        %v1946 = vpop.trf.xlu0
        %v1947 = vpop.trf.xlu0
        %v1948 = vpop.trf.xlu0
        %v1949 = vpop.trf.xlu0
        %v1950 = vpop.trf.xlu0
        %v1951 = vpop.trf.xlu0
        %v1952 = vpop.trf.xlu0
        %v1953 = vpop.trf.xlu0
        %v1954 = vpop.trf.xlu0
        %v1955 = vpop.trf.xlu0
        %v1956 = vpop.trf.xlu0
        %1957 = vxpose.xlu0.b32.start [1/16] %v1887, 128
        %1958 = vxpose.xlu0.b32.cont [2/16] 0.0, 128
        %1959 = vxpose.xlu0.b32.cont [3/16] 0.0, 128
        %1960 = vxpose.xlu0.b32.cont [4/16] 0.0, 128
        %1961 = vxpose.xlu0.b32.cont [5/16] 0.0, 128
        %1962 = vxpose.xlu0.b32.cont [6/16] 0.0, 128
        %1963 = vxpose.xlu0.b32.cont [7/16] 0.0, 128
        %1964 = vxpose.xlu0.b32.cont [8/16] 0.0, 128
        %1965 = vxpose.xlu0.b32.cont [9/16] 0.0, 128
        %1966 = vxpose.xlu0.b32.cont [10/16] 0.0, 128
        %1967 = vxpose.xlu0.b32.cont [11/16] 0.0, 128
        %1968 = vxpose.xlu0.b32.cont [12/16] 0.0, 128
        %1969 = vxpose.xlu0.b32.cont [13/16] 0.0, 128
        %1970 = vxpose.xlu0.b32.cont [14/16] 0.0, 128
        %1971 = vxpose.xlu0.b32.cont [15/16] 0.0, 128
        %1972 = vxpose.xlu0.b32.end [16/16] 0.0, 128
        %v1973 = vpop.trf.xlu0
        %v1974 = vpop.trf.xlu0
        %v1975 = vpop.trf.xlu0
        %v1976 = vpop.trf.xlu0
        %v1977 = vpop.trf.xlu0
        %v1978 = vpop.trf.xlu0
        %v1979 = vpop.trf.xlu0
        %v1980 = vpop.trf.xlu0
        %v1981 = vpop.trf.xlu0
        %v1982 = vpop.trf.xlu0
        %v1983 = vpop.trf.xlu0
        %v1984 = vpop.trf.xlu0
        %v1985 = vpop.trf.xlu0
        %v1986 = vpop.trf.xlu0
        %v1987 = vpop.trf.xlu0
        %v1988 = vpop.trf.xlu0
        %1989 = vxpose.xlu0.b32.start [1/16] %v1888, 128
        %1990 = vxpose.xlu0.b32.cont [2/16] 0.0, 128
        %1991 = vxpose.xlu0.b32.cont [3/16] 0.0, 128
        %1992 = vxpose.xlu0.b32.cont [4/16] 0.0, 128
        %1993 = vxpose.xlu0.b32.cont [5/16] 0.0, 128
        %1994 = vxpose.xlu0.b32.cont [6/16] 0.0, 128
        %1995 = vxpose.xlu0.b32.cont [7/16] 0.0, 128
        %1996 = vxpose.xlu0.b32.cont [8/16] 0.0, 128
        %1997 = vxpose.xlu0.b32.cont [9/16] 0.0, 128
        %1998 = vxpose.xlu0.b32.cont [10/16] 0.0, 128
        %1999 = vxpose.xlu0.b32.cont [11/16] 0.0, 128
        %2000 = vxpose.xlu0.b32.cont [12/16] 0.0, 128
        %2001 = vxpose.xlu0.b32.cont [13/16] 0.0, 128
        %2002 = vxpose.xlu0.b32.cont [14/16] 0.0, 128
        %2003 = vxpose.xlu0.b32.cont [15/16] 0.0, 128
        %2004 = vxpose.xlu0.b32.end [16/16] 0.0, 128
        %v2005 = vpop.trf.xlu0
        %v2006 = vpop.trf.xlu0
        %v2007 = vpop.trf.xlu0
        %v2008 = vpop.trf.xlu0
        %v2009 = vpop.trf.xlu0
        %v2010 = vpop.trf.xlu0
        %v2011 = vpop.trf.xlu0
        %v2012 = vpop.trf.xlu0
        %v2013 = vpop.trf.xlu0
        %v2014 = vpop.trf.xlu0
        %v2015 = vpop.trf.xlu0
        %v2016 = vpop.trf.xlu0
        %v2017 = vpop.trf.xlu0
        %v2018 = vpop.trf.xlu0
        %v2019 = vpop.trf.xlu0
        %v2020 = vpop.trf.xlu0
        %2021 = vxpose.xlu0.b32.start [1/16] %v1889, 128
        %2022 = vxpose.xlu0.b32.cont [2/16] 0.0, 128
        %2023 = vxpose.xlu0.b32.cont [3/16] 0.0, 128
        %2024 = vxpose.xlu0.b32.cont [4/16] 0.0, 128
        %2025 = vxpose.xlu0.b32.cont [5/16] 0.0, 128
        %2026 = vxpose.xlu0.b32.cont [6/16] 0.0, 128
        %2027 = vxpose.xlu0.b32.cont [7/16] 0.0, 128
        %2028 = vxpose.xlu0.b32.cont [8/16] 0.0, 128
        %2029 = vxpose.xlu0.b32.cont [9/16] 0.0, 128
        %2030 = vxpose.xlu0.b32.cont [10/16] 0.0, 128
        %2031 = vxpose.xlu0.b32.cont [11/16] 0.0, 128
        %2032 = vxpose.xlu0.b32.cont [12/16] 0.0, 128
        %2033 = vxpose.xlu0.b32.cont [13/16] 0.0, 128
        %2034 = vxpose.xlu0.b32.cont [14/16] 0.0, 128
        %2035 = vxpose.xlu0.b32.cont [15/16] 0.0, 128
        %2036 = vxpose.xlu0.b32.end [16/16] 0.0, 128
        %v2037 = vpop.trf.xlu0
        %v2038 = vpop.trf.xlu0
        %v2039 = vpop.trf.xlu0
        %v2040 = vpop.trf.xlu0
        %v2041 = vpop.trf.xlu0
        %v2042 = vpop.trf.xlu0
        %v2043 = vpop.trf.xlu0
        %v2044 = vpop.trf.xlu0
        %v2045 = vpop.trf.xlu0
        %v2046 = vpop.trf.xlu0
        %v2047 = vpop.trf.xlu0
        %v2048 = vpop.trf.xlu0
        %v2049 = vpop.trf.xlu0
        %v2050 = vpop.trf.xlu0
        %v2051 = vpop.trf.xlu0
        %v2052 = vpop.trf.xlu0
        %2053 = vxpose.xlu0.b32.start [1/16] %v1890, 128
        %2054 = vxpose.xlu0.b32.cont [2/16] 0.0, 128
        %2055 = vxpose.xlu0.b32.cont [3/16] 0.0, 128
        %2056 = vxpose.xlu0.b32.cont [4/16] 0.0, 128
        %2057 = vxpose.xlu0.b32.cont [5/16] 0.0, 128
        %2058 = vxpose.xlu0.b32.cont [6/16] 0.0, 128
        %2059 = vxpose.xlu0.b32.cont [7/16] 0.0, 128
        %2060 = vxpose.xlu0.b32.cont [8/16] 0.0, 128
        %2061 = vxpose.xlu0.b32.cont [9/16] 0.0, 128
        %2062 = vxpose.xlu0.b32.cont [10/16] 0.0, 128
        %2063 = vxpose.xlu0.b32.cont [11/16] 0.0, 128
        %2064 = vxpose.xlu0.b32.cont [12/16] 0.0, 128
        %2065 = vxpose.xlu0.b32.cont [13/16] 0.0, 128
        %2066 = vxpose.xlu0.b32.cont [14/16] 0.0, 128
        %2067 = vxpose.xlu0.b32.cont [15/16] 0.0, 128
        %2068 = vxpose.xlu0.b32.end [16/16] 0.0, 128
        %v2069 = vpop.trf.xlu0
        %v2070 = vpop.trf.xlu0
        %v2071 = vpop.trf.xlu0
        %v2072 = vpop.trf.xlu0
        %v2073 = vpop.trf.xlu0
        %v2074 = vpop.trf.xlu0
        %v2075 = vpop.trf.xlu0
        %v2076 = vpop.trf.xlu0
        %v2077 = vpop.trf.xlu0
        %v2078 = vpop.trf.xlu0
        %v2079 = vpop.trf.xlu0
        %v2080 = vpop.trf.xlu0
        %v2081 = vpop.trf.xlu0
        %v2082 = vpop.trf.xlu0
        %v2083 = vpop.trf.xlu0
        %v2084 = vpop.trf.xlu0
        %2085 = vxpose.xlu0.b32.start [1/16] %v1891, 128
        %2086 = vxpose.xlu0.b32.cont [2/16] 0.0, 128
        %2087 = vxpose.xlu0.b32.cont [3/16] 0.0, 128
        %2088 = vxpose.xlu0.b32.cont [4/16] 0.0, 128
        %2089 = vxpose.xlu0.b32.cont [5/16] 0.0, 128
        %2090 = vxpose.xlu0.b32.cont [6/16] 0.0, 128
        %2091 = vxpose.xlu0.b32.cont [7/16] 0.0, 128
        %2092 = vxpose.xlu0.b32.cont [8/16] 0.0, 128
        %2093 = vxpose.xlu0.b32.cont [9/16] 0.0, 128
        %2094 = vxpose.xlu0.b32.cont [10/16] 0.0, 128
        %2095 = vxpose.xlu0.b32.cont [11/16] 0.0, 128
        %2096 = vxpose.xlu0.b32.cont [12/16] 0.0, 128
        %2097 = vxpose.xlu0.b32.cont [13/16] 0.0, 128
        %2098 = vxpose.xlu0.b32.cont [14/16] 0.0, 128
        %2099 = vxpose.xlu0.b32.cont [15/16] 0.0, 128
        %2100 = vxpose.xlu0.b32.end [16/16] 0.0, 128
        %v2101 = vpop.trf.xlu0
        %v2102 = vpop.trf.xlu0
        %v2103 = vpop.trf.xlu0
        %v2104 = vpop.trf.xlu0
        %v2105 = vpop.trf.xlu0
        %v2106 = vpop.trf.xlu0
        %v2107 = vpop.trf.xlu0
        %v2108 = vpop.trf.xlu0
        %v2109 = vpop.trf.xlu0
        %v2110 = vpop.trf.xlu0
        %v2111 = vpop.trf.xlu0
        %v2112 = vpop.trf.xlu0
        %v2113 = vpop.trf.xlu0
        %v2114 = vpop.trf.xlu0
        %v2115 = vpop.trf.xlu0
        %v2116 = vpop.trf.xlu0
        %2117 = vxpose.xlu0.b32.start [1/16] %v1892, 128
        %2118 = vxpose.xlu0.b32.cont [2/16] 0.0, 128
        %2119 = vxpose.xlu0.b32.cont [3/16] 0.0, 128
        %2120 = vxpose.xlu0.b32.cont [4/16] 0.0, 128
        %2121 = vxpose.xlu0.b32.cont [5/16] 0.0, 128
        %2122 = vxpose.xlu0.b32.cont [6/16] 0.0, 128
        %2123 = vxpose.xlu0.b32.cont [7/16] 0.0, 128
        %2124 = vxpose.xlu0.b32.cont [8/16] 0.0, 128
        %2125 = vxpose.xlu0.b32.cont [9/16] 0.0, 128
        %2126 = vxpose.xlu0.b32.cont [10/16] 0.0, 128
        %2127 = vxpose.xlu0.b32.cont [11/16] 0.0, 128
        %2128 = vxpose.xlu0.b32.cont [12/16] 0.0, 128
        %2129 = vxpose.xlu0.b32.cont [13/16] 0.0, 128
        %2130 = vxpose.xlu0.b32.cont [14/16] 0.0, 128
        %2131 = vxpose.xlu0.b32.cont [15/16] 0.0, 128
        %2132 = vxpose.xlu0.b32.end [16/16] 0.0, 128
        %v2133 = vpop.trf.xlu0
        %v2134 = vpop.trf.xlu0
        %v2135 = vpop.trf.xlu0
        %v2136 = vpop.trf.xlu0
        %v2137 = vpop.trf.xlu0
        %v2138 = vpop.trf.xlu0
        %v2139 = vpop.trf.xlu0
        %v2140 = vpop.trf.xlu0
        %v2141 = vpop.trf.xlu0
        %v2142 = vpop.trf.xlu0
        %v2143 = vpop.trf.xlu0
        %v2144 = vpop.trf.xlu0
        %v2145 = vpop.trf.xlu0
        %v2146 = vpop.trf.xlu0
        %v2147 = vpop.trf.xlu0
        %v2148 = vpop.trf.xlu0
        %v2149 = vcombine.low %v1909, %v1973
        %v2150 = vcombine.high %v1909, %v1973
        %v2152 = vunpack.c.l.s4 1983009808
        %v2153 = vunpack.c.0.s8 %v2152
        %v2154 = vlaneseq
        %v2155 = vshrl.u32 %v2154, 7
        %v2156 = vsub.s32 %v2153, %v2155
        %v2157 = vrot.slane %v2149, %v2156
        %v2159 = vunpack.c.l.s4 1983009808
        %v2160 = vunpack.c.0.s8 %v2159
        %v2161 = vlaneseq
        %v2162 = vshrl.u32 %v2161, 7
        %v2163 = vsub.s32 %v2160, %v2162
        %v2164 = vrot.slane %v2150, %v2163
        %v2165 = vcombine.low %v1941, %v2005
        %v2166 = vcombine.high %v1941, %v2005
        %v2168 = vunpack.c.l.s4 1983009808
        %v2169 = vunpack.c.0.s8 %v2168
        %v2170 = vlaneseq
        %v2171 = vshrl.u32 %v2170, 7
        %v2172 = vsub.s32 %v2169, %v2171
        %v2173 = vrot.slane %v2165, %v2172
        %v2175 = vunpack.c.l.s4 1983009808
        %v2176 = vunpack.c.0.s8 %v2175
        %v2177 = vlaneseq
        %v2178 = vshrl.u32 %v2177, 7
        %v2179 = vsub.s32 %v2176, %v2178
        %v2180 = vrot.slane %v2166, %v2179
        %v2181 = vcombine.low %v2037, %v2101
        %v2182 = vcombine.high %v2037, %v2101
        %v2184 = vunpack.c.l.s4 1983009808
        %v2185 = vunpack.c.0.s8 %v2184
        %v2186 = vlaneseq
        %v2187 = vshrl.u32 %v2186, 7
        %v2188 = vsub.s32 %v2185, %v2187
        %v2189 = vrot.slane %v2181, %v2188
        %v2191 = vunpack.c.l.s4 1983009808
        %v2192 = vunpack.c.0.s8 %v2191
        %v2193 = vlaneseq
        %v2194 = vshrl.u32 %v2193, 7
        %v2195 = vsub.s32 %v2192, %v2194
        %v2196 = vrot.slane %v2182, %v2195
        %v2197 = vcombine.low %v2069, %v2133
        %v2198 = vcombine.high %v2069, %v2133
        %v2200 = vunpack.c.l.s4 1983009808
        %v2201 = vunpack.c.0.s8 %v2200
        %v2202 = vlaneseq
        %v2203 = vshrl.u32 %v2202, 7
        %v2204 = vsub.s32 %v2201, %v2203
        %v2205 = vrot.slane %v2197, %v2204
        %v2207 = vunpack.c.l.s4 1983009808
        %v2208 = vunpack.c.0.s8 %v2207
        %v2209 = vlaneseq
        %v2210 = vshrl.u32 %v2209, 7
        %v2211 = vsub.s32 %v2208, %v2210
        %v2212 = vrot.slane %v2198, %v2211
        %v2213 = vcombine.low %v2157, %v2173
        %v2214 = vcombine.high %v2157, %v2173
        %v2216 = vunpack.c.l.s4 1934713408
        %v2217 = vunpack.c.0.s8 %v2216
        %v2218 = vlaneseq
        %v2219 = vshrl.u32 %v2218, 7
        %v2220 = vsub.s32 %v2217, %v2219
        %v2221 = vrot.slane %v2213, %v2220
        %v2223 = vunpack.c.l.s4 1934713408
        %v2224 = vunpack.c.0.s8 %v2223
        %v2225 = vlaneseq
        %v2226 = vshrl.u32 %v2225, 7
        %v2227 = vsub.s32 %v2224, %v2226
        %v2228 = vrot.slane %v2214, %v2227
        %v2229 = vcombine.low %v2164, %v2180
        %v2230 = vcombine.high %v2164, %v2180
        %v2232 = vunpack.c.l.s4 1934713408
        %v2233 = vunpack.c.0.s8 %v2232
        %v2234 = vlaneseq
        %v2235 = vshrl.u32 %v2234, 7
        %v2236 = vsub.s32 %v2233, %v2235
        %v2237 = vrot.slane %v2229, %v2236
        %v2239 = vunpack.c.l.s4 1934713408
        %v2240 = vunpack.c.0.s8 %v2239
        %v2241 = vlaneseq
        %v2242 = vshrl.u32 %v2241, 7
        %v2243 = vsub.s32 %v2240, %v2242
        %v2244 = vrot.slane %v2230, %v2243
        %v2245 = vcombine.low %v2189, %v2205
        %v2246 = vcombine.high %v2189, %v2205
        %v2248 = vunpack.c.l.s4 1934713408
        %v2249 = vunpack.c.0.s8 %v2248
        %v2250 = vlaneseq
        %v2251 = vshrl.u32 %v2250, 7
        %v2252 = vsub.s32 %v2249, %v2251
        %v2253 = vrot.slane %v2245, %v2252
        %v2255 = vunpack.c.l.s4 1934713408
        %v2256 = vunpack.c.0.s8 %v2255
        %v2257 = vlaneseq
        %v2258 = vshrl.u32 %v2257, 7
        %v2259 = vsub.s32 %v2256, %v2258
        %v2260 = vrot.slane %v2246, %v2259
        %v2261 = vcombine.low %v2196, %v2212
        %v2262 = vcombine.high %v2196, %v2212
        %v2264 = vunpack.c.l.s4 1934713408
        %v2265 = vunpack.c.0.s8 %v2264
        %v2266 = vlaneseq
        %v2267 = vshrl.u32 %v2266, 7
        %v2268 = vsub.s32 %v2265, %v2267
        %v2269 = vrot.slane %v2261, %v2268
        %v2271 = vunpack.c.l.s4 1934713408
        %v2272 = vunpack.c.0.s8 %v2271
        %v2273 = vlaneseq
        %v2274 = vshrl.u32 %v2273, 7
        %v2275 = vsub.s32 %v2272, %v2274
        %v2276 = vrot.slane %v2262, %v2275
        %v2277 = vcombine.low %v2221, %v2253
        %v2278 = vcombine.high %v2221, %v2253
        %v2279 = vcombine.low %v2228, %v2260
        %v2280 = vcombine.high %v2228, %v2260
        %v2281 = vcombine.low %v2237, %v2269
        %v2282 = vcombine.high %v2237, %v2269
        %v2283 = vcombine.low %v2244, %v2276
        %v2284 = vcombine.high %v2244, %v2276
        %v2285 = vcombine.low %v1910, %v1974
        %v2286 = vcombine.high %v1910, %v1974
        %v2288 = vunpack.c.l.s4 1983009808
        %v2289 = vunpack.c.0.s8 %v2288
        %v2290 = vlaneseq
        %v2291 = vshrl.u32 %v2290, 7
        %v2292 = vsub.s32 %v2289, %v2291
        %v2293 = vrot.slane %v2285, %v2292
        %v2295 = vunpack.c.l.s4 1983009808
        %v2296 = vunpack.c.0.s8 %v2295
        %v2297 = vlaneseq
        %v2298 = vshrl.u32 %v2297, 7
        %v2299 = vsub.s32 %v2296, %v2298
        %v2300 = vrot.slane %v2286, %v2299
        %v2301 = vcombine.low %v1942, %v2006
        %v2302 = vcombine.high %v1942, %v2006
        %v2304 = vunpack.c.l.s4 1983009808
        %v2305 = vunpack.c.0.s8 %v2304
        %v2306 = vlaneseq
        %v2307 = vshrl.u32 %v2306, 7
        %v2308 = vsub.s32 %v2305, %v2307
        %v2309 = vrot.slane %v2301, %v2308
        %v2311 = vunpack.c.l.s4 1983009808
        %v2312 = vunpack.c.0.s8 %v2311
        %v2313 = vlaneseq
        %v2314 = vshrl.u32 %v2313, 7
        %v2315 = vsub.s32 %v2312, %v2314
        %v2316 = vrot.slane %v2302, %v2315
        %v2317 = vcombine.low %v2038, %v2102
        %v2318 = vcombine.high %v2038, %v2102
        %v2320 = vunpack.c.l.s4 1983009808
        %v2321 = vunpack.c.0.s8 %v2320
        %v2322 = vlaneseq
        %v2323 = vshrl.u32 %v2322, 7
        %v2324 = vsub.s32 %v2321, %v2323
        %v2325 = vrot.slane %v2317, %v2324
        %v2327 = vunpack.c.l.s4 1983009808
        %v2328 = vunpack.c.0.s8 %v2327
        %v2329 = vlaneseq
        %v2330 = vshrl.u32 %v2329, 7
        %v2331 = vsub.s32 %v2328, %v2330
        %v2332 = vrot.slane %v2318, %v2331
        %v2333 = vcombine.low %v2070, %v2134
        %v2334 = vcombine.high %v2070, %v2134
        %v2336 = vunpack.c.l.s4 1983009808
        %v2337 = vunpack.c.0.s8 %v2336
        %v2338 = vlaneseq
        %v2339 = vshrl.u32 %v2338, 7
        %v2340 = vsub.s32 %v2337, %v2339
        %v2341 = vrot.slane %v2333, %v2340
        %v2343 = vunpack.c.l.s4 1983009808
        %v2344 = vunpack.c.0.s8 %v2343
        %v2345 = vlaneseq
        %v2346 = vshrl.u32 %v2345, 7
        %v2347 = vsub.s32 %v2344, %v2346
        %v2348 = vrot.slane %v2334, %v2347
        %v2349 = vcombine.low %v2293, %v2309
        %v2350 = vcombine.high %v2293, %v2309
        %v2352 = vunpack.c.l.s4 1934713408
        %v2353 = vunpack.c.0.s8 %v2352
        %v2354 = vlaneseq
        %v2355 = vshrl.u32 %v2354, 7
        %v2356 = vsub.s32 %v2353, %v2355
        %v2357 = vrot.slane %v2349, %v2356
        %v2359 = vunpack.c.l.s4 1934713408
        %v2360 = vunpack.c.0.s8 %v2359
        %v2361 = vlaneseq
        %v2362 = vshrl.u32 %v2361, 7
        %v2363 = vsub.s32 %v2360, %v2362
        %v2364 = vrot.slane %v2350, %v2363
        %v2365 = vcombine.low %v2300, %v2316
        %v2366 = vcombine.high %v2300, %v2316
        %v2368 = vunpack.c.l.s4 1934713408
        %v2369 = vunpack.c.0.s8 %v2368
        %v2370 = vlaneseq
        %v2371 = vshrl.u32 %v2370, 7
        %v2372 = vsub.s32 %v2369, %v2371
        %v2373 = vrot.slane %v2365, %v2372
        %v2375 = vunpack.c.l.s4 1934713408
        %v2376 = vunpack.c.0.s8 %v2375
        %v2377 = vlaneseq
        %v2378 = vshrl.u32 %v2377, 7
        %v2379 = vsub.s32 %v2376, %v2378
        %v2380 = vrot.slane %v2366, %v2379
        %v2381 = vcombine.low %v2325, %v2341
        %v2382 = vcombine.high %v2325, %v2341
        %v2384 = vunpack.c.l.s4 1934713408
        %v2385 = vunpack.c.0.s8 %v2384
        %v2386 = vlaneseq
        %v2387 = vshrl.u32 %v2386, 7
        %v2388 = vsub.s32 %v2385, %v2387
        %v2389 = vrot.slane %v2381, %v2388
        %v2391 = vunpack.c.l.s4 1934713408
        %v2392 = vunpack.c.0.s8 %v2391
        %v2393 = vlaneseq
        %v2394 = vshrl.u32 %v2393, 7
        %v2395 = vsub.s32 %v2392, %v2394
        %v2396 = vrot.slane %v2382, %v2395
        %v2397 = vcombine.low %v2332, %v2348
        %v2398 = vcombine.high %v2332, %v2348
        %v2400 = vunpack.c.l.s4 1934713408
        %v2401 = vunpack.c.0.s8 %v2400
        %v2402 = vlaneseq
        %v2403 = vshrl.u32 %v2402, 7
        %v2404 = vsub.s32 %v2401, %v2403
        %v2405 = vrot.slane %v2397, %v2404
        %v2407 = vunpack.c.l.s4 1934713408
        %v2408 = vunpack.c.0.s8 %v2407
        %v2409 = vlaneseq
        %v2410 = vshrl.u32 %v2409, 7
        %v2411 = vsub.s32 %v2408, %v2410
        %v2412 = vrot.slane %v2398, %v2411
        %v2413 = vcombine.low %v2357, %v2389
        %v2414 = vcombine.high %v2357, %v2389
        %v2415 = vcombine.low %v2364, %v2396
        %v2416 = vcombine.high %v2364, %v2396
        %v2417 = vcombine.low %v2373, %v2405
        %v2418 = vcombine.high %v2373, %v2405
        %v2419 = vcombine.low %v2380, %v2412
        %v2420 = vcombine.high %v2380, %v2412
        %2422 = vrot.lane.b32.xlu0 %v2278, 8
        %v2423 = vpop.permute.xlu0 %2422
        %2426 = vrot.lane.b32.xlu0 %v2279, 16
        %v2427 = vpop.permute.xlu0 %2426
        %2430 = vrot.lane.b32.xlu0 %v2280, 24
        %v2431 = vpop.permute.xlu0 %2430
        %2434 = vrot.lane.b32.xlu0 %v2281, 32
        %v2435 = vpop.permute.xlu0 %2434
        %2438 = vrot.lane.b32.xlu0 %v2282, 40
        %v2439 = vpop.permute.xlu0 %2438
        %2442 = vrot.lane.b32.xlu0 %v2283, 48
        %v2443 = vpop.permute.xlu0 %2442
        %2446 = vrot.lane.b32.xlu0 %v2284, 56
        %v2447 = vpop.permute.xlu0 %2446
        %2450 = vrot.lane.b32.xlu0 %v2413, 64
        %v2451 = vpop.permute.xlu0 %2450
        %2454 = vrot.lane.b32.xlu0 %v2414, 72
        %v2455 = vpop.permute.xlu0 %2454
        %2458 = vrot.lane.b32.xlu0 %v2415, 80
        %v2459 = vpop.permute.xlu0 %2458
        %2462 = vrot.lane.b32.xlu0 %v2416, 88
        %v2463 = vpop.permute.xlu0 %2462
        %2466 = vrot.lane.b32.xlu0 %v2417, 96
        %v2467 = vpop.permute.xlu0 %2466
        %2470 = vrot.lane.b32.xlu0 %v2418, 104
        %v2471 = vpop.permute.xlu0 %2470
        %2474 = vrot.lane.b32.xlu0 %v2419, 112
        %v2475 = vpop.permute.xlu0 %2474
        %2478 = vrot.lane.b32.xlu0 %v2420, 120
        %v2479 = vpop.permute.xlu0 %2478
        %v2481 = vsel %vm906, %v2277, %v2423
        %v2482 = vsel %vm497, %v2481, %v2427
        %vm2483 = vcmask 195584
        %v2484 = vsel %vm2483, %v2482, %v2431
        %v2485 = vsel %vm423, %v2484, %v2435
        %vm2486 = vcmask 326656
        %v2487 = vsel %vm2486, %v2485, %v2439
        %vm2488 = vcmask 392192
        %v2489 = vsel %vm2488, %v2487, %v2443
        %vm2490 = vcmask 457728
        %v2491 = vsel %vm2490, %v2489, %v2447
        %v2492 = vsel %vm581, %v2491, %v2451
        %vm2493 = vcmask 588800
        %v2494 = vsel %vm2493, %v2492, %v2455
        %vm2495 = vcmask 654336
        %v2496 = vsel %vm2495, %v2494, %v2459
        %vm2497 = vcmask 719872
        %v2498 = vsel %vm2497, %v2496, %v2463
        %vm2499 = vcmask 785408
        %v2500 = vsel %vm2499, %v2498, %v2467
        %vm2501 = vcmask 850944
        %v2502 = vsel %vm2501, %v2500, %v2471
        %vm2503 = vcmask 916480
        %v2504 = vsel %vm2503, %v2502, %v2475
        %vm2505 = vcmask 982016
        %v2506 = vsel %vm2505, %v2504, %v2479
        %2507 = vst [vmem:[%s398] sm:$0xff] %v2506
        %v2508 = vpack.c.bf16 %v1749, %v1749
        %v2509 = vpack.c.bf16 %v1750, %v1750
        %v2510 = vpack.c.bf16 %v1751, %v1751
        %v2511 = vpack.c.bf16 %v1752, %v1752
        %v2512 = vpack.c.bf16 %v1753, %v1753
        %v2513 = vpack.c.bf16 %v1754, %v1754
        %v2514 = vpack.c.bf16 %v1755, %v1755
        %v2515 = vpack.c.bf16 %v1756, %v1756
        %v2516 = vld [vmem:[%s6] sm:$0xf]
        %v2517 = vld [vmem:[%s6 + $0x4] sm:$0xf]
        %v2518 = vld [vmem:[%s6 + $0x8] sm:$0xf]
        %v2519 = vld [vmem:[%s6 + $0xc] sm:$0xf]
        %v2520 = vld [vmem:[%s6 + $0x10] sm:$0xf]
        %v2521 = vld [vmem:[%s6 + $0x14] sm:$0xf]
        %v2522 = vld [vmem:[%s6 + $0x18] sm:$0xf]
        %v2523 = vld [vmem:[%s6 + $0x1c] sm:$0xf]
        %v2524 = vld [vmem:[%s6 + $0x20] sm:$0xf]
        %v2525 = vld [vmem:[%s6 + $0x24] sm:$0xf]
        %v2526 = vld [vmem:[%s6 + $0x28] sm:$0xf]
        %v2527 = vld [vmem:[%s6 + $0x2c] sm:$0xf]
        %v2528 = vld [vmem:[%s6 + $0x30] sm:$0xf]
        %v2529 = vld [vmem:[%s6 + $0x34] sm:$0xf]
        %v2530 = vld [vmem:[%s6 + $0x38] sm:$0xf]
        %v2531 = vld [vmem:[%s6 + $0x3c] sm:$0xf]
        %v2534 = vunpack.c.l.b16 %v2516
        %v2535 = vunpack.c.l.b16 %v2517
        %v2536 = vpack.c.b16 %v2535, %v2534
        %v2539 = vsel %vm497, %v2508, 0
        %2541 = vmatprep.subr.bf16.mxu0 0
        %2542 = vmatpush1.bf16.msra.mxu0 %v2536
        %2543 = vmatprep.subr.bf16.mxu0 0
        %2544 = vmatpush1.bf16.msra.mxu0 0
        %2545 = vmatprep.subr.bf16.mxu0 0
        %2546 = vmatpush1.bf16.msra.mxu0 0
        %2547 = vmatprep.subr.bf16.mxu0 0
        %2548 = vmatpush1.bf16.msra.mxu0 0
        %2549 = vmatprep.subr.bf16.mxu0 0
        %2550 = vmatpush1.bf16.msra.mxu0 0
        %2551 = vmatprep.subr.bf16.mxu0 0
        %2552 = vmatpush1.bf16.msra.mxu0 0
        %2553 = vmatprep.subr.bf16.mxu0 0
        %2554 = vmatpush1.bf16.msra.mxu0 0
        %2555 = vmatprep.subr.bf16.mxu0 0
        %2556 = vmatpush1.bf16.msra.mxu0 0
        %2557 = vmatprep.subr.bf16.mxu0 0
        %2558 = vmatpush1.bf16.msra.mxu0 0
        %2559 = vmatprep.subr.bf16.mxu0 0
        %2560 = vmatpush1.bf16.msra.mxu0 0
        %2561 = vmatprep.subr.bf16.mxu0 0
        %2562 = vmatpush1.bf16.msra.mxu0 0
        %2563 = vmatprep.subr.bf16.mxu0 0
        %2564 = vmatpush1.bf16.msra.mxu0 0
        %2565 = vmatprep.subr.bf16.mxu0 0
        %2566 = vmatpush1.bf16.msra.mxu0 0
        %2567 = vmatprep.subr.bf16.mxu0 0
        %2568 = vmatpush1.bf16.msra.mxu0 0
        %2569 = vmatprep.subr.bf16.mxu0 0
        %2570 = vmatpush1.bf16.msra.mxu0 0
        %2571 = vmatprep.subr.bf16.mxu0 0
        %2572 = vmatpush1.bf16.msra.mxu0 0
        %2573 = vmatprep.mubr.bf16.mxu0 0
        %2574 = vmatmul.mubr.bf16.gmra.mrb[0].mxu0 %v2539
        %v2575 = vpop.f32.mrb[0].mxu0
        %v2576 = vadd.f32 0.0, %v2575
        %v2577 = vpop.f32.mrb[0].mxu0
        %v2578 = vpop.f32.mrb[0].mxu0
        %v2579 = vpop.f32.mrb[0].mxu0
        %2580 = vdwg.mxu0
        %v2583 = vunpack.c.l.b16 %v2518
        %v2584 = vunpack.c.l.b16 %v2519
        %v2585 = vpack.c.b16 %v2584, %v2583
        %v2588 = vsel %vm497, %v2509, 0
        %2590 = vmatprep.subr.bf16.mxu0 0
        %2591 = vmatpush1.bf16.msra.mxu0 %v2585
        %2592 = vmatprep.subr.bf16.mxu0 0
        %2593 = vmatpush1.bf16.msra.mxu0 0
        %2594 = vmatprep.subr.bf16.mxu0 0
        %2595 = vmatpush1.bf16.msra.mxu0 0
        %2596 = vmatprep.subr.bf16.mxu0 0
        %2597 = vmatpush1.bf16.msra.mxu0 0
        %2598 = vmatprep.subr.bf16.mxu0 0
        %2599 = vmatpush1.bf16.msra.mxu0 0
        %2600 = vmatprep.subr.bf16.mxu0 0
        %2601 = vmatpush1.bf16.msra.mxu0 0
        %2602 = vmatprep.subr.bf16.mxu0 0
        %2603 = vmatpush1.bf16.msra.mxu0 0
        %2604 = vmatprep.subr.bf16.mxu0 0
        %2605 = vmatpush1.bf16.msra.mxu0 0
        %2606 = vmatprep.subr.bf16.mxu0 0
        %2607 = vmatpush1.bf16.msra.mxu0 0
        %2608 = vmatprep.subr.bf16.mxu0 0
        %2609 = vmatpush1.bf16.msra.mxu0 0
        %2610 = vmatprep.subr.bf16.mxu0 0
        %2611 = vmatpush1.bf16.msra.mxu0 0
        %2612 = vmatprep.subr.bf16.mxu0 0
        %2613 = vmatpush1.bf16.msra.mxu0 0
        %2614 = vmatprep.subr.bf16.mxu0 0
        %2615 = vmatpush1.bf16.msra.mxu0 0
        %2616 = vmatprep.subr.bf16.mxu0 0
        %2617 = vmatpush1.bf16.msra.mxu0 0
        %2618 = vmatprep.subr.bf16.mxu0 0
        %2619 = vmatpush1.bf16.msra.mxu0 0
        %2620 = vmatprep.subr.bf16.mxu0 0
        %2621 = vmatpush1.bf16.msra.mxu0 0
        %2622 = vmatprep.mubr.bf16.mxu0 0
        %2623 = vmatmul.mubr.bf16.gmra.mrb[0].mxu0 %v2588
        %v2624 = vpop.f32.mrb[0].mxu0
        %v2625 = vadd.f32 0.0, %v2624
        %v2626 = vpop.f32.mrb[0].mxu0
        %v2627 = vpop.f32.mrb[0].mxu0
        %v2628 = vpop.f32.mrb[0].mxu0
        %2629 = vdwg.mxu0
        %v2632 = vunpack.c.l.b16 %v2520
        %v2633 = vunpack.c.l.b16 %v2521
        %v2634 = vpack.c.b16 %v2633, %v2632
        %v2637 = vsel %vm497, %v2510, 0
        %2639 = vmatprep.subr.bf16.mxu0 0
        %2640 = vmatpush1.bf16.msra.mxu0 %v2634
        %2641 = vmatprep.subr.bf16.mxu0 0
        %2642 = vmatpush1.bf16.msra.mxu0 0
        %2643 = vmatprep.subr.bf16.mxu0 0
        %2644 = vmatpush1.bf16.msra.mxu0 0
        %2645 = vmatprep.subr.bf16.mxu0 0
        %2646 = vmatpush1.bf16.msra.mxu0 0
        %2647 = vmatprep.subr.bf16.mxu0 0
        %2648 = vmatpush1.bf16.msra.mxu0 0
        %2649 = vmatprep.subr.bf16.mxu0 0
        %2650 = vmatpush1.bf16.msra.mxu0 0
        %2651 = vmatprep.subr.bf16.mxu0 0
        %2652 = vmatpush1.bf16.msra.mxu0 0
        %2653 = vmatprep.subr.bf16.mxu0 0
        %2654 = vmatpush1.bf16.msra.mxu0 0
        %2655 = vmatprep.subr.bf16.mxu0 0
        %2656 = vmatpush1.bf16.msra.mxu0 0
        %2657 = vmatprep.subr.bf16.mxu0 0
        %2658 = vmatpush1.bf16.msra.mxu0 0
        %2659 = vmatprep.subr.bf16.mxu0 0
        %2660 = vmatpush1.bf16.msra.mxu0 0
        %2661 = vmatprep.subr.bf16.mxu0 0
        %2662 = vmatpush1.bf16.msra.mxu0 0
        %2663 = vmatprep.subr.bf16.mxu0 0
        %2664 = vmatpush1.bf16.msra.mxu0 0
        %2665 = vmatprep.subr.bf16.mxu0 0
        %2666 = vmatpush1.bf16.msra.mxu0 0
        %2667 = vmatprep.subr.bf16.mxu0 0
        %2668 = vmatpush1.bf16.msra.mxu0 0
        %2669 = vmatprep.subr.bf16.mxu0 0
        %2670 = vmatpush1.bf16.msra.mxu0 0
        %2671 = vmatprep.mubr.bf16.mxu0 0
        %2672 = vmatmul.mubr.bf16.gmra.mrb[0].mxu0 %v2637
        %v2673 = vpop.f32.mrb[0].mxu0
        %v2674 = vadd.f32 0.0, %v2673
        %v2675 = vpop.f32.mrb[0].mxu0
        %v2676 = vpop.f32.mrb[0].mxu0
        %v2677 = vpop.f32.mrb[0].mxu0
        %2678 = vdwg.mxu0
        %v2681 = vunpack.c.l.b16 %v2522
        %v2682 = vunpack.c.l.b16 %v2523
        %v2683 = vpack.c.b16 %v2682, %v2681
        %v2686 = vsel %vm497, %v2511, 0
        %2688 = vmatprep.subr.bf16.mxu0 0
        %2689 = vmatpush1.bf16.msra.mxu0 %v2683
        %2690 = vmatprep.subr.bf16.mxu0 0
        %2691 = vmatpush1.bf16.msra.mxu0 0
        %2692 = vmatprep.subr.bf16.mxu0 0
        %2693 = vmatpush1.bf16.msra.mxu0 0
        %2694 = vmatprep.subr.bf16.mxu0 0
        %2695 = vmatpush1.bf16.msra.mxu0 0
        %2696 = vmatprep.subr.bf16.mxu0 0
        %2697 = vmatpush1.bf16.msra.mxu0 0
        %2698 = vmatprep.subr.bf16.mxu0 0
        %2699 = vmatpush1.bf16.msra.mxu0 0
        %2700 = vmatprep.subr.bf16.mxu0 0
        %2701 = vmatpush1.bf16.msra.mxu0 0
        %2702 = vmatprep.subr.bf16.mxu0 0
        %2703 = vmatpush1.bf16.msra.mxu0 0
        %2704 = vmatprep.subr.bf16.mxu0 0
        %2705 = vmatpush1.bf16.msra.mxu0 0
        %2706 = vmatprep.subr.bf16.mxu0 0
        %2707 = vmatpush1.bf16.msra.mxu0 0
        %2708 = vmatprep.subr.bf16.mxu0 0
        %2709 = vmatpush1.bf16.msra.mxu0 0
        %2710 = vmatprep.subr.bf16.mxu0 0
        %2711 = vmatpush1.bf16.msra.mxu0 0
        %2712 = vmatprep.subr.bf16.mxu0 0
        %2713 = vmatpush1.bf16.msra.mxu0 0
        %2714 = vmatprep.subr.bf16.mxu0 0
        %2715 = vmatpush1.bf16.msra.mxu0 0
        %2716 = vmatprep.subr.bf16.mxu0 0
        %2717 = vmatpush1.bf16.msra.mxu0 0
        %2718 = vmatprep.subr.bf16.mxu0 0
        %2719 = vmatpush1.bf16.msra.mxu0 0
        %2720 = vmatprep.mubr.bf16.mxu0 0
        %2721 = vmatmul.mubr.bf16.gmra.mrb[0].mxu0 %v2686
        %v2722 = vpop.f32.mrb[0].mxu0
        %v2723 = vadd.f32 0.0, %v2722
        %v2724 = vpop.f32.mrb[0].mxu0
        %v2725 = vpop.f32.mrb[0].mxu0
        %v2726 = vpop.f32.mrb[0].mxu0
        %2727 = vdwg.mxu0
        %v2730 = vunpack.c.l.b16 %v2524
        %v2731 = vunpack.c.l.b16 %v2525
        %v2732 = vpack.c.b16 %v2731, %v2730
        %v2735 = vsel %vm497, %v2512, 0
        %2737 = vmatprep.subr.bf16.mxu0 0
        %2738 = vmatpush1.bf16.msra.mxu0 %v2732
        %2739 = vmatprep.subr.bf16.mxu0 0
        %2740 = vmatpush1.bf16.msra.mxu0 0
        %2741 = vmatprep.subr.bf16.mxu0 0
        %2742 = vmatpush1.bf16.msra.mxu0 0
        %2743 = vmatprep.subr.bf16.mxu0 0
        %2744 = vmatpush1.bf16.msra.mxu0 0
        %2745 = vmatprep.subr.bf16.mxu0 0
        %2746 = vmatpush1.bf16.msra.mxu0 0
        %2747 = vmatprep.subr.bf16.mxu0 0
        %2748 = vmatpush1.bf16.msra.mxu0 0
        %2749 = vmatprep.subr.bf16.mxu0 0
        %2750 = vmatpush1.bf16.msra.mxu0 0
        %2751 = vmatprep.subr.bf16.mxu0 0
        %2752 = vmatpush1.bf16.msra.mxu0 0
        %2753 = vmatprep.subr.bf16.mxu0 0
        %2754 = vmatpush1.bf16.msra.mxu0 0
        %2755 = vmatprep.subr.bf16.mxu0 0
        %2756 = vmatpush1.bf16.msra.mxu0 0
        %2757 = vmatprep.subr.bf16.mxu0 0
        %2758 = vmatpush1.bf16.msra.mxu0 0
        %2759 = vmatprep.subr.bf16.mxu0 0
        %2760 = vmatpush1.bf16.msra.mxu0 0
        %2761 = vmatprep.subr.bf16.mxu0 0
        %2762 = vmatpush1.bf16.msra.mxu0 0
        %2763 = vmatprep.subr.bf16.mxu0 0
        %2764 = vmatpush1.bf16.msra.mxu0 0
        %2765 = vmatprep.subr.bf16.mxu0 0
        %2766 = vmatpush1.bf16.msra.mxu0 0
        %2767 = vmatprep.subr.bf16.mxu0 0
        %2768 = vmatpush1.bf16.msra.mxu0 0
        %2769 = vmatprep.mubr.bf16.mxu0 0
        %2770 = vmatmul.mubr.bf16.gmra.mrb[0].mxu0 %v2735
        %v2771 = vpop.f32.mrb[0].mxu0
        %v2772 = vadd.f32 0.0, %v2771
        %v2773 = vpop.f32.mrb[0].mxu0
        %v2774 = vpop.f32.mrb[0].mxu0
        %v2775 = vpop.f32.mrb[0].mxu0
        %2776 = vdwg.mxu0
        %v2779 = vunpack.c.l.b16 %v2526
        %v2780 = vunpack.c.l.b16 %v2527
        %v2781 = vpack.c.b16 %v2780, %v2779
        %v2784 = vsel %vm497, %v2513, 0
        %2786 = vmatprep.subr.bf16.mxu0 0
        %2787 = vmatpush1.bf16.msra.mxu0 %v2781
        %2788 = vmatprep.subr.bf16.mxu0 0
        %2789 = vmatpush1.bf16.msra.mxu0 0
        %2790 = vmatprep.subr.bf16.mxu0 0
        %2791 = vmatpush1.bf16.msra.mxu0 0
        %2792 = vmatprep.subr.bf16.mxu0 0
        %2793 = vmatpush1.bf16.msra.mxu0 0
        %2794 = vmatprep.subr.bf16.mxu0 0
        %2795 = vmatpush1.bf16.msra.mxu0 0
        %2796 = vmatprep.subr.bf16.mxu0 0
        %2797 = vmatpush1.bf16.msra.mxu0 0
        %2798 = vmatprep.subr.bf16.mxu0 0
        %2799 = vmatpush1.bf16.msra.mxu0 0
        %2800 = vmatprep.subr.bf16.mxu0 0
        %2801 = vmatpush1.bf16.msra.mxu0 0
        %2802 = vmatprep.subr.bf16.mxu0 0
        %2803 = vmatpush1.bf16.msra.mxu0 0
        %2804 = vmatprep.subr.bf16.mxu0 0
        %2805 = vmatpush1.bf16.msra.mxu0 0
        %2806 = vmatprep.subr.bf16.mxu0 0
        %2807 = vmatpush1.bf16.msra.mxu0 0
        %2808 = vmatprep.subr.bf16.mxu0 0
        %2809 = vmatpush1.bf16.msra.mxu0 0
        %2810 = vmatprep.subr.bf16.mxu0 0
        %2811 = vmatpush1.bf16.msra.mxu0 0
        %2812 = vmatprep.subr.bf16.mxu0 0
        %2813 = vmatpush1.bf16.msra.mxu0 0
        %2814 = vmatprep.subr.bf16.mxu0 0
        %2815 = vmatpush1.bf16.msra.mxu0 0
        %2816 = vmatprep.subr.bf16.mxu0 0
        %2817 = vmatpush1.bf16.msra.mxu0 0
        %2818 = vmatprep.mubr.bf16.mxu0 0
        %2819 = vmatmul.mubr.bf16.gmra.mrb[0].mxu0 %v2784
        %v2820 = vpop.f32.mrb[0].mxu0
        %v2821 = vadd.f32 0.0, %v2820
        %v2822 = vpop.f32.mrb[0].mxu0
        %v2823 = vpop.f32.mrb[0].mxu0
        %v2824 = vpop.f32.mrb[0].mxu0
        %2825 = vdwg.mxu0
        %v2828 = vunpack.c.l.b16 %v2528
        %v2829 = vunpack.c.l.b16 %v2529
        %v2830 = vpack.c.b16 %v2829, %v2828
        %v2833 = vsel %vm497, %v2514, 0
        %2835 = vmatprep.subr.bf16.mxu0 0
        %2836 = vmatpush1.bf16.msra.mxu0 %v2830
        %2837 = vmatprep.subr.bf16.mxu0 0
        %2838 = vmatpush1.bf16.msra.mxu0 0
        %2839 = vmatprep.subr.bf16.mxu0 0
        %2840 = vmatpush1.bf16.msra.mxu0 0
        %2841 = vmatprep.subr.bf16.mxu0 0
        %2842 = vmatpush1.bf16.msra.mxu0 0
        %2843 = vmatprep.subr.bf16.mxu0 0
        %2844 = vmatpush1.bf16.msra.mxu0 0
        %2845 = vmatprep.subr.bf16.mxu0 0
        %2846 = vmatpush1.bf16.msra.mxu0 0
        %2847 = vmatprep.subr.bf16.mxu0 0
        %2848 = vmatpush1.bf16.msra.mxu0 0
        %2849 = vmatprep.subr.bf16.mxu0 0
        %2850 = vmatpush1.bf16.msra.mxu0 0
        %2851 = vmatprep.subr.bf16.mxu0 0
        %2852 = vmatpush1.bf16.msra.mxu0 0
        %2853 = vmatprep.subr.bf16.mxu0 0
        %2854 = vmatpush1.bf16.msra.mxu0 0
        %2855 = vmatprep.subr.bf16.mxu0 0
        %2856 = vmatpush1.bf16.msra.mxu0 0
        %2857 = vmatprep.subr.bf16.mxu0 0
        %2858 = vmatpush1.bf16.msra.mxu0 0
        %2859 = vmatprep.subr.bf16.mxu0 0
        %2860 = vmatpush1.bf16.msra.mxu0 0
        %2861 = vmatprep.subr.bf16.mxu0 0
        %2862 = vmatpush1.bf16.msra.mxu0 0
        %2863 = vmatprep.subr.bf16.mxu0 0
        %2864 = vmatpush1.bf16.msra.mxu0 0
        %2865 = vmatprep.subr.bf16.mxu0 0
        %2866 = vmatpush1.bf16.msra.mxu0 0
        %2867 = vmatprep.mubr.bf16.mxu0 0
        %2868 = vmatmul.mubr.bf16.gmra.mrb[0].mxu0 %v2833
        %v2869 = vpop.f32.mrb[0].mxu0
        %v2870 = vadd.f32 0.0, %v2869
        %v2871 = vpop.f32.mrb[0].mxu0
        %v2872 = vpop.f32.mrb[0].mxu0
        %v2873 = vpop.f32.mrb[0].mxu0
        %2874 = vdwg.mxu0
        %v2877 = vunpack.c.l.b16 %v2530
        %v2878 = vunpack.c.l.b16 %v2531
        %v2879 = vpack.c.b16 %v2878, %v2877
        %v2882 = vsel %vm497, %v2515, 0
        %2884 = vmatprep.subr.bf16.mxu0 0
        %2885 = vmatpush1.bf16.msra.mxu0 %v2879
        %2886 = vmatprep.subr.bf16.mxu0 0
        %2887 = vmatpush1.bf16.msra.mxu0 0
        %2888 = vmatprep.subr.bf16.mxu0 0
        %2889 = vmatpush1.bf16.msra.mxu0 0
        %2890 = vmatprep.subr.bf16.mxu0 0
        %2891 = vmatpush1.bf16.msra.mxu0 0
        %2892 = vmatprep.subr.bf16.mxu0 0
        %2893 = vmatpush1.bf16.msra.mxu0 0
        %2894 = vmatprep.subr.bf16.mxu0 0
        %2895 = vmatpush1.bf16.msra.mxu0 0
        %2896 = vmatprep.subr.bf16.mxu0 0
        %2897 = vmatpush1.bf16.msra.mxu0 0
        %2898 = vmatprep.subr.bf16.mxu0 0
        %2899 = vmatpush1.bf16.msra.mxu0 0
        %2900 = vmatprep.subr.bf16.mxu0 0
        %2901 = vmatpush1.bf16.msra.mxu0 0
        %2902 = vmatprep.subr.bf16.mxu0 0
        %2903 = vmatpush1.bf16.msra.mxu0 0
        %2904 = vmatprep.subr.bf16.mxu0 0
        %2905 = vmatpush1.bf16.msra.mxu0 0
        %2906 = vmatprep.subr.bf16.mxu0 0
        %2907 = vmatpush1.bf16.msra.mxu0 0
        %2908 = vmatprep.subr.bf16.mxu0 0
        %2909 = vmatpush1.bf16.msra.mxu0 0
        %2910 = vmatprep.subr.bf16.mxu0 0
        %2911 = vmatpush1.bf16.msra.mxu0 0
        %2912 = vmatprep.subr.bf16.mxu0 0
        %2913 = vmatpush1.bf16.msra.mxu0 0
        %2914 = vmatprep.subr.bf16.mxu0 0
        %2915 = vmatpush1.bf16.msra.mxu0 0
        %2916 = vmatprep.mubr.bf16.mxu0 0
        %2917 = vmatmul.mubr.bf16.gmra.mrb[0].mxu0 %v2882
        %v2918 = vpop.f32.mrb[0].mxu0
        %v2919 = vadd.f32 0.0, %v2918
        %v2920 = vpop.f32.mrb[0].mxu0
        %v2921 = vpop.f32.mrb[0].mxu0
        %v2922 = vpop.f32.mrb[0].mxu0
        %2923 = vdwg.mxu0
        %v2924 = vcombine.low %v2576, %v2674
        %v2925 = vcombine.high %v2576, %v2674
        %v2927 = vunpack.c.l.s4 1983009808
        %v2928 = vunpack.c.0.s8 %v2927
        %v2929 = vlaneseq
        %v2930 = vshrl.u32 %v2929, 7
        %v2931 = vsub.s32 %v2928, %v2930
        %v2932 = vrot.slane %v2924, %v2931
        %v2934 = vunpack.c.l.s4 1983009808
        %v2935 = vunpack.c.0.s8 %v2934
        %v2936 = vlaneseq
        %v2937 = vshrl.u32 %v2936, 7
        %v2938 = vsub.s32 %v2935, %v2937
        %v2939 = vrot.slane %v2925, %v2938
        %v2940 = vcombine.low %v2625, %v2723
        %v2941 = vcombine.high %v2625, %v2723
        %v2943 = vunpack.c.l.s4 1983009808
        %v2944 = vunpack.c.0.s8 %v2943
        %v2945 = vlaneseq
        %v2946 = vshrl.u32 %v2945, 7
        %v2947 = vsub.s32 %v2944, %v2946
        %v2948 = vrot.slane %v2940, %v2947
        %v2950 = vunpack.c.l.s4 1983009808
        %v2951 = vunpack.c.0.s8 %v2950
        %v2952 = vlaneseq
        %v2953 = vshrl.u32 %v2952, 7
        %v2954 = vsub.s32 %v2951, %v2953
        %v2955 = vrot.slane %v2941, %v2954
        %v2956 = vcombine.low %v2772, %v2870
        %v2957 = vcombine.high %v2772, %v2870
        %v2959 = vunpack.c.l.s4 1983009808
        %v2960 = vunpack.c.0.s8 %v2959
        %v2961 = vlaneseq
        %v2962 = vshrl.u32 %v2961, 7
        %v2963 = vsub.s32 %v2960, %v2962
        %v2964 = vrot.slane %v2956, %v2963
        %v2966 = vunpack.c.l.s4 1983009808
        %v2967 = vunpack.c.0.s8 %v2966
        %v2968 = vlaneseq
        %v2969 = vshrl.u32 %v2968, 7
        %v2970 = vsub.s32 %v2967, %v2969
        %v2971 = vrot.slane %v2957, %v2970
        %v2972 = vcombine.low %v2821, %v2919
        %v2973 = vcombine.high %v2821, %v2919
        %v2975 = vunpack.c.l.s4 1983009808
        %v2976 = vunpack.c.0.s8 %v2975
        %v2977 = vlaneseq
        %v2978 = vshrl.u32 %v2977, 7
        %v2979 = vsub.s32 %v2976, %v2978
        %v2980 = vrot.slane %v2972, %v2979
        %v2982 = vunpack.c.l.s4 1983009808
        %v2983 = vunpack.c.0.s8 %v2982
        %v2984 = vlaneseq
        %v2985 = vshrl.u32 %v2984, 7
        %v2986 = vsub.s32 %v2983, %v2985
        %v2987 = vrot.slane %v2973, %v2986
        %v2988 = vcombine.low %v2932, %v2948
        %v2989 = vcombine.high %v2932, %v2948
        %v2991 = vunpack.c.l.s4 1934713408
        %v2992 = vunpack.c.0.s8 %v2991
        %v2993 = vlaneseq
        %v2994 = vshrl.u32 %v2993, 7
        %v2995 = vsub.s32 %v2992, %v2994
        %v2996 = vrot.slane %v2988, %v2995
        %v2998 = vunpack.c.l.s4 1934713408
        %v2999 = vunpack.c.0.s8 %v2998
        %v3000 = vlaneseq
        %v3001 = vshrl.u32 %v3000, 7
        %v3002 = vsub.s32 %v2999, %v3001
        %v3003 = vrot.slane %v2989, %v3002
        %v3004 = vcombine.low %v2939, %v2955
        %v3005 = vcombine.high %v2939, %v2955
        %v3007 = vunpack.c.l.s4 1934713408
        %v3008 = vunpack.c.0.s8 %v3007
        %v3009 = vlaneseq
        %v3010 = vshrl.u32 %v3009, 7
        %v3011 = vsub.s32 %v3008, %v3010
        %v3012 = vrot.slane %v3004, %v3011
        %v3014 = vunpack.c.l.s4 1934713408
        %v3015 = vunpack.c.0.s8 %v3014
        %v3016 = vlaneseq
        %v3017 = vshrl.u32 %v3016, 7
        %v3018 = vsub.s32 %v3015, %v3017
        %v3019 = vrot.slane %v3005, %v3018
        %v3020 = vcombine.low %v2964, %v2980
        %v3021 = vcombine.high %v2964, %v2980
        %v3023 = vunpack.c.l.s4 1934713408
        %v3024 = vunpack.c.0.s8 %v3023
        %v3025 = vlaneseq
        %v3026 = vshrl.u32 %v3025, 7
        %v3027 = vsub.s32 %v3024, %v3026
        %v3028 = vrot.slane %v3020, %v3027
        %v3030 = vunpack.c.l.s4 1934713408
        %v3031 = vunpack.c.0.s8 %v3030
        %v3032 = vlaneseq
        %v3033 = vshrl.u32 %v3032, 7
        %v3034 = vsub.s32 %v3031, %v3033
        %v3035 = vrot.slane %v3021, %v3034
        %v3036 = vcombine.low %v2971, %v2987
        %v3037 = vcombine.high %v2971, %v2987
        %v3039 = vunpack.c.l.s4 1934713408
        %v3040 = vunpack.c.0.s8 %v3039
        %v3041 = vlaneseq
        %v3042 = vshrl.u32 %v3041, 7
        %v3043 = vsub.s32 %v3040, %v3042
        %v3044 = vrot.slane %v3036, %v3043
        %v3046 = vunpack.c.l.s4 1934713408
        %v3047 = vunpack.c.0.s8 %v3046
        %v3048 = vlaneseq
        %v3049 = vshrl.u32 %v3048, 7
        %v3050 = vsub.s32 %v3047, %v3049
        %v3051 = vrot.slane %v3037, %v3050
        %v3052 = vcombine.low %v2996, %v3028
        %v3053 = vcombine.high %v2996, %v3028
        %v3054 = vcombine.low %v3003, %v3035
        %v3055 = vcombine.high %v3003, %v3035
        %v3056 = vcombine.low %v3012, %v3044
        %v3057 = vcombine.high %v3012, %v3044
        %v3058 = vcombine.low %v3019, %v3051
        %v3059 = vcombine.high %v3019, %v3051
        %v3060 = vcombine.low %v3052, %v3054
        %v3061 = vcombine.high %v3052, %v3054
        %v3063 = vunpack.c.l.s4 1983009808
        %v3064 = vunpack.c.0.s8 %v3063
        %v3065 = vlaneseq
        %v3066 = vshrl.u32 %v3065, 7
        %v3067 = vsub.s32 %v3064, %v3066
        %v3068 = vrot.slane %v3060, %v3067
        %v3070 = vunpack.c.l.s4 1983009808
        %v3071 = vunpack.c.0.s8 %v3070
        %v3072 = vlaneseq
        %v3073 = vshrl.u32 %v3072, 7
        %v3074 = vsub.s32 %v3071, %v3073
        %v3075 = vrot.slane %v3061, %v3074
        %v3076 = vcombine.low %v3053, %v3055
        %v3077 = vcombine.high %v3053, %v3055
        %v3079 = vunpack.c.l.s4 1983009808
        %v3080 = vunpack.c.0.s8 %v3079
        %v3081 = vlaneseq
        %v3082 = vshrl.u32 %v3081, 7
        %v3083 = vsub.s32 %v3080, %v3082
        %v3084 = vrot.slane %v3076, %v3083
        %v3086 = vunpack.c.l.s4 1983009808
        %v3087 = vunpack.c.0.s8 %v3086
        %v3088 = vlaneseq
        %v3089 = vshrl.u32 %v3088, 7
        %v3090 = vsub.s32 %v3087, %v3089
        %v3091 = vrot.slane %v3077, %v3090
        %v3092 = vcombine.low %v3056, %v3058
        %v3093 = vcombine.high %v3056, %v3058
        %v3095 = vunpack.c.l.s4 1983009808
        %v3096 = vunpack.c.0.s8 %v3095
        %v3097 = vlaneseq
        %v3098 = vshrl.u32 %v3097, 7
        %v3099 = vsub.s32 %v3096, %v3098
        %v3100 = vrot.slane %v3092, %v3099
        %v3102 = vunpack.c.l.s4 1983009808
        %v3103 = vunpack.c.0.s8 %v3102
        %v3104 = vlaneseq
        %v3105 = vshrl.u32 %v3104, 7
        %v3106 = vsub.s32 %v3103, %v3105
        %v3107 = vrot.slane %v3093, %v3106
        %v3108 = vcombine.low %v3057, %v3059
        %v3109 = vcombine.high %v3057, %v3059
        %v3111 = vunpack.c.l.s4 1983009808
        %v3112 = vunpack.c.0.s8 %v3111
        %v3113 = vlaneseq
        %v3114 = vshrl.u32 %v3113, 7
        %v3115 = vsub.s32 %v3112, %v3114
        %v3116 = vrot.slane %v3108, %v3115
        %v3118 = vunpack.c.l.s4 1983009808
        %v3119 = vunpack.c.0.s8 %v3118
        %v3120 = vlaneseq
        %v3121 = vshrl.u32 %v3120, 7
        %v3122 = vsub.s32 %v3119, %v3121
        %v3123 = vrot.slane %v3109, %v3122
        %v3124 = vcombine.low %v3068, %v3084
        %v3125 = vcombine.high %v3068, %v3084
        %v3127 = vunpack.c.l.s4 1934713408
        %v3128 = vunpack.c.0.s8 %v3127
        %v3129 = vlaneseq
        %v3130 = vshrl.u32 %v3129, 7
        %v3131 = vsub.s32 %v3128, %v3130
        %v3132 = vrot.slane %v3124, %v3131
        %v3134 = vunpack.c.l.s4 1934713408
        %v3135 = vunpack.c.0.s8 %v3134
        %v3136 = vlaneseq
        %v3137 = vshrl.u32 %v3136, 7
        %v3138 = vsub.s32 %v3135, %v3137
        %v3139 = vrot.slane %v3125, %v3138
        %v3140 = vcombine.low %v3075, %v3091
        %v3141 = vcombine.high %v3075, %v3091
        %v3143 = vunpack.c.l.s4 1934713408
        %v3144 = vunpack.c.0.s8 %v3143
        %v3145 = vlaneseq
        %v3146 = vshrl.u32 %v3145, 7
        %v3147 = vsub.s32 %v3144, %v3146
        %v3148 = vrot.slane %v3140, %v3147
        %v3150 = vunpack.c.l.s4 1934713408
        %v3151 = vunpack.c.0.s8 %v3150
        %v3152 = vlaneseq
        %v3153 = vshrl.u32 %v3152, 7
        %v3154 = vsub.s32 %v3151, %v3153
        %v3155 = vrot.slane %v3141, %v3154
        %v3156 = vcombine.low %v3100, %v3116
        %v3157 = vcombine.high %v3100, %v3116
        %v3159 = vunpack.c.l.s4 1934713408
        %v3160 = vunpack.c.0.s8 %v3159
        %v3161 = vlaneseq
        %v3162 = vshrl.u32 %v3161, 7
        %v3163 = vsub.s32 %v3160, %v3162
        %v3164 = vrot.slane %v3156, %v3163
        %v3166 = vunpack.c.l.s4 1934713408
        %v3167 = vunpack.c.0.s8 %v3166
        %v3168 = vlaneseq
        %v3169 = vshrl.u32 %v3168, 7
        %v3170 = vsub.s32 %v3167, %v3169
        %v3171 = vrot.slane %v3157, %v3170
        %v3172 = vcombine.low %v3107, %v3123
        %v3173 = vcombine.high %v3107, %v3123
        %v3175 = vunpack.c.l.s4 1934713408
        %v3176 = vunpack.c.0.s8 %v3175
        %v3177 = vlaneseq
        %v3178 = vshrl.u32 %v3177, 7
        %v3179 = vsub.s32 %v3176, %v3178
        %v3180 = vrot.slane %v3172, %v3179
        %v3182 = vunpack.c.l.s4 1934713408
        %v3183 = vunpack.c.0.s8 %v3182
        %v3184 = vlaneseq
        %v3185 = vshrl.u32 %v3184, 7
        %v3186 = vsub.s32 %v3183, %v3185
        %v3187 = vrot.slane %v3173, %v3186
        %v3188 = vcombine.low %v3132, %v3164
        %v3189 = vcombine.high %v3132, %v3164
        %v3190 = vcombine.low %v3139, %v3171
        %v3191 = vcombine.high %v3139, %v3171
        %v3192 = vcombine.low %v3148, %v3180
        %v3193 = vcombine.high %v3148, %v3180
        %v3194 = vcombine.low %v3155, %v3187
        %v3195 = vcombine.high %v3155, %v3187
        %3197 = vrot.lane.b32.xlu0 %v3189, 16
        %v3198 = vpop.permute.xlu0 %3197
        %3201 = vrot.lane.b32.xlu0 %v3190, 32
        %v3202 = vpop.permute.xlu0 %3201
        %3205 = vrot.lane.b32.xlu0 %v3191, 48
        %v3206 = vpop.permute.xlu0 %3205
        %3209 = vrot.lane.b32.xlu0 %v3192, 64
        %v3210 = vpop.permute.xlu0 %3209
        %3213 = vrot.lane.b32.xlu0 %v3193, 80
        %v3214 = vpop.permute.xlu0 %3213
        %3217 = vrot.lane.b32.xlu0 %v3194, 96
        %v3218 = vpop.permute.xlu0 %3217
        %3221 = vrot.lane.b32.xlu0 %v3195, 112
        %v3222 = vpop.permute.xlu0 %3221
        %v3224 = vsel %vm497, %v3188, %v3198
        %v3225 = vsel %vm423, %v3224, %v3202
        %v3226 = vsel %vm2488, %v3225, %v3206
        %v3227 = vsel %vm581, %v3226, %v3210
        %v3228 = vsel %vm2495, %v3227, %v3214
        %v3229 = vsel %vm2499, %v3228, %v3218
        %v3230 = vsel %vm2503, %v3229, %v3222
        %3231 = vst [vmem:[%s405] sm:$0xff] %v3230
        %s3232 = sand.u32 %s213, 1
        %s3233 = scalar_lea.sflag [#allocation3], %s3232
        %s3234 = sand.u32 %s213, 1
        %s3235 = smul.addr %s3234, 8
        %s3236 = scalar_lea.vmem [#allocation2], %s3235
        %s3237 = sand.u32 %s32, 1
        %s3238 = scalar_lea.sflag [#allocation5], %s3237
        %s3239 = sand.u32 %s239, 1
        %s3240 = smul.addr %s3239, 8
        %s3241 = scalar_lea.vmem [#allocation4], %s3240
        %s3242 = sand.u32 %s32, 1
        %s3243 = scalar_lea.sflag [#allocation5], %s3242
        %s3244 = sand.u32 %s265, 1
        %s3245 = smul.addr %s3244, 8
        %s3246 = scalar_lea.vmem [#allocation6], %s3245
        %s3247 = sand.u32 %s291, 1
        %s3248 = scalar_lea.sflag [#allocation8], %s3247
        %s3249 = sand.u32 %s291, 1
        %s3250 = smul.addr %s3249, 8
        %s3251 = scalar_lea.vmem [#allocation7], %s3250
        // Predicated region
        $region53: #{tpu_custom_call.1} parent=51 // pred_check
          %p3252 = pneg %p223
        $region54: #{tpu_custom_call.1} parent=51 // pred_check_branch
          %3254 = sbr.rel (%p3252) target = $region56
        $region55: #{tpu_custom_call.1} parent=51 // pred_region
          %s3256 = ssub.s32 128, 128
          %3257 = vsyncadd %s3233, %s3256
          %s3258 = smul.addr %s32, 128
          %s3259 = scalar_lea.hbm %s8, %s3258
          %s3261 = sshll.u32 %s3236, 4
          %s3262 = int_to_ptr.vmem [resolvable:$true] %s3261
          %3264 = dma.vmem_to_hbm [thread:$0]  %s3262, 128, %s3259, %s3233
        $region56: #{tpu_custom_call.1} parent=51 // pred_fallthru
          _
        // Predicated region
        $region57: #{tpu_custom_call.1} parent=51 // pred_check
          %p3265 = pneg %p249
        $region58: #{tpu_custom_call.1} parent=51 // pred_check_branch
          %3267 = sbr.rel (%p3265) target = $region60
        $region59: #{tpu_custom_call.1} parent=51 // pred_region
          %s3269 = ssub.s32 128, 128
          %3270 = vsyncadd %s3238, %s3269
          %s3271 = smul.addr %s32, 128
          %s3272 = scalar_lea.hbm %s9, %s3271
          %s3274 = sshll.u32 %s3241, 4
          %s3275 = int_to_ptr.vmem [resolvable:$true] %s3274
          %3277 = dma.vmem_to_hbm [thread:$0]  %s3275, 128, %s3272, %s3238
        $region60: #{tpu_custom_call.1} parent=51 // pred_fallthru
          _
        // Predicated region
        $region61: #{tpu_custom_call.1} parent=51 // pred_check
          %p3278 = pneg %p275
        $region62: #{tpu_custom_call.1} parent=51 // pred_check_branch
          %3280 = sbr.rel (%p3278) target = $region64
        $region63: #{tpu_custom_call.1} parent=51 // pred_region
          %s3282 = ssub.s32 128, 128
          %3283 = vsyncadd %s3243, %s3282
          %s3284 = smul.addr %s32, 128
          %s3285 = scalar_lea.hbm %s10, %s3284
          %s3287 = sshll.u32 %s3246, 4
          %s3288 = int_to_ptr.vmem [resolvable:$true] %s3287
          %3290 = dma.vmem_to_hbm [thread:$0]  %s3288, 128, %s3285, %s3243
        $region64: #{tpu_custom_call.1} parent=51 // pred_fallthru
          _
        // Predicated region
        $region65: #{tpu_custom_call.1} parent=51 // pred_check
          %p3291 = pneg %p301
        $region66: #{tpu_custom_call.1} parent=51 // pred_check_branch
          %3293 = sbr.rel (%p3291) target = $region68
        $region67: #{tpu_custom_call.1} parent=51 // pred_region
          %s3295 = ssub.s32 128, 128
          %3296 = vsyncadd %s3248, %s3295
          %s3297 = smul.addr %s32, 128
          %s3298 = scalar_lea.hbm %s11, %s3297
          %s3300 = sshll.u32 %s3251, 4
          %s3301 = int_to_ptr.vmem [resolvable:$true] %s3300
          %3303 = dma.vmem_to_hbm [thread:$0]  %s3301, 128, %s3298, %s3248
        $region68: #{tpu_custom_call.1} parent=51 // pred_fallthru
          _
      $region52: #{tpu_custom_call.1} parent=5 // pred_fallthru
        _
      %p3304 = scmp.le.s32.totalorder 2, %s27
      // Predicated region
      $region69: #{tpu_custom_call.1} parent=5 // pred_check
        %p3305 = pneg %p3304
      $region70: #{tpu_custom_call.1} parent=5 // pred_check_branch
        %3307 = sbr.rel (%p3305) target = $region72
      $region71: #{tpu_custom_call.1} parent=5 // pred_region
        %s3308 = ssub.s32 %s27, 2
        // Predicated region
        $region73: #{tpu_custom_call.1} parent=71 // pred_check
          %p3309 = pneg %p229
        $region74: #{tpu_custom_call.1} parent=71 // pred_check_branch
          %3311 = sbr.rel (%p3309) target = $region76
        $region75: #{tpu_custom_call.1} parent=71 // pred_region
          %s3312 = sand.u32 %s214, 1
          %s3313 = scalar_lea.sflag [#allocation3], %s3312
          %s3314 = sand.u32 %s214, 1
          %s3315 = smul.addr %s3314, 8
          %s3316 = scalar_lea.vmem [#allocation2], %s3315
          %3317 = dma.done %s3313, 128
        $region76: #{tpu_custom_call.1} parent=71 // pred_fallthru
          _
        // Predicated region
        $region77: #{tpu_custom_call.1} parent=71 // pred_check
          %p3318 = pneg %p255
        $region78: #{tpu_custom_call.1} parent=71 // pred_check_branch
          %3320 = sbr.rel (%p3318) target = $region80
        $region79: #{tpu_custom_call.1} parent=71 // pred_region
          %s3321 = sand.u32 %s33, 1
          %s3322 = scalar_lea.sflag [#allocation5], %s3321
          %s3323 = sand.u32 %s240, 1
          %s3324 = smul.addr %s3323, 8
          %s3325 = scalar_lea.vmem [#allocation4], %s3324
          %3326 = dma.done %s3322, 128
        $region80: #{tpu_custom_call.1} parent=71 // pred_fallthru
          _
        // Predicated region
        $region81: #{tpu_custom_call.1} parent=71 // pred_check
          %p3327 = pneg %p281
        $region82: #{tpu_custom_call.1} parent=71 // pred_check_branch
          %3329 = sbr.rel (%p3327) target = $region84
        $region83: #{tpu_custom_call.1} parent=71 // pred_region
          %s3330 = sand.u32 %s33, 1
          %s3331 = scalar_lea.sflag [#allocation5], %s3330
          %s3332 = sand.u32 %s266, 1
          %s3333 = smul.addr %s3332, 8
          %s3334 = scalar_lea.vmem [#allocation6], %s3333
          %3335 = dma.done %s3331, 128
        $region84: #{tpu_custom_call.1} parent=71 // pred_fallthru
          _
        // Predicated region
        $region85: #{tpu_custom_call.1} parent=71 // pred_check
          %p3336 = pneg %p307
        $region86: #{tpu_custom_call.1} parent=71 // pred_check_branch
          %3338 = sbr.rel (%p3336) target = $region88
        $region87: #{tpu_custom_call.1} parent=71 // pred_region
          %s3339 = sand.u32 %s292, 1
          %s3340 = scalar_lea.sflag [#allocation8], %s3339
          %s3341 = sand.u32 %s292, 1
          %s3342 = smul.addr %s3341, 8
          %s3343 = scalar_lea.vmem [#allocation7], %s3342
          %3344 = dma.done %s3340, 128
        $region88: #{tpu_custom_call.1} parent=71 // pred_fallthru
          _
      $region72: #{tpu_custom_call.1} parent=5 // pred_fallthru
        _
    $region6: #{tpu_custom_call.1} parent=1 // loop_footer
      %s31 = sadd.s32 1, %s27
    $region7: #{tpu_custom_call.1} parent=1 // loop_footer_branch
      %26 = sbr.rel target = $region3
    $region8: #{tpu_custom_call.1} parent=1 // loop_exit
      _
    %3345 = vsyncpa [#allocation3], 1
    %s3346 = scalar_lea.sflag [#allocation3], 1
    %3347 = vsyncpa %s3346, 1
    %3348 = vsyncpa [#allocation5], 1
    %s3349 = scalar_lea.sflag [#allocation5], 1
    %3350 = vsyncpa %s3349, 1
    %3351 = vsyncpa [#allocation8], 1
    %s3352 = scalar_lea.sflag [#allocation8], 1
    %3353 = vsyncpa %s3352, 1

</llo_original>
